<compile_context>
chip_gen: v6e
topology: v6e:2x2x1
jax: 0.10.0
libtpu: 0.0.40
codegen_flags: <defaults>
</compile_context>

<pallas_src>
import jax
import jax.numpy as jnp
import numpy as np
from jax.experimental import pallas as pl
from jax.experimental.pallas import tpu as pltpu  # noqa: F401  (TPU backend)

# ----------------------------------------------------------------------------
# Model metadata (matches the HeteroData used by ReiFM)
# ----------------------------------------------------------------------------
NODE_TYPES = ["node_instance", "node_type", "relation_instance", "relation_type"]
EDGE_TYPES = [
    ("node_instance", "is_a", "node_type"),
    ("node_type", "rev_is_a", "node_instance"),
    ("relation_instance", "is_a", "relation_type"),
    ("relation_type", "rev_is_a", "relation_instance"),
    ("node_instance", "participates", "relation_instance"),
    ("relation_instance", "rev_participates", "node_instance"),
]

HP = 128  # padded hidden (lane-dense)


# ----------------------------------------------------------------------------
# Helpers
# ----------------------------------------------------------------------------
def _round_up(n, m):
    return ((n + m - 1) // m) * m


def _full_spec(shape):
    """BlockSpec covering the whole array (single grid step)."""
    nd = len(shape)
    return pl.BlockSpec(shape, lambda i, _nd=nd: (0,) * _nd)


def _pad_to(x, shape):
    return jnp.pad(x, [(0, s - d) for d, s in zip(x.shape, shape)])


# ----------------------------------------------------------------------------
# Parameter init (real, unpadded sizes — same semantics as the PyTorch module)
# ----------------------------------------------------------------------------
def init_params(key, hidden):
    std = 1.0 / np.sqrt(hidden)
    params = {}
    key, k0, k1, k2, k3 = jax.random.split(key, 5)
    params["node_instance_repr"] = jax.random.normal(k0, (hidden,), jnp.float32) * std
    params["node_type_repr"] = jax.random.normal(k1, (hidden,), jnp.float32) * std
    params["relation_instance_repr"] = jax.random.normal(k2, (hidden,), jnp.float32) * std
    params["relation_type_repr"] = jax.random.normal(k3, (hidden,), jnp.float32) * std

    gnn = []
    for _layer in range(3):
        layer_p = {}
        for et in EDGE_TYPES:
            key, ka, kb = jax.random.split(key, 3)
            layer_p[et] = dict(
                w_l=jax.random.normal(ka, (hidden, hidden), jnp.float32) * std,
                b_l=jnp.zeros((hidden,), jnp.float32),
                w_r=jax.random.normal(kb, (hidden, hidden), jnp.float32) * std,
            )
        gnn.append(layer_p)
    params["gnn"] = gnn

    key, km1, km2 = jax.random.split(key, 3)
    params["mlp"] = dict(
        w1=jax.random.normal(km1, (3 * hidden, hidden), jnp.float32) / np.sqrt(3 * hidden),
        b1=jnp.zeros((hidden,), jnp.float32),
        w2=jax.random.normal(km2, (hidden, 1), jnp.float32) * std,
        b2=jnp.zeros((1,), jnp.float32),
    )
    return params


def dense_mean_adj(edge_index, n_src, n_dst):
    """Row-normalized dense adjacency A[dst, src] implementing SAGE mean aggregation."""
    src, dst = edge_index[0], edge_index[1]
    a = jnp.zeros((n_dst, n_src), jnp.float32).at[dst, src].add(1.0)
    deg = a.sum(axis=1, keepdims=True)
    return a / jnp.where(deg > 0, deg, 1.0)


# ----------------------------------------------------------------------------
# Fused forward pass: one pallas_call for the whole model
# ----------------------------------------------------------------------------
def reifm_forward_fused(params, num_nodes, adjs, total_triples, hidden, hp=HP):
    t = int(total_triples)
    t_pad = _round_up(max(t, 1), 8)
    n_pad = {k: _round_up(v, 8) for k, v in num_nodes.items()}

    # 1) initial per-type features: learned repr broadcast to (n_pad, hp), zero-padded lanes
    x0 = {}
    for k in NODE_TYPES:
        r = _pad_to(params[k + "_repr"], (hp,))
        x0[k] = jnp.broadcast_to(r[None, :], (n_pad[k], hp)) + jnp.zeros((n_pad[k], hp), jnp.float32)

    # 2) zero-padded dense adjacencies (pad rows/cols contribute nothing)
    adj_p = [_pad_to(adjs[et], (n_pad[et[2]], n_pad[et[0]])) for et in EDGE_TYPES]

    # 3) stacked, zero-padded GNN weights: (3, 6, hp, hp) and biases (3, 6, 1, hp)
    wl = jnp.stack(
        [jnp.stack([_pad_to(params["gnn"][li][et]["w_l"], (hp, hp)) for et in EDGE_TYPES]) for li in range(3)]
    )
    wr = jnp.stack(
        [jnp.stack([_pad_to(params["gnn"][li][et]["w_r"], (hp, hp)) for et in EDGE_TYPES]) for li in range(3)]
    )
    bl = jnp.stack(
        [jnp.stack([_pad_to(params["gnn"][li][et]["b_l"], (hp,))[None, :] for et in EDGE_TYPES]) for li in range(3)]
    )

    # 4) selection matrix picking node_instance rows [t, t + t_pad)
    g2_np = np.zeros((t_pad, n_pad["node_instance"]), np.float32)
    for i in range(t_pad):
        if t + i < n_pad["node_instance"]:
            g2_np[i, t + i] = 1.0
    g2 = jnp.asarray(g2_np)

    # 5) MLP weights: split w1 along the 3 concatenated feature segments, pad to (hp, hp)
    m = params["mlp"]
    w1 = m["w1"]  # (3*hidden, hidden)
    w1a = _pad_to(w1[0 * hidden:1 * hidden], (hp, hp))
    w1b = _pad_to(w1[1 * hidden:2 * hidden], (hp, hp))
    w1c = _pad_to(w1[2 * hidden:3 * hidden], (hp, hp))
    b1 = _pad_to(m["b1"], (hp,))[None, :]  # (1, hp)
    w2 = jnp.zeros((hp, hp), jnp.float32).at[:hidden, 0].set(m["w2"][:, 0])
    b2 = jnp.full((1, hp), m["b2"][0], jnp.float32)

    def kernel(xni, xnt, xri, xrt,
               a0, a1, a2, a3, a4, a5,
               wl_ref, bl_ref, wr_ref,
               g2_ref, w1a_ref, w1b_ref, w1c_ref, b1_ref, w2_ref, b2_ref,
               o_ref):
        f32 = jnp.float32
        x = {
            "node_instance": xni[...],
            "node_type": xnt[...],
            "relation_instance": xri[...],
            "relation_type": xrt[...],
        }
        adj_vals = (a0[...], a1[...], a2[...], a3[...], a4[...], a5[...])

        # 3 hetero-SAGE layers, fully unrolled; all intermediates stay on-chip.
        for li in range(3):
            new_x = {}
            for ei, (src, _rel, dst) in enumerate(EDGE_TYPES):
                agg = jnp.dot(adj_vals[ei], x[src], preferred_element_type=f32)
                c = jnp.dot(agg, wl_ref[li, ei], preferred_element_type=f32)
                c = c + bl_ref[li, ei]
                c = c + jnp.dot(x[dst], wr_ref[li, ei], preferred_element_type=f32)
                new_x[dst] = c if dst not in new_x else new_x[dst] + c  # to_hetero 'sum'
            if li < 2:  # ReLU after conv1 and conv2 only
                new_x = {k: jnp.maximum(v, 0.0) for k, v in new_x.items()}
            x = new_x

        # MLP head on the concatenated triple features (split-weight form, no concat).
        ni = x["node_instance"]
        seg_a = ni[0:t_pad]                                                   # rows [0, t_pad)
        seg_b = jnp.dot(g2_ref[...], ni, preferred_element_type=f32)          # rows [t, t+t_pad)
        seg_c = x["relation_instance"][0:t_pad]                               # rows [0, t_pad)
        hid = (jnp.dot(seg_a, w1a_ref[...], preferred_element_type=f32)
               + jnp.dot(seg_b, w1b_ref[...], preferred_element_type=f32)
               + jnp.dot(seg_c, w1c_ref[...], preferred_element_type=f32)
               + b1_ref[...])
        hid = jnp.maximum(hid, 0.0)
        z = jnp.dot(hid, w2_ref[...], preferred_element_type=f32) + b2_ref[...]
        o_ref[...] = jax.nn.sigmoid(z)  # lane-dense (t_pad, hp) slab; col 0 is the logit

    inputs = [x0["node_instance"], x0["node_type"], x0["relation_instance"], x0["relation_type"],
              *adj_p, wl, bl, wr, g2, w1a, w1b, w1c, b1, w2, b2]

    out_slab = pl.pallas_call(
        kernel,
        out_shape=jax.ShapeDtypeStruct((t_pad, hp), jnp.float32),
        grid=(1,),
        in_specs=[_full_spec(a.shape) for a in inputs],
        out_specs=_full_spec((t_pad, hp)),
    )(*inputs)

    return out_slab[:t, 0]  # pred.squeeze(1)


# ----------------------------------------------------------------------------
# Pure-JAX reference (unpadded) for validation
# ----------------------------------------------------------------------------
def reference_forward(params, num_nodes, adjs, total_triples, hidden):
    t = total_triples
    x = {k: jnp.broadcast_to(params[k + "_repr"][None, :], (num_nodes[k], hidden)) for k in NODE_TYPES}
    for li in range(3):
        new_x = {}
        for et in EDGE_TYPES:
            src, _rel, dst = et
            p = params["gnn"][li][et]
            agg = adjs[et] @ x[src]
            c = agg @ p["w_l"] + p["b_l"][None, :] + x[dst] @ p["w_r"]
            new_x[dst] = c if dst not in new_x else new_x[dst] + c
        if li < 2:
            new_x = {k: jnp.maximum(v, 0.0) for k, v in new_x.items()}
        x = new_x
    feats = jnp.concatenate(
        [x["node_instance"][:t], x["node_instance"][t:2 * t], x["relation_instance"][:t]], axis=1
    )
    m = params["mlp"]
    h = jnp.maximum(feats @ m["w1"] + m["b1"][None, :], 0.0)
    z = h @ m["w2"] + m["b2"][None, :]
    return jax.nn.sigmoid(z)[:, 0]


# ----------------------------------------------------------------------------
# Main
# ----------------------------------------------------------------------------
if __name__ == "__main__":
    HIDDEN = 32
    NUM_NODES = {
        "node_instance": 16,
        "node_type": 6,
        "relation_instance": 8,
        "relation_type": 4,
    }
    TOTAL_TRIPLES = 4  # batch['relation_type'].num_sampled_nodes[0]
    NUM_EDGES = 24

    key = jax.random.PRNGKey(0)
    key, pkey = jax.random.split(key)
    params = init_params(pkey, HIDDEN)

    # deterministic synthetic edge_index_dict -> dense normalized adjacencies
    adjs = {}
    for et in EDGE_TYPES:
        src_t, _rel, dst_t = et
        key, ks, kd = jax.random.split(key, 3)
        src = jax.random.randint(ks, (NUM_EDGES,), 0, NUM_NODES[src_t])
        dst = jax.random.randint(kd, (NUM_EDGES,), 0, NUM_NODES[dst_t])
        edge_index = jnp.stack([src, dst], axis=0)  # (2, E), PyG convention
        adjs[et] = dense_mean_adj(edge_index, NUM_NODES[src_t], NUM_NODES[dst_t])

    out = reifm_forward_fused(params, NUM_NODES, adjs, TOTAL_TRIPLES, HIDDEN)
    out = jax.block_until_ready(out)

    ref = jax.block_until_ready(reference_forward(params, NUM_NODES, adjs, TOTAL_TRIPLES, HIDDEN))

    assert out.shape == (TOTAL_TRIPLES,)
    assert bool(jnp.all(jnp.isfinite(out)))
    assert bool(jnp.all((out >= 0.0) & (out <= 1.0)))  # sigmoid output
    np.testing.assert_allclose(np.asarray(out), np.asarray(ref), rtol=5e-2, atol=5e-2)
    print("KERNEL_OK")
</pallas_src>

<mosaic_0001>
module attributes {stable_mosaic.version = 11 : i64} {
  func.func @kernel(%arg0: i32, %arg1: memref<16x128xf32, #tpu.memory_space<vmem>>, %arg2: memref<8x128xf32, #tpu.memory_space<vmem>>, %arg3: memref<8x128xf32, #tpu.memory_space<vmem>>, %arg4: memref<8x128xf32, #tpu.memory_space<vmem>>, %arg5: memref<8x16xf32, #tpu.memory_space<vmem>>, %arg6: memref<16x8xf32, #tpu.memory_space<vmem>>, %arg7: memref<8x8xf32, #tpu.memory_space<vmem>>, %arg8: memref<8x8xf32, #tpu.memory_space<vmem>>, %arg9: memref<8x16xf32, #tpu.memory_space<vmem>>, %arg10: memref<16x8xf32, #tpu.memory_space<vmem>>, %arg11: memref<3x6x128x128xf32, #tpu.memory_space<vmem>>, %arg12: memref<3x6x1x128xf32, #tpu.memory_space<vmem>>, %arg13: memref<3x6x128x128xf32, #tpu.memory_space<vmem>>, %arg14: memref<8x16xf32, #tpu.memory_space<vmem>>, %arg15: memref<128x128xf32, #tpu.memory_space<vmem>>, %arg16: memref<128x128xf32, #tpu.memory_space<vmem>>, %arg17: memref<128x128xf32, #tpu.memory_space<vmem>>, %arg18: memref<1x128xf32, #tpu.memory_space<vmem>>, %arg19: memref<128x128xf32, #tpu.memory_space<vmem>>, %arg20: memref<1x128xf32, #tpu.memory_space<vmem>>, %arg21: memref<8x128xf32, #tpu.memory_space<vmem>>) attributes {dimension_semantics = [#tpu.dimension_semantics<arbitrary>], iteration_bounds = array<i64: 1>, scalar_prefetch = 0 : i64, scratch_operands = 0 : i64, tpu.core_type = #tpu.core_type<tc>, window_params = [{pipeline_mode = #tpu.pipeline_mode<synchronous>, transform_indices = @transform_0, window_bounds = array<i64: 16, 128>}, {pipeline_mode = #tpu.pipeline_mode<synchronous>, transform_indices = @transform_1, window_bounds = array<i64: 8, 128>}, {pipeline_mode = #tpu.pipeline_mode<synchronous>, transform_indices = @transform_2, window_bounds = array<i64: 8, 128>}, {pipeline_mode = #tpu.pipeline_mode<synchronous>, transform_indices = @transform_3, window_bounds = array<i64: 8, 128>}, {pipeline_mode = #tpu.pipeline_mode<synchronous>, transform_indices = @transform_4, window_bounds = array<i64: 8, 16>}, {pipeline_mode = #tpu.pipeline_mode<synchronous>, transform_indices = @transform_5, window_bounds = array<i64: 16, 8>}, {pipeline_mode = #tpu.pipeline_mode<synchronous>, transform_indices = @transform_6, window_bounds = array<i64: 8, 8>}, {pipeline_mode = #tpu.pipeline_mode<synchronous>, transform_indices = @transform_7, window_bounds = array<i64: 8, 8>}, {pipeline_mode = #tpu.pipeline_mode<synchronous>, transform_indices = @transform_8, window_bounds = array<i64: 8, 16>}, {pipeline_mode = #tpu.pipeline_mode<synchronous>, transform_indices = @transform_9, window_bounds = array<i64: 16, 8>}, {pipeline_mode = #tpu.pipeline_mode<synchronous>, transform_indices = @transform_10, window_bounds = array<i64: 3, 6, 128, 128>}, {pipeline_mode = #tpu.pipeline_mode<synchronous>, transform_indices = @transform_11, window_bounds = array<i64: 3, 6, 1, 128>}, {pipeline_mode = #tpu.pipeline_mode<synchronous>, transform_indices = @transform_12, window_bounds = array<i64: 3, 6, 128, 128>}, {pipeline_mode = #tpu.pipeline_mode<synchronous>, transform_indices = @transform_13, window_bounds = array<i64: 8, 16>}, {pipeline_mode = #tpu.pipeline_mode<synchronous>, transform_indices = @transform_14, window_bounds = array<i64: 128, 128>}, {pipeline_mode = #tpu.pipeline_mode<synchronous>, transform_indices = @transform_15, window_bounds = array<i64: 128, 128>}, {pipeline_mode = #tpu.pipeline_mode<synchronous>, transform_indices = @transform_16, window_bounds = array<i64: 128, 128>}, {pipeline_mode = #tpu.pipeline_mode<synchronous>, transform_indices = @transform_17, window_bounds = array<i64: 1, 128>}, {pipeline_mode = #tpu.pipeline_mode<synchronous>, transform_indices = @transform_18, window_bounds = array<i64: 128, 128>}, {pipeline_mode = #tpu.pipeline_mode<synchronous>, transform_indices = @transform_19, window_bounds = array<i64: 1, 128>}, {pipeline_mode = #tpu.pipeline_mode<synchronous>, transform_indices = @transform_20, window_bounds = array<i64: 8, 128>}]} {
    %c0 = arith.constant 0 : index
    %c0_0 = arith.constant 0 : index
    %0 = vector.load %arg1[%c0, %c0_0] : memref<16x128xf32, #tpu.memory_space<vmem>>, vector<16x128xf32>
    %c0_1 = arith.constant 0 : index
    %c0_2 = arith.constant 0 : index
    %1 = vector.load %arg2[%c0_1, %c0_2] : memref<8x128xf32, #tpu.memory_space<vmem>>, vector<8x128xf32>
    %c0_3 = arith.constant 0 : index
    %c0_4 = arith.constant 0 : index
    %2 = vector.load %arg3[%c0_3, %c0_4] : memref<8x128xf32, #tpu.memory_space<vmem>>, vector<8x128xf32>
    %c0_5 = arith.constant 0 : index
    %c0_6 = arith.constant 0 : index
    %3 = vector.load %arg4[%c0_5, %c0_6] : memref<8x128xf32, #tpu.memory_space<vmem>>, vector<8x128xf32>
    %c0_7 = arith.constant 0 : index
    %c0_8 = arith.constant 0 : index
    %4 = vector.load %arg5[%c0_7, %c0_8] : memref<8x16xf32, #tpu.memory_space<vmem>>, vector<8x16xf32>
    %c0_9 = arith.constant 0 : index
    %c0_10 = arith.constant 0 : index
    %5 = vector.load %arg6[%c0_9, %c0_10] : memref<16x8xf32, #tpu.memory_space<vmem>>, vector<16x8xf32>
    %c0_11 = arith.constant 0 : index
    %c0_12 = arith.constant 0 : index
    %6 = vector.load %arg7[%c0_11, %c0_12] : memref<8x8xf32, #tpu.memory_space<vmem>>, vector<8x8xf32>
    %c0_13 = arith.constant 0 : index
    %c0_14 = arith.constant 0 : index
    %7 = vector.load %arg8[%c0_13, %c0_14] : memref<8x8xf32, #tpu.memory_space<vmem>>, vector<8x8xf32>
    %c0_15 = arith.constant 0 : index
    %c0_16 = arith.constant 0 : index
    %8 = vector.load %arg9[%c0_15, %c0_16] : memref<8x16xf32, #tpu.memory_space<vmem>>, vector<8x16xf32>
    %c0_17 = arith.constant 0 : index
    %c0_18 = arith.constant 0 : index
    %9 = vector.load %arg10[%c0_17, %c0_18] : memref<16x8xf32, #tpu.memory_space<vmem>>, vector<16x8xf32>
    %cst = arith.constant dense<0.000000e+00> : vector<8x128xf32>
    %10 = tpu.matmul %4, %0, %cst {dimension_numbers = #tpu.dot_dimension_numbers<[1], [0], [0], [1], [0, 0, 1, 1], [], []>} : vector<8x16xf32>, vector<16x128xf32>, vector<8x128xf32> -> vector<8x128xf32>
    %c0_19 = arith.constant 0 : index
    %c0_20 = arith.constant 0 : index
    %c0_21 = arith.constant 0 : index
    %c0_22 = arith.constant 0 : index
    %11 = vector.load %arg11[%c0_19, %c0_20, %c0_21, %c0_22] : memref<3x6x128x128xf32, #tpu.memory_space<vmem>>, vector<1x1x128x128xf32>
    %12 = vector.shape_cast %11 : vector<1x1x128x128xf32> to vector<128x128xf32>
    %cst_23 = arith.constant dense<0.000000e+00> : vector<8x128xf32>
    %13 = tpu.matmul %10, %12, %cst_23 {dimension_numbers = #tpu.dot_dimension_numbers<[1], [0], [0], [1], [0, 0, 1, 1], [], []>} : vector<8x128xf32>, vector<128x128xf32>, vector<8x128xf32> -> vector<8x128xf32>
    %c0_24 = arith.constant 0 : index
    %c0_25 = arith.constant 0 : index
    %c0_26 = arith.constant 0 : index
    %c0_27 = arith.constant 0 : index
    %14 = vector.load %arg12[%c0_24, %c0_25, %c0_26, %c0_27] : memref<3x6x1x128xf32, #tpu.memory_space<vmem>>, vector<1x1x1x128xf32>
    %15 = vector.shape_cast %14 : vector<1x1x1x128xf32> to vector<1x128xf32>
    %16 = vector.broadcast %15 : vector<1x128xf32> to vector<8x128xf32>
    %17 = arith.addf %13, %16 : vector<8x128xf32>
    %c0_28 = arith.constant 0 : index
    %c0_29 = arith.constant 0 : index
    %c0_30 = arith.constant 0 : index
    %c0_31 = arith.constant 0 : index
    %18 = vector.load %arg13[%c0_28, %c0_29, %c0_30, %c0_31] : memref<3x6x128x128xf32, #tpu.memory_space<vmem>>, vector<1x1x128x128xf32>
    %19 = vector.shape_cast %18 : vector<1x1x128x128xf32> to vector<128x128xf32>
    %cst_32 = arith.constant dense<0.000000e+00> : vector<8x128xf32>
    %20 = tpu.matmul %1, %19, %cst_32 {dimension_numbers = #tpu.dot_dimension_numbers<[1], [0], [0], [1], [0, 0, 1, 1], [], []>} : vector<8x128xf32>, vector<128x128xf32>, vector<8x128xf32> -> vector<8x128xf32>
    %21 = arith.addf %17, %20 : vector<8x128xf32>
    %cst_33 = arith.constant dense<0.000000e+00> : vector<16x128xf32>
    %22 = tpu.matmul %5, %1, %cst_33 {dimension_numbers = #tpu.dot_dimension_numbers<[1], [0], [0], [1], [0, 0, 1, 1], [], []>} : vector<16x8xf32>, vector<8x128xf32>, vector<16x128xf32> -> vector<16x128xf32>
    %c0_34 = arith.constant 0 : index
    %c1 = arith.constant 1 : index
    %c0_35 = arith.constant 0 : index
    %c0_36 = arith.constant 0 : index
    %23 = vector.load %arg11[%c0_34, %c1, %c0_35, %c0_36] : memref<3x6x128x128xf32, #tpu.memory_space<vmem>>, vector<1x1x128x128xf32>
    %24 = vector.shape_cast %23 : vector<1x1x128x128xf32> to vector<128x128xf32>
    %cst_37 = arith.constant dense<0.000000e+00> : vector<16x128xf32>
    %25 = tpu.matmul %22, %24, %cst_37 {dimension_numbers = #tpu.dot_dimension_numbers<[1], [0], [0], [1], [0, 0, 1, 1], [], []>} : vector<16x128xf32>, vector<128x128xf32>, vector<16x128xf32> -> vector<16x128xf32>
    %c0_38 = arith.constant 0 : index
    %c1_39 = arith.constant 1 : index
    %c0_40 = arith.constant 0 : index
    %c0_41 = arith.constant 0 : index
    %26 = vector.load %arg12[%c0_38, %c1_39, %c0_40, %c0_41] : memref<3x6x1x128xf32, #tpu.memory_space<vmem>>, vector<1x1x1x128xf32>
    %27 = vector.shape_cast %26 : vector<1x1x1x128xf32> to vector<1x128xf32>
    %28 = vector.broadcast %27 : vector<1x128xf32> to vector<16x128xf32>
    %29 = arith.addf %25, %28 : vector<16x128xf32>
    %c0_42 = arith.constant 0 : index
    %c1_43 = arith.constant 1 : index
    %c0_44 = arith.constant 0 : index
    %c0_45 = arith.constant 0 : index
    %30 = vector.load %arg13[%c0_42, %c1_43, %c0_44, %c0_45] : memref<3x6x128x128xf32, #tpu.memory_space<vmem>>, vector<1x1x128x128xf32>
    %31 = vector.shape_cast %30 : vector<1x1x128x128xf32> to vector<128x128xf32>
    %cst_46 = arith.constant dense<0.000000e+00> : vector<16x128xf32>
    %32 = tpu.matmul %0, %31, %cst_46 {dimension_numbers = #tpu.dot_dimension_numbers<[1], [0], [0], [1], [0, 0, 1, 1], [], []>} : vector<16x128xf32>, vector<128x128xf32>, vector<16x128xf32> -> vector<16x128xf32>
    %33 = arith.addf %29, %32 : vector<16x128xf32>
    %cst_47 = arith.constant dense<0.000000e+00> : vector<8x128xf32>
    %34 = tpu.matmul %6, %2, %cst_47 {dimension_numbers = #tpu.dot_dimension_numbers<[1], [0], [0], [1], [0, 0, 1, 1], [], []>} : vector<8x8xf32>, vector<8x128xf32>, vector<8x128xf32> -> vector<8x128xf32>
    %c0_48 = arith.constant 0 : index
    %c2 = arith.constant 2 : index
    %c0_49 = arith.constant 0 : index
    %c0_50 = arith.constant 0 : index
    %35 = vector.load %arg11[%c0_48, %c2, %c0_49, %c0_50] : memref<3x6x128x128xf32, #tpu.memory_space<vmem>>, vector<1x1x128x128xf32>
    %36 = vector.shape_cast %35 : vector<1x1x128x128xf32> to vector<128x128xf32>
    %cst_51 = arith.constant dense<0.000000e+00> : vector<8x128xf32>
    %37 = tpu.matmul %34, %36, %cst_51 {dimension_numbers = #tpu.dot_dimension_numbers<[1], [0], [0], [1], [0, 0, 1, 1], [], []>} : vector<8x128xf32>, vector<128x128xf32>, vector<8x128xf32> -> vector<8x128xf32>
    %c0_52 = arith.constant 0 : index
    %c2_53 = arith.constant 2 : index
    %c0_54 = arith.constant 0 : index
    %c0_55 = arith.constant 0 : index
    %38 = vector.load %arg12[%c0_52, %c2_53, %c0_54, %c0_55] : memref<3x6x1x128xf32, #tpu.memory_space<vmem>>, vector<1x1x1x128xf32>
    %39 = vector.shape_cast %38 : vector<1x1x1x128xf32> to vector<1x128xf32>
    %40 = vector.broadcast %39 : vector<1x128xf32> to vector<8x128xf32>
    %41 = arith.addf %37, %40 : vector<8x128xf32>
    %c0_56 = arith.constant 0 : index
    %c2_57 = arith.constant 2 : index
    %c0_58 = arith.constant 0 : index
    %c0_59 = arith.constant 0 : index
    %42 = vector.load %arg13[%c0_56, %c2_57, %c0_58, %c0_59] : memref<3x6x128x128xf32, #tpu.memory_space<vmem>>, vector<1x1x128x128xf32>
    %43 = vector.shape_cast %42 : vector<1x1x128x128xf32> to vector<128x128xf32>
    %cst_60 = arith.constant dense<0.000000e+00> : vector<8x128xf32>
    %44 = tpu.matmul %3, %43, %cst_60 {dimension_numbers = #tpu.dot_dimension_numbers<[1], [0], [0], [1], [0, 0, 1, 1], [], []>} : vector<8x128xf32>, vector<128x128xf32>, vector<8x128xf32> -> vector<8x128xf32>
    %45 = arith.addf %41, %44 : vector<8x128xf32>
    %cst_61 = arith.constant dense<0.000000e+00> : vector<8x128xf32>
    %46 = tpu.matmul %7, %3, %cst_61 {dimension_numbers = #tpu.dot_dimension_numbers<[1], [0], [0], [1], [0, 0, 1, 1], [], []>} : vector<8x8xf32>, vector<8x128xf32>, vector<8x128xf32> -> vector<8x128xf32>
    %c0_62 = arith.constant 0 : index
    %c3 = arith.constant 3 : index
    %c0_63 = arith.constant 0 : index
    %c0_64 = arith.constant 0 : index
    %47 = vector.load %arg11[%c0_62, %c3, %c0_63, %c0_64] : memref<3x6x128x128xf32, #tpu.memory_space<vmem>>, vector<1x1x128x128xf32>
    %48 = vector.shape_cast %47 : vector<1x1x128x128xf32> to vector<128x128xf32>
    %cst_65 = arith.constant dense<0.000000e+00> : vector<8x128xf32>
    %49 = tpu.matmul %46, %48, %cst_65 {dimension_numbers = #tpu.dot_dimension_numbers<[1], [0], [0], [1], [0, 0, 1, 1], [], []>} : vector<8x128xf32>, vector<128x128xf32>, vector<8x128xf32> -> vector<8x128xf32>
    %c0_66 = arith.constant 0 : index
    %c3_67 = arith.constant 3 : index
    %c0_68 = arith.constant 0 : index
    %c0_69 = arith.constant 0 : index
    %50 = vector.load %arg12[%c0_66, %c3_67, %c0_68, %c0_69] : memref<3x6x1x128xf32, #tpu.memory_space<vmem>>, vector<1x1x1x128xf32>
    %51 = vector.shape_cast %50 : vector<1x1x1x128xf32> to vector<1x128xf32>
    %52 = vector.broadcast %51 : vector<1x128xf32> to vector<8x128xf32>
    %53 = arith.addf %49, %52 : vector<8x128xf32>
    %c0_70 = arith.constant 0 : index
    %c3_71 = arith.constant 3 : index
    %c0_72 = arith.constant 0 : index
    %c0_73 = arith.constant 0 : index
    %54 = vector.load %arg13[%c0_70, %c3_71, %c0_72, %c0_73] : memref<3x6x128x128xf32, #tpu.memory_space<vmem>>, vector<1x1x128x128xf32>
    %55 = vector.shape_cast %54 : vector<1x1x128x128xf32> to vector<128x128xf32>
    %cst_74 = arith.constant dense<0.000000e+00> : vector<8x128xf32>
    %56 = tpu.matmul %2, %55, %cst_74 {dimension_numbers = #tpu.dot_dimension_numbers<[1], [0], [0], [1], [0, 0, 1, 1], [], []>} : vector<8x128xf32>, vector<128x128xf32>, vector<8x128xf32> -> vector<8x128xf32>
    %57 = arith.addf %53, %56 : vector<8x128xf32>
    %cst_75 = arith.constant dense<0.000000e+00> : vector<8x128xf32>
    %58 = tpu.matmul %8, %0, %cst_75 {dimension_numbers = #tpu.dot_dimension_numbers<[1], [0], [0], [1], [0, 0, 1, 1], [], []>} : vector<8x16xf32>, vector<16x128xf32>, vector<8x128xf32> -> vector<8x128xf32>
    %c0_76 = arith.constant 0 : index
    %c4 = arith.constant 4 : index
    %c0_77 = arith.constant 0 : index
    %c0_78 = arith.constant 0 : index
    %59 = vector.load %arg11[%c0_76, %c4, %c0_77, %c0_78] : memref<3x6x128x128xf32, #tpu.memory_space<vmem>>, vector<1x1x128x128xf32>
    %60 = vector.shape_cast %59 : vector<1x1x128x128xf32> to vector<128x128xf32>
    %cst_79 = arith.constant dense<0.000000e+00> : vector<8x128xf32>
    %61 = tpu.matmul %58, %60, %cst_79 {dimension_numbers = #tpu.dot_dimension_numbers<[1], [0], [0], [1], [0, 0, 1, 1], [], []>} : vector<8x128xf32>, vector<128x128xf32>, vector<8x128xf32> -> vector<8x128xf32>
    %c0_80 = arith.constant 0 : index
    %c4_81 = arith.constant 4 : index
    %c0_82 = arith.constant 0 : index
    %c0_83 = arith.constant 0 : index
    %62 = vector.load %arg12[%c0_80, %c4_81, %c0_82, %c0_83] : memref<3x6x1x128xf32, #tpu.memory_space<vmem>>, vector<1x1x1x128xf32>
    %63 = vector.shape_cast %62 : vector<1x1x1x128xf32> to vector<1x128xf32>
    %64 = vector.broadcast %63 : vector<1x128xf32> to vector<8x128xf32>
    %65 = arith.addf %61, %64 : vector<8x128xf32>
    %c0_84 = arith.constant 0 : index
    %c4_85 = arith.constant 4 : index
    %c0_86 = arith.constant 0 : index
    %c0_87 = arith.constant 0 : index
    %66 = vector.load %arg13[%c0_84, %c4_85, %c0_86, %c0_87] : memref<3x6x128x128xf32, #tpu.memory_space<vmem>>, vector<1x1x128x128xf32>
    %67 = vector.shape_cast %66 : vector<1x1x128x128xf32> to vector<128x128xf32>
    %cst_88 = arith.constant dense<0.000000e+00> : vector<8x128xf32>
    %68 = tpu.matmul %2, %67, %cst_88 {dimension_numbers = #tpu.dot_dimension_numbers<[1], [0], [0], [1], [0, 0, 1, 1], [], []>} : vector<8x128xf32>, vector<128x128xf32>, vector<8x128xf32> -> vector<8x128xf32>
    %69 = arith.addf %65, %68 : vector<8x128xf32>
    %70 = arith.addf %57, %69 : vector<8x128xf32>
    %cst_89 = arith.constant dense<0.000000e+00> : vector<16x128xf32>
    %71 = tpu.matmul %9, %2, %cst_89 {dimension_numbers = #tpu.dot_dimension_numbers<[1], [0], [0], [1], [0, 0, 1, 1], [], []>} : vector<16x8xf32>, vector<8x128xf32>, vector<16x128xf32> -> vector<16x128xf32>
    %c0_90 = arith.constant 0 : index
    %c5 = arith.constant 5 : index
    %c0_91 = arith.constant 0 : index
    %c0_92 = arith.constant 0 : index
    %72 = vector.load %arg11[%c0_90, %c5, %c0_91, %c0_92] : memref<3x6x128x128xf32, #tpu.memory_space<vmem>>, vector<1x1x128x128xf32>
    %73 = vector.shape_cast %72 : vector<1x1x128x128xf32> to vector<128x128xf32>
    %cst_93 = arith.constant dense<0.000000e+00> : vector<16x128xf32>
    %74 = tpu.matmul %71, %73, %cst_93 {dimension_numbers = #tpu.dot_dimension_numbers<[1], [0], [0], [1], [0, 0, 1, 1], [], []>} : vector<16x128xf32>, vector<128x128xf32>, vector<16x128xf32> -> vector<16x128xf32>
    %c0_94 = arith.constant 0 : index
    %c5_95 = arith.constant 5 : index
    %c0_96 = arith.constant 0 : index
    %c0_97 = arith.constant 0 : index
    %75 = vector.load %arg12[%c0_94, %c5_95, %c0_96, %c0_97] : memref<3x6x1x128xf32, #tpu.memory_space<vmem>>, vector<1x1x1x128xf32>
    %76 = vector.shape_cast %75 : vector<1x1x1x128xf32> to vector<1x128xf32>
    %77 = vector.broadcast %76 : vector<1x128xf32> to vector<16x128xf32>
    %78 = arith.addf %74, %77 : vector<16x128xf32>
    %c0_98 = arith.constant 0 : index
    %c5_99 = arith.constant 5 : index
    %c0_100 = arith.constant 0 : index
    %c0_101 = arith.constant 0 : index
    %79 = vector.load %arg13[%c0_98, %c5_99, %c0_100, %c0_101] : memref<3x6x128x128xf32, #tpu.memory_space<vmem>>, vector<1x1x128x128xf32>
    %80 = vector.shape_cast %79 : vector<1x1x128x128xf32> to vector<128x128xf32>
    %cst_102 = arith.constant dense<0.000000e+00> : vector<16x128xf32>
    %81 = tpu.matmul %0, %80, %cst_102 {dimension_numbers = #tpu.dot_dimension_numbers<[1], [0], [0], [1], [0, 0, 1, 1], [], []>} : vector<16x128xf32>, vector<128x128xf32>, vector<16x128xf32> -> vector<16x128xf32>
    %82 = arith.addf %78, %81 : vector<16x128xf32>
    %83 = arith.addf %33, %82 : vector<16x128xf32>
    %cst_103 = arith.constant 0.000000e+00 : f32
    %84 = vector.broadcast %cst_103 : f32 to vector<8x128xf32>
    %85 = arith.maximumf %21, %84 : vector<8x128xf32>
    %cst_104 = arith.constant 0.000000e+00 : f32
    %86 = vector.broadcast %cst_104 : f32 to vector<16x128xf32>
    %87 = arith.maximumf %83, %86 : vector<16x128xf32>
    %cst_105 = arith.constant 0.000000e+00 : f32
    %88 = vector.broadcast %cst_105 : f32 to vector<8x128xf32>
    %89 = arith.maximumf %45, %88 : vector<8x128xf32>
    %cst_106 = arith.constant 0.000000e+00 : f32
    %90 = vector.broadcast %cst_106 : f32 to vector<8x128xf32>
    %91 = arith.maximumf %70, %90 : vector<8x128xf32>
    %cst_107 = arith.constant dense<0.000000e+00> : vector<8x128xf32>
    %92 = tpu.matmul %4, %87, %cst_107 {dimension_numbers = #tpu.dot_dimension_numbers<[1], [0], [0], [1], [0, 0, 1, 1], [], []>} : vector<8x16xf32>, vector<16x128xf32>, vector<8x128xf32> -> vector<8x128xf32>
    %c1_108 = arith.constant 1 : index
    %c0_109 = arith.constant 0 : index
    %c0_110 = arith.constant 0 : index
    %c0_111 = arith.constant 0 : index
    %93 = vector.load %arg11[%c1_108, %c0_109, %c0_110, %c0_111] : memref<3x6x128x128xf32, #tpu.memory_space<vmem>>, vector<1x1x128x128xf32>
    %94 = vector.shape_cast %93 : vector<1x1x128x128xf32> to vector<128x128xf32>
    %cst_112 = arith.constant dense<0.000000e+00> : vector<8x128xf32>
    %95 = tpu.matmul %92, %94, %cst_112 {dimension_numbers = #tpu.dot_dimension_numbers<[1], [0], [0], [1], [0, 0, 1, 1], [], []>} : vector<8x128xf32>, vector<128x128xf32>, vector<8x128xf32> -> vector<8x128xf32>
    %c1_113 = arith.constant 1 : index
    %c0_114 = arith.constant 0 : index
    %c0_115 = arith.constant 0 : index
    %c0_116 = arith.constant 0 : index
    %96 = vector.load %arg12[%c1_113, %c0_114, %c0_115, %c0_116] : memref<3x6x1x128xf32, #tpu.memory_space<vmem>>, vector<1x1x1x128xf32>
    %97 = vector.shape_cast %96 : vector<1x1x1x128xf32> to vector<1x128xf32>
    %98 = vector.broadcast %97 : vector<1x128xf32> to vector<8x128xf32>
    %99 = arith.addf %95, %98 : vector<8x128xf32>
    %c1_117 = arith.constant 1 : index
    %c0_118 = arith.constant 0 : index
    %c0_119 = arith.constant 0 : index
    %c0_120 = arith.constant 0 : index
    %100 = vector.load %arg13[%c1_117, %c0_118, %c0_119, %c0_120] : memref<3x6x128x128xf32, #tpu.memory_space<vmem>>, vector<1x1x128x128xf32>
    %101 = vector.shape_cast %100 : vector<1x1x128x128xf32> to vector<128x128xf32>
    %cst_121 = arith.constant dense<0.000000e+00> : vector<8x128xf32>
    %102 = tpu.matmul %85, %101, %cst_121 {dimension_numbers = #tpu.dot_dimension_numbers<[1], [0], [0], [1], [0, 0, 1, 1], [], []>} : vector<8x128xf32>, vector<128x128xf32>, vector<8x128xf32> -> vector<8x128xf32>
    %103 = arith.addf %99, %102 : vector<8x128xf32>
    %cst_122 = arith.constant dense<0.000000e+00> : vector<16x128xf32>
    %104 = tpu.matmul %5, %85, %cst_122 {dimension_numbers = #tpu.dot_dimension_numbers<[1], [0], [0], [1], [0, 0, 1, 1], [], []>} : vector<16x8xf32>, vector<8x128xf32>, vector<16x128xf32> -> vector<16x128xf32>
    %c1_123 = arith.constant 1 : index
    %c1_124 = arith.constant 1 : index
    %c0_125 = arith.constant 0 : index
    %c0_126 = arith.constant 0 : index
    %105 = vector.load %arg11[%c1_123, %c1_124, %c0_125, %c0_126] : memref<3x6x128x128xf32, #tpu.memory_space<vmem>>, vector<1x1x128x128xf32>
    %106 = vector.shape_cast %105 : vector<1x1x128x128xf32> to vector<128x128xf32>
    %cst_127 = arith.constant dense<0.000000e+00> : vector<16x128xf32>
    %107 = tpu.matmul %104, %106, %cst_127 {dimension_numbers = #tpu.dot_dimension_numbers<[1], [0], [0], [1], [0, 0, 1, 1], [], []>} : vector<16x128xf32>, vector<128x128xf32>, vector<16x128xf32> -> vector<16x128xf32>
    %c1_128 = arith.constant 1 : index
    %c1_129 = arith.constant 1 : index
    %c0_130 = arith.constant 0 : index
    %c0_131 = arith.constant 0 : index
    %108 = vector.load %arg12[%c1_128, %c1_129, %c0_130, %c0_131] : memref<3x6x1x128xf32, #tpu.memory_space<vmem>>, vector<1x1x1x128xf32>
    %109 = vector.shape_cast %108 : vector<1x1x1x128xf32> to vector<1x128xf32>
    %110 = vector.broadcast %109 : vector<1x128xf32> to vector<16x128xf32>
    %111 = arith.addf %107, %110 : vector<16x128xf32>
    %c1_132 = arith.constant 1 : index
    %c1_133 = arith.constant 1 : index
    %c0_134 = arith.constant 0 : index
    %c0_135 = arith.constant 0 : index
    %112 = vector.load %arg13[%c1_132, %c1_133, %c0_134, %c0_135] : memref<3x6x128x128xf32, #tpu.memory_space<vmem>>, vector<1x1x128x128xf32>
    %113 = vector.shape_cast %112 : vector<1x1x128x128xf32> to vector<128x128xf32>
    %cst_136 = arith.constant dense<0.000000e+00> : vector<16x128xf32>
    %114 = tpu.matmul %87, %113, %cst_136 {dimension_numbers = #tpu.dot_dimension_numbers<[1], [0], [0], [1], [0, 0, 1, 1], [], []>} : vector<16x128xf32>, vector<128x128xf32>, vector<16x128xf32> -> vector<16x128xf32>
    %115 = arith.addf %111, %114 : vector<16x128xf32>
    %cst_137 = arith.constant dense<0.000000e+00> : vector<8x128xf32>
    %116 = tpu.matmul %6, %91, %cst_137 {dimension_numbers = #tpu.dot_dimension_numbers<[1], [0], [0], [1], [0, 0, 1, 1], [], []>} : vector<8x8xf32>, vector<8x128xf32>, vector<8x128xf32> -> vector<8x128xf32>
    %c1_138 = arith.constant 1 : index
    %c2_139 = arith.constant 2 : index
    %c0_140 = arith.constant 0 : index
    %c0_141 = arith.constant 0 : index
    %117 = vector.load %arg11[%c1_138, %c2_139, %c0_140, %c0_141] : memref<3x6x128x128xf32, #tpu.memory_space<vmem>>, vector<1x1x128x128xf32>
    %118 = vector.shape_cast %117 : vector<1x1x128x128xf32> to vector<128x128xf32>
    %cst_142 = arith.constant dense<0.000000e+00> : vector<8x128xf32>
    %119 = tpu.matmul %116, %118, %cst_142 {dimension_numbers = #tpu.dot_dimension_numbers<[1], [0], [0], [1], [0, 0, 1, 1], [], []>} : vector<8x128xf32>, vector<128x128xf32>, vector<8x128xf32> -> vector<8x128xf32>
    %c1_143 = arith.constant 1 : index
    %c2_144 = arith.constant 2 : index
    %c0_145 = arith.constant 0 : index
    %c0_146 = arith.constant 0 : index
    %120 = vector.load %arg12[%c1_143, %c2_144, %c0_145, %c0_146] : memref<3x6x1x128xf32, #tpu.memory_space<vmem>>, vector<1x1x1x128xf32>
    %121 = vector.shape_cast %120 : vector<1x1x1x128xf32> to vector<1x128xf32>
    %122 = vector.broadcast %121 : vector<1x128xf32> to vector<8x128xf32>
    %123 = arith.addf %119, %122 : vector<8x128xf32>
    %c1_147 = arith.constant 1 : index
    %c2_148 = arith.constant 2 : index
    %c0_149 = arith.constant 0 : index
    %c0_150 = arith.constant 0 : index
    %124 = vector.load %arg13[%c1_147, %c2_148, %c0_149, %c0_150] : memref<3x6x128x128xf32, #tpu.memory_space<vmem>>, vector<1x1x128x128xf32>
    %125 = vector.shape_cast %124 : vector<1x1x128x128xf32> to vector<128x128xf32>
    %cst_151 = arith.constant dense<0.000000e+00> : vector<8x128xf32>
    %126 = tpu.matmul %89, %125, %cst_151 {dimension_numbers = #tpu.dot_dimension_numbers<[1], [0], [0], [1], [0, 0, 1, 1], [], []>} : vector<8x128xf32>, vector<128x128xf32>, vector<8x128xf32> -> vector<8x128xf32>
    %127 = arith.addf %123, %126 : vector<8x128xf32>
    %cst_152 = arith.constant dense<0.000000e+00> : vector<8x128xf32>
    %128 = tpu.matmul %7, %89, %cst_152 {dimension_numbers = #tpu.dot_dimension_numbers<[1], [0], [0], [1], [0, 0, 1, 1], [], []>} : vector<8x8xf32>, vector<8x128xf32>, vector<8x128xf32> -> vector<8x128xf32>
    %c1_153 = arith.constant 1 : index
    %c3_154 = arith.constant 3 : index
    %c0_155 = arith.constant 0 : index
    %c0_156 = arith.constant 0 : index
    %129 = vector.load %arg11[%c1_153, %c3_154, %c0_155, %c0_156] : memref<3x6x128x128xf32, #tpu.memory_space<vmem>>, vector<1x1x128x128xf32>
    %130 = vector.shape_cast %129 : vector<1x1x128x128xf32> to vector<128x128xf32>
    %cst_157 = arith.constant dense<0.000000e+00> : vector<8x128xf32>
    %131 = tpu.matmul %128, %130, %cst_157 {dimension_numbers = #tpu.dot_dimension_numbers<[1], [0], [0], [1], [0, 0, 1, 1], [], []>} : vector<8x128xf32>, vector<128x128xf32>, vector<8x128xf32> -> vector<8x128xf32>
    %c1_158 = arith.constant 1 : index
    %c3_159 = arith.constant 3 : index
    %c0_160 = arith.constant 0 : index
    %c0_161 = arith.constant 0 : index
    %132 = vector.load %arg12[%c1_158, %c3_159, %c0_160, %c0_161] : memref<3x6x1x128xf32, #tpu.memory_space<vmem>>, vector<1x1x1x128xf32>
    %133 = vector.shape_cast %132 : vector<1x1x1x128xf32> to vector<1x128xf32>
    %134 = vector.broadcast %133 : vector<1x128xf32> to vector<8x128xf32>
    %135 = arith.addf %131, %134 : vector<8x128xf32>
    %c1_162 = arith.constant 1 : index
    %c3_163 = arith.constant 3 : index
    %c0_164 = arith.constant 0 : index
    %c0_165 = arith.constant 0 : index
    %136 = vector.load %arg13[%c1_162, %c3_163, %c0_164, %c0_165] : memref<3x6x128x128xf32, #tpu.memory_space<vmem>>, vector<1x1x128x128xf32>
    %137 = vector.shape_cast %136 : vector<1x1x128x128xf32> to vector<128x128xf32>
    %cst_166 = arith.constant dense<0.000000e+00> : vector<8x128xf32>
    %138 = tpu.matmul %91, %137, %cst_166 {dimension_numbers = #tpu.dot_dimension_numbers<[1], [0], [0], [1], [0, 0, 1, 1], [], []>} : vector<8x128xf32>, vector<128x128xf32>, vector<8x128xf32> -> vector<8x128xf32>
    %139 = arith.addf %135, %138 : vector<8x128xf32>
    %cst_167 = arith.constant dense<0.000000e+00> : vector<8x128xf32>
    %140 = tpu.matmul %8, %87, %cst_167 {dimension_numbers = #tpu.dot_dimension_numbers<[1], [0], [0], [1], [0, 0, 1, 1], [], []>} : vector<8x16xf32>, vector<16x128xf32>, vector<8x128xf32> -> vector<8x128xf32>
    %c1_168 = arith.constant 1 : index
    %c4_169 = arith.constant 4 : index
    %c0_170 = arith.constant 0 : index
    %c0_171 = arith.constant 0 : index
    %141 = vector.load %arg11[%c1_168, %c4_169, %c0_170, %c0_171] : memref<3x6x128x128xf32, #tpu.memory_space<vmem>>, vector<1x1x128x128xf32>
    %142 = vector.shape_cast %141 : vector<1x1x128x128xf32> to vector<128x128xf32>
    %cst_172 = arith.constant dense<0.000000e+00> : vector<8x128xf32>
    %143 = tpu.matmul %140, %142, %cst_172 {dimension_numbers = #tpu.dot_dimension_numbers<[1], [0], [0], [1], [0, 0, 1, 1], [], []>} : vector<8x128xf32>, vector<128x128xf32>, vector<8x128xf32> -> vector<8x128xf32>
    %c1_173 = arith.constant 1 : index
    %c4_174 = arith.constant 4 : index
    %c0_175 = arith.constant 0 : index
    %c0_176 = arith.constant 0 : index
    %144 = vector.load %arg12[%c1_173, %c4_174, %c0_175, %c0_176] : memref<3x6x1x128xf32, #tpu.memory_space<vmem>>, vector<1x1x1x128xf32>
    %145 = vector.shape_cast %144 : vector<1x1x1x128xf32> to vector<1x128xf32>
    %146 = vector.broadcast %145 : vector<1x128xf32> to vector<8x128xf32>
    %147 = arith.addf %143, %146 : vector<8x128xf32>
    %c1_177 = arith.constant 1 : index
    %c4_178 = arith.constant 4 : index
    %c0_179 = arith.constant 0 : index
    %c0_180 = arith.constant 0 : index
    %148 = vector.load %arg13[%c1_177, %c4_178, %c0_179, %c0_180] : memref<3x6x128x128xf32, #tpu.memory_space<vmem>>, vector<1x1x128x128xf32>
    %149 = vector.shape_cast %148 : vector<1x1x128x128xf32> to vector<128x128xf32>
    %cst_181 = arith.constant dense<0.000000e+00> : vector<8x128xf32>
    %150 = tpu.matmul %91, %149, %cst_181 {dimension_numbers = #tpu.dot_dimension_numbers<[1], [0], [0], [1], [0, 0, 1, 1], [], []>} : vector<8x128xf32>, vector<128x128xf32>, vector<8x128xf32> -> vector<8x128xf32>
    %151 = arith.addf %147, %150 : vector<8x128xf32>
    %152 = arith.addf %139, %151 : vector<8x128xf32>
    %cst_182 = arith.constant dense<0.000000e+00> : vector<16x128xf32>
    %153 = tpu.matmul %9, %91, %cst_182 {dimension_numbers = #tpu.dot_dimension_numbers<[1], [0], [0], [1], [0, 0, 1, 1], [], []>} : vector<16x8xf32>, vector<8x128xf32>, vector<16x128xf32> -> vector<16x128xf32>
    %c1_183 = arith.constant 1 : index
    %c5_184 = arith.constant 5 : index
    %c0_185 = arith.constant 0 : index
    %c0_186 = arith.constant 0 : index
    %154 = vector.load %arg11[%c1_183, %c5_184, %c0_185, %c0_186] : memref<3x6x128x128xf32, #tpu.memory_space<vmem>>, vector<1x1x128x128xf32>
    %155 = vector.shape_cast %154 : vector<1x1x128x128xf32> to vector<128x128xf32>
    %cst_187 = arith.constant dense<0.000000e+00> : vector<16x128xf32>
    %156 = tpu.matmul %153, %155, %cst_187 {dimension_numbers = #tpu.dot_dimension_numbers<[1], [0], [0], [1], [0, 0, 1, 1], [], []>} : vector<16x128xf32>, vector<128x128xf32>, vector<16x128xf32> -> vector<16x128xf32>
    %c1_188 = arith.constant 1 : index
    %c5_189 = arith.constant 5 : index
    %c0_190 = arith.constant 0 : index
    %c0_191 = arith.constant 0 : index
    %157 = vector.load %arg12[%c1_188, %c5_189, %c0_190, %c0_191] : memref<3x6x1x128xf32, #tpu.memory_space<vmem>>, vector<1x1x1x128xf32>
    %158 = vector.shape_cast %157 : vector<1x1x1x128xf32> to vector<1x128xf32>
    %159 = vector.broadcast %158 : vector<1x128xf32> to vector<16x128xf32>
    %160 = arith.addf %156, %159 : vector<16x128xf32>
    %c1_192 = arith.constant 1 : index
    %c5_193 = arith.constant 5 : index
    %c0_194 = arith.constant 0 : index
    %c0_195 = arith.constant 0 : index
    %161 = vector.load %arg13[%c1_192, %c5_193, %c0_194, %c0_195] : memref<3x6x128x128xf32, #tpu.memory_space<vmem>>, vector<1x1x128x128xf32>
    %162 = vector.shape_cast %161 : vector<1x1x128x128xf32> to vector<128x128xf32>
    %cst_196 = arith.constant dense<0.000000e+00> : vector<16x128xf32>
    %163 = tpu.matmul %87, %162, %cst_196 {dimension_numbers = #tpu.dot_dimension_numbers<[1], [0], [0], [1], [0, 0, 1, 1], [], []>} : vector<16x128xf32>, vector<128x128xf32>, vector<16x128xf32> -> vector<16x128xf32>
    %164 = arith.addf %160, %163 : vector<16x128xf32>
    %165 = arith.addf %115, %164 : vector<16x128xf32>
    %cst_197 = arith.constant 0.000000e+00 : f32
    %166 = vector.broadcast %cst_197 : f32 to vector<8x128xf32>
    %167 = arith.maximumf %103, %166 : vector<8x128xf32>
    %cst_198 = arith.constant 0.000000e+00 : f32
    %168 = vector.broadcast %cst_198 : f32 to vector<16x128xf32>
    %169 = arith.maximumf %165, %168 : vector<16x128xf32>
    %cst_199 = arith.constant 0.000000e+00 : f32
    %170 = vector.broadcast %cst_199 : f32 to vector<8x128xf32>
    %171 = arith.maximumf %127, %170 : vector<8x128xf32>
    %cst_200 = arith.constant 0.000000e+00 : f32
    %172 = vector.broadcast %cst_200 : f32 to vector<8x128xf32>
    %173 = arith.maximumf %152, %172 : vector<8x128xf32>
    %cst_201 = arith.constant dense<0.000000e+00> : vector<16x128xf32>
    %174 = tpu.matmul %5, %167, %cst_201 {dimension_numbers = #tpu.dot_dimension_numbers<[1], [0], [0], [1], [0, 0, 1, 1], [], []>} : vector<16x8xf32>, vector<8x128xf32>, vector<16x128xf32> -> vector<16x128xf32>
    %c2_202 = arith.constant 2 : index
    %c1_203 = arith.constant 1 : index
    %c0_204 = arith.constant 0 : index
    %c0_205 = arith.constant 0 : index
    %175 = vector.load %arg11[%c2_202, %c1_203, %c0_204, %c0_205] : memref<3x6x128x128xf32, #tpu.memory_space<vmem>>, vector<1x1x128x128xf32>
    %176 = vector.shape_cast %175 : vector<1x1x128x128xf32> to vector<128x128xf32>
    %cst_206 = arith.constant dense<0.000000e+00> : vector<16x128xf32>
    %177 = tpu.matmul %174, %176, %cst_206 {dimension_numbers = #tpu.dot_dimension_numbers<[1], [0], [0], [1], [0, 0, 1, 1], [], []>} : vector<16x128xf32>, vector<128x128xf32>, vector<16x128xf32> -> vector<16x128xf32>
    %c2_207 = arith.constant 2 : index
    %c1_208 = arith.constant 1 : index
    %c0_209 = arith.constant 0 : index
    %c0_210 = arith.constant 0 : index
    %178 = vector.load %arg12[%c2_207, %c1_208, %c0_209, %c0_210] : memref<3x6x1x128xf32, #tpu.memory_space<vmem>>, vector<1x1x1x128xf32>
    %179 = vector.shape_cast %178 : vector<1x1x1x128xf32> to vector<1x128xf32>
    %180 = vector.broadcast %179 : vector<1x128xf32> to vector<16x128xf32>
    %181 = arith.addf %177, %180 : vector<16x128xf32>
    %c2_211 = arith.constant 2 : index
    %c1_212 = arith.constant 1 : index
    %c0_213 = arith.constant 0 : index
    %c0_214 = arith.constant 0 : index
    %182 = vector.load %arg13[%c2_211, %c1_212, %c0_213, %c0_214] : memref<3x6x128x128xf32, #tpu.memory_space<vmem>>, vector<1x1x128x128xf32>
    %183 = vector.shape_cast %182 : vector<1x1x128x128xf32> to vector<128x128xf32>
    %cst_215 = arith.constant dense<0.000000e+00> : vector<16x128xf32>
    %184 = tpu.matmul %169, %183, %cst_215 {dimension_numbers = #tpu.dot_dimension_numbers<[1], [0], [0], [1], [0, 0, 1, 1], [], []>} : vector<16x128xf32>, vector<128x128xf32>, vector<16x128xf32> -> vector<16x128xf32>
    %185 = arith.addf %181, %184 : vector<16x128xf32>
    %cst_216 = arith.constant dense<0.000000e+00> : vector<8x128xf32>
    %186 = tpu.matmul %7, %171, %cst_216 {dimension_numbers = #tpu.dot_dimension_numbers<[1], [0], [0], [1], [0, 0, 1, 1], [], []>} : vector<8x8xf32>, vector<8x128xf32>, vector<8x128xf32> -> vector<8x128xf32>
    %c2_217 = arith.constant 2 : index
    %c3_218 = arith.constant 3 : index
    %c0_219 = arith.constant 0 : index
    %c0_220 = arith.constant 0 : index
    %187 = vector.load %arg11[%c2_217, %c3_218, %c0_219, %c0_220] : memref<3x6x128x128xf32, #tpu.memory_space<vmem>>, vector<1x1x128x128xf32>
    %188 = vector.shape_cast %187 : vector<1x1x128x128xf32> to vector<128x128xf32>
    %cst_221 = arith.constant dense<0.000000e+00> : vector<8x128xf32>
    %189 = tpu.matmul %186, %188, %cst_221 {dimension_numbers = #tpu.dot_dimension_numbers<[1], [0], [0], [1], [0, 0, 1, 1], [], []>} : vector<8x128xf32>, vector<128x128xf32>, vector<8x128xf32> -> vector<8x128xf32>
    %c2_222 = arith.constant 2 : index
    %c3_223 = arith.constant 3 : index
    %c0_224 = arith.constant 0 : index
    %c0_225 = arith.constant 0 : index
    %190 = vector.load %arg12[%c2_222, %c3_223, %c0_224, %c0_225] : memref<3x6x1x128xf32, #tpu.memory_space<vmem>>, vector<1x1x1x128xf32>
    %191 = vector.shape_cast %190 : vector<1x1x1x128xf32> to vector<1x128xf32>
    %192 = vector.broadcast %191 : vector<1x128xf32> to vector<8x128xf32>
    %193 = arith.addf %189, %192 : vector<8x128xf32>
    %c2_226 = arith.constant 2 : index
    %c3_227 = arith.constant 3 : index
    %c0_228 = arith.constant 0 : index
    %c0_229 = arith.constant 0 : index
    %194 = vector.load %arg13[%c2_226, %c3_227, %c0_228, %c0_229] : memref<3x6x128x128xf32, #tpu.memory_space<vmem>>, vector<1x1x128x128xf32>
    %195 = vector.shape_cast %194 : vector<1x1x128x128xf32> to vector<128x128xf32>
    %cst_230 = arith.constant dense<0.000000e+00> : vector<8x128xf32>
    %196 = tpu.matmul %173, %195, %cst_230 {dimension_numbers = #tpu.dot_dimension_numbers<[1], [0], [0], [1], [0, 0, 1, 1], [], []>} : vector<8x128xf32>, vector<128x128xf32>, vector<8x128xf32> -> vector<8x128xf32>
    %197 = arith.addf %193, %196 : vector<8x128xf32>
    %cst_231 = arith.constant dense<0.000000e+00> : vector<8x128xf32>
    %198 = tpu.matmul %8, %169, %cst_231 {dimension_numbers = #tpu.dot_dimension_numbers<[1], [0], [0], [1], [0, 0, 1, 1], [], []>} : vector<8x16xf32>, vector<16x128xf32>, vector<8x128xf32> -> vector<8x128xf32>
    %c2_232 = arith.constant 2 : index
    %c4_233 = arith.constant 4 : index
    %c0_234 = arith.constant 0 : index
    %c0_235 = arith.constant 0 : index
    %199 = vector.load %arg11[%c2_232, %c4_233, %c0_234, %c0_235] : memref<3x6x128x128xf32, #tpu.memory_space<vmem>>, vector<1x1x128x128xf32>
    %200 = vector.shape_cast %199 : vector<1x1x128x128xf32> to vector<128x128xf32>
    %cst_236 = arith.constant dense<0.000000e+00> : vector<8x128xf32>
    %201 = tpu.matmul %198, %200, %cst_236 {dimension_numbers = #tpu.dot_dimension_numbers<[1], [0], [0], [1], [0, 0, 1, 1], [], []>} : vector<8x128xf32>, vector<128x128xf32>, vector<8x128xf32> -> vector<8x128xf32>
    %c2_237 = arith.constant 2 : index
    %c4_238 = arith.constant 4 : index
    %c0_239 = arith.constant 0 : index
    %c0_240 = arith.constant 0 : index
    %202 = vector.load %arg12[%c2_237, %c4_238, %c0_239, %c0_240] : memref<3x6x1x128xf32, #tpu.memory_space<vmem>>, vector<1x1x1x128xf32>
    %203 = vector.shape_cast %202 : vector<1x1x1x128xf32> to vector<1x128xf32>
    %204 = vector.broadcast %203 : vector<1x128xf32> to vector<8x128xf32>
    %205 = arith.addf %201, %204 : vector<8x128xf32>
    %c2_241 = arith.constant 2 : index
    %c4_242 = arith.constant 4 : index
    %c0_243 = arith.constant 0 : index
    %c0_244 = arith.constant 0 : index
    %206 = vector.load %arg13[%c2_241, %c4_242, %c0_243, %c0_244] : memref<3x6x128x128xf32, #tpu.memory_space<vmem>>, vector<1x1x128x128xf32>
    %207 = vector.shape_cast %206 : vector<1x1x128x128xf32> to vector<128x128xf32>
    %cst_245 = arith.constant dense<0.000000e+00> : vector<8x128xf32>
    %208 = tpu.matmul %173, %207, %cst_245 {dimension_numbers = #tpu.dot_dimension_numbers<[1], [0], [0], [1], [0, 0, 1, 1], [], []>} : vector<8x128xf32>, vector<128x128xf32>, vector<8x128xf32> -> vector<8x128xf32>
    %209 = arith.addf %205, %208 : vector<8x128xf32>
    %210 = arith.addf %197, %209 : vector<8x128xf32>
    %cst_246 = arith.constant dense<0.000000e+00> : vector<16x128xf32>
    %211 = tpu.matmul %9, %173, %cst_246 {dimension_numbers = #tpu.dot_dimension_numbers<[1], [0], [0], [1], [0, 0, 1, 1], [], []>} : vector<16x8xf32>, vector<8x128xf32>, vector<16x128xf32> -> vector<16x128xf32>
    %c2_247 = arith.constant 2 : index
    %c5_248 = arith.constant 5 : index
    %c0_249 = arith.constant 0 : index
    %c0_250 = arith.constant 0 : index
    %212 = vector.load %arg11[%c2_247, %c5_248, %c0_249, %c0_250] : memref<3x6x128x128xf32, #tpu.memory_space<vmem>>, vector<1x1x128x128xf32>
    %213 = vector.shape_cast %212 : vector<1x1x128x128xf32> to vector<128x128xf32>
    %cst_251 = arith.constant dense<0.000000e+00> : vector<16x128xf32>
    %214 = tpu.matmul %211, %213, %cst_251 {dimension_numbers = #tpu.dot_dimension_numbers<[1], [0], [0], [1], [0, 0, 1, 1], [], []>} : vector<16x128xf32>, vector<128x128xf32>, vector<16x128xf32> -> vector<16x128xf32>
    %c2_252 = arith.constant 2 : index
    %c5_253 = arith.constant 5 : index
    %c0_254 = arith.constant 0 : index
    %c0_255 = arith.constant 0 : index
    %215 = vector.load %arg12[%c2_252, %c5_253, %c0_254, %c0_255] : memref<3x6x1x128xf32, #tpu.memory_space<vmem>>, vector<1x1x1x128xf32>
    %216 = vector.shape_cast %215 : vector<1x1x1x128xf32> to vector<1x128xf32>
    %217 = vector.broadcast %216 : vector<1x128xf32> to vector<16x128xf32>
    %218 = arith.addf %214, %217 : vector<16x128xf32>
    %c2_256 = arith.constant 2 : index
    %c5_257 = arith.constant 5 : index
    %c0_258 = arith.constant 0 : index
    %c0_259 = arith.constant 0 : index
    %219 = vector.load %arg13[%c2_256, %c5_257, %c0_258, %c0_259] : memref<3x6x128x128xf32, #tpu.memory_space<vmem>>, vector<1x1x128x128xf32>
    %220 = vector.shape_cast %219 : vector<1x1x128x128xf32> to vector<128x128xf32>
    %cst_260 = arith.constant dense<0.000000e+00> : vector<16x128xf32>
    %221 = tpu.matmul %169, %220, %cst_260 {dimension_numbers = #tpu.dot_dimension_numbers<[1], [0], [0], [1], [0, 0, 1, 1], [], []>} : vector<16x128xf32>, vector<128x128xf32>, vector<16x128xf32> -> vector<16x128xf32>
    %222 = arith.addf %218, %221 : vector<16x128xf32>
    %223 = arith.addf %185, %222 : vector<16x128xf32>
    %224 = vector.extract_strided_slice %223 {offsets = [0, 0], sizes = [8, 128], strides = [1, 1]} : vector<16x128xf32> to vector<8x128xf32>
    %c0_261 = arith.constant 0 : index
    %c0_262 = arith.constant 0 : index
    %225 = vector.load %arg14[%c0_261, %c0_262] : memref<8x16xf32, #tpu.memory_space<vmem>>, vector<8x16xf32>
    %cst_263 = arith.constant dense<0.000000e+00> : vector<8x128xf32>
    %226 = tpu.matmul %225, %223, %cst_263 {dimension_numbers = #tpu.dot_dimension_numbers<[1], [0], [0], [1], [0, 0, 1, 1], [], []>} : vector<8x16xf32>, vector<16x128xf32>, vector<8x128xf32> -> vector<8x128xf32>
    %c0_264 = arith.constant 0 : index
    %c0_265 = arith.constant 0 : index
    %227 = vector.load %arg15[%c0_264, %c0_265] : memref<128x128xf32, #tpu.memory_space<vmem>>, vector<128x128xf32>
    %cst_266 = arith.constant dense<0.000000e+00> : vector<8x128xf32>
    %228 = tpu.matmul %224, %227, %cst_266 {dimension_numbers = #tpu.dot_dimension_numbers<[1], [0], [0], [1], [0, 0, 1, 1], [], []>} : vector<8x128xf32>, vector<128x128xf32>, vector<8x128xf32> -> vector<8x128xf32>
    %c0_267 = arith.constant 0 : index
    %c0_268 = arith.constant 0 : index
    %229 = vector.load %arg16[%c0_267, %c0_268] : memref<128x128xf32, #tpu.memory_space<vmem>>, vector<128x128xf32>
    %cst_269 = arith.constant dense<0.000000e+00> : vector<8x128xf32>
    %230 = tpu.matmul %226, %229, %cst_269 {dimension_numbers = #tpu.dot_dimension_numbers<[1], [0], [0], [1], [0, 0, 1, 1], [], []>} : vector<8x128xf32>, vector<128x128xf32>, vector<8x128xf32> -> vector<8x128xf32>
    %231 = arith.addf %228, %230 : vector<8x128xf32>
    %c0_270 = arith.constant 0 : index
    %c0_271 = arith.constant 0 : index
    %232 = vector.load %arg17[%c0_270, %c0_271] : memref<128x128xf32, #tpu.memory_space<vmem>>, vector<128x128xf32>
    %cst_272 = arith.constant dense<0.000000e+00> : vector<8x128xf32>
    %233 = tpu.matmul %210, %232, %cst_272 {dimension_numbers = #tpu.dot_dimension_numbers<[1], [0], [0], [1], [0, 0, 1, 1], [], []>} : vector<8x128xf32>, vector<128x128xf32>, vector<8x128xf32> -> vector<8x128xf32>
    %234 = arith.addf %231, %233 : vector<8x128xf32>
    %c0_273 = arith.constant 0 : index
    %c0_274 = arith.constant 0 : index
    %235 = vector.load %arg18[%c0_273, %c0_274] : memref<1x128xf32, #tpu.memory_space<vmem>>, vector<1x128xf32>
    %236 = vector.broadcast %235 : vector<1x128xf32> to vector<8x128xf32>
    %237 = arith.addf %234, %236 : vector<8x128xf32>
    %cst_275 = arith.constant 0.000000e+00 : f32
    %238 = vector.broadcast %cst_275 : f32 to vector<8x128xf32>
    %239 = arith.maximumf %237, %238 : vector<8x128xf32>
    %c0_276 = arith.constant 0 : index
    %c0_277 = arith.constant 0 : index
    %240 = vector.load %arg19[%c0_276, %c0_277] : memref<128x128xf32, #tpu.memory_space<vmem>>, vector<128x128xf32>
    %cst_278 = arith.constant dense<0.000000e+00> : vector<8x128xf32>
    %241 = tpu.matmul %239, %240, %cst_278 {dimension_numbers = #tpu.dot_dimension_numbers<[1], [0], [0], [1], [0, 0, 1, 1], [], []>} : vector<8x128xf32>, vector<128x128xf32>, vector<8x128xf32> -> vector<8x128xf32>
    %c0_279 = arith.constant 0 : index
    %c0_280 = arith.constant 0 : index
    %242 = vector.load %arg20[%c0_279, %c0_280] : memref<1x128xf32, #tpu.memory_space<vmem>>, vector<1x128xf32>
    %243 = vector.broadcast %242 : vector<1x128xf32> to vector<8x128xf32>
    %244 = arith.addf %241, %243 : vector<8x128xf32>
    %245 = arith.negf %244 : vector<8x128xf32>
    %246 = math.exp %245 : vector<8x128xf32>
    %cst_281 = arith.constant 1.000000e+00 : f32
    %247 = vector.broadcast %cst_281 : f32 to vector<8x128xf32>
    %248 = arith.addf %247, %246 : vector<8x128xf32>
    %249 = arith.divf %247, %248 : vector<8x128xf32>
    %c0_282 = arith.constant 0 : index
    %c0_283 = arith.constant 0 : index
    %250 = vector.load %arg21[%c0_282, %c0_283] : memref<8x128xf32, #tpu.memory_space<vmem>>, vector<8x128xf32>
    tpu.vector_store %arg21[%c0_282, %c0_283], %249 {strides = array<i32>} : memref<8x128xf32, #tpu.memory_space<vmem>>, vector<8x128xf32>,
    return
  }
  func.func @transform_0(%arg0: i32) -> (i32, i32) {
    %c0_i32 = arith.constant 0 : i32
    %c0_i32_0 = arith.constant 0 : i32
    %c0_i32_1 = arith.constant 0 : i32
    return %c0_i32, %c0_i32_0 : i32, i32
  }
  func.func @transform_1(%arg0: i32) -> (i32, i32) {
    %c0_i32 = arith.constant 0 : i32
    %c0_i32_0 = arith.constant 0 : i32
    %c0_i32_1 = arith.constant 0 : i32
    return %c0_i32, %c0_i32_0 : i32, i32
  }
  func.func @transform_2(%arg0: i32) -> (i32, i32) {
    %c0_i32 = arith.constant 0 : i32
    %c0_i32_0 = arith.constant 0 : i32
    %c0_i32_1 = arith.constant 0 : i32
    return %c0_i32, %c0_i32_0 : i32, i32
  }
  func.func @transform_3(%arg0: i32) -> (i32, i32) {
    %c0_i32 = arith.constant 0 : i32
    %c0_i32_0 = arith.constant 0 : i32
    %c0_i32_1 = arith.constant 0 : i32
    return %c0_i32, %c0_i32_0 : i32, i32
  }
  func.func @transform_4(%arg0: i32) -> (i32, i32) {
    %c0_i32 = arith.constant 0 : i32
    %c0_i32_0 = arith.constant 0 : i32
    %c0_i32_1 = arith.constant 0 : i32
    return %c0_i32, %c0_i32_0 : i32, i32
  }
  func.func @transform_5(%arg0: i32) -> (i32, i32) {
    %c0_i32 = arith.constant 0 : i32
    %c0_i32_0 = arith.constant 0 : i32
    %c0_i32_1 = arith.constant 0 : i32
    return %c0_i32, %c0_i32_0 : i32, i32
  }
  func.func @transform_6(%arg0: i32) -> (i32, i32) {
    %c0_i32 = arith.constant 0 : i32
    %c0_i32_0 = arith.constant 0 : i32
    %c0_i32_1 = arith.constant 0 : i32
    return %c0_i32, %c0_i32_0 : i32, i32
  }
  func.func @transform_7(%arg0: i32) -> (i32, i32) {
    %c0_i32 = arith.constant 0 : i32
    %c0_i32_0 = arith.constant 0 : i32
    %c0_i32_1 = arith.constant 0 : i32
    return %c0_i32, %c0_i32_0 : i32, i32
  }
  func.func @transform_8(%arg0: i32) -> (i32, i32) {
    %c0_i32 = arith.constant 0 : i32
    %c0_i32_0 = arith.constant 0 : i32
    %c0_i32_1 = arith.constant 0 : i32
    return %c0_i32, %c0_i32_0 : i32, i32
  }
  func.func @transform_9(%arg0: i32) -> (i32, i32) {
    %c0_i32 = arith.constant 0 : i32
    %c0_i32_0 = arith.constant 0 : i32
    %c0_i32_1 = arith.constant 0 : i32
    return %c0_i32, %c0_i32_0 : i32, i32
  }
  func.func @transform_10(%arg0: i32) -> (i32, i32, i32, i32) {
    %c0_i32 = arith.constant 0 : i32
    %c0_i32_0 = arith.constant 0 : i32
    %c0_i32_1 = arith.constant 0 : i32
    %c0_i32_2 = arith.constant 0 : i32
    %c0_i32_3 = arith.constant 0 : i32
    return %c0_i32, %c0_i32_0, %c0_i32_1, %c0_i32_2 : i32, i32, i32, i32
  }
  func.func @transform_11(%arg0: i32) -> (i32, i32, i32, i32) {
    %c0_i32 = arith.constant 0 : i32
    %c0_i32_0 = arith.constant 0 : i32
    %c0_i32_1 = arith.constant 0 : i32
    %c0_i32_2 = arith.constant 0 : i32
    %c0_i32_3 = arith.constant 0 : i32
    return %c0_i32, %c0_i32_0, %c0_i32_1, %c0_i32_2 : i32, i32, i32, i32
  }
  func.func @transform_12(%arg0: i32) -> (i32, i32, i32, i32) {
    %c0_i32 = arith.constant 0 : i32
    %c0_i32_0 = arith.constant 0 : i32
    %c0_i32_1 = arith.constant 0 : i32
    %c0_i32_2 = arith.constant 0 : i32
    %c0_i32_3 = arith.constant 0 : i32
    return %c0_i32, %c0_i32_0, %c0_i32_1, %c0_i32_2 : i32, i32, i32, i32
  }
  func.func @transform_13(%arg0: i32) -> (i32, i32) {
    %c0_i32 = arith.constant 0 : i32
    %c0_i32_0 = arith.constant 0 : i32
    %c0_i32_1 = arith.constant 0 : i32
    return %c0_i32, %c0_i32_0 : i32, i32
  }
  func.func @transform_14(%arg0: i32) -> (i32, i32) {
    %c0_i32 = arith.constant 0 : i32
    %c0_i32_0 = arith.constant 0 : i32
    %c0_i32_1 = arith.constant 0 : i32
    return %c0_i32, %c0_i32_0 : i32, i32
  }
  func.func @transform_15(%arg0: i32) -> (i32, i32) {
    %c0_i32 = arith.constant 0 : i32
    %c0_i32_0 = arith.constant 0 : i32
    %c0_i32_1 = arith.constant 0 : i32
    return %c0_i32, %c0_i32_0 : i32, i32
  }
  func.func @transform_16(%arg0: i32) -> (i32, i32) {
    %c0_i32 = arith.constant 0 : i32
    %c0_i32_0 = arith.constant 0 : i32
    %c0_i32_1 = arith.constant 0 : i32
    return %c0_i32, %c0_i32_0 : i32, i32
  }
  func.func @transform_17(%arg0: i32) -> (i32, i32) {
    %c0_i32 = arith.constant 0 : i32
    %c0_i32_0 = arith.constant 0 : i32
    %c0_i32_1 = arith.constant 0 : i32
    return %c0_i32, %c0_i32_0 : i32, i32
  }
  func.func @transform_18(%arg0: i32) -> (i32, i32) {
    %c0_i32 = arith.constant 0 : i32
    %c0_i32_0 = arith.constant 0 : i32
    %c0_i32_1 = arith.constant 0 : i32
    return %c0_i32, %c0_i32_0 : i32, i32
  }
  func.func @transform_19(%arg0: i32) -> (i32, i32) {
    %c0_i32 = arith.constant 0 : i32
    %c0_i32_0 = arith.constant 0 : i32
    %c0_i32_1 = arith.constant 0 : i32
    return %c0_i32, %c0_i32_0 : i32, i32
  }
  func.func @transform_20(%arg0: i32) -> (i32, i32) {
    %c0_i32 = arith.constant 0 : i32
    %c0_i32_0 = arith.constant 0 : i32
    %c0_i32_1 = arith.constant 0 : i32
    return %c0_i32, %c0_i32_0 : i32, i32
  }
}

</mosaic_0001>

<llo_original>
// kernel: tpu_custom_call.1
$region0: #{tpu_custom_call.1}
  #allocation0 [shape = 'u32[]', space=smem, size = 0x4, offset = 0x4, fixed_abs, tag = 'smem constant byte address 0x4 - core index']
  #allocation1 [shape = 'u32[144,128]{1,0:T(1,128)}', space=vmem, size = 0x12000, scoped, tag = 'internal scratch']
  %s0 = inlined_call_operand.hbm [shape: f32[16,128], index: 0, kind: input, shape index: {}]
  %s1 = inlined_call_operand.hbm [shape: f32[8,128], index: 1, kind: input, shape index: {}]
  %s2 = inlined_call_operand.hbm [shape: f32[8,128], index: 2, kind: input, shape index: {}]
  %s3 = inlined_call_operand.hbm [shape: f32[8,128], index: 3, kind: input, shape index: {}]
  %s4 = inlined_call_operand.hbm [shape: f32[8,16], index: 4, kind: input, shape index: {}]
  %s5 = inlined_call_operand.vmem [shape: f32[16,8], index: 5, kind: input, shape index: {}]
  %s6 = inlined_call_operand.hbm [shape: f32[8,8], index: 6, kind: input, shape index: {}]
  %s7 = inlined_call_operand.hbm [shape: f32[8,8], index: 7, kind: input, shape index: {}]
  %s8 = inlined_call_operand.hbm [shape: f32[8,16], index: 8, kind: input, shape index: {}]
  %s9 = inlined_call_operand.vmem [shape: f32[16,8], index: 9, kind: input, shape index: {}]
  %s10 = inlined_call_operand.hbm [shape: f32[3,6,128,128], index: 10, kind: input, shape index: {}]
  %s11 = inlined_call_operand.hbm [shape: f32[3,6,1,128], index: 11, kind: input, shape index: {}]
  %s12 = inlined_call_operand.hbm [shape: f32[3,6,128,128], index: 12, kind: input, shape index: {}]
  %s13 = inlined_call_operand.hbm [shape: f32[8,16], index: 13, kind: input, shape index: {}]
  %s14 = inlined_call_operand.hbm [shape: f32[128,128], index: 14, kind: input, shape index: {}]
  %s15 = inlined_call_operand.hbm [shape: f32[128,128], index: 15, kind: input, shape index: {}]
  %s16 = inlined_call_operand.hbm [shape: f32[128,128], index: 16, kind: input, shape index: {}]
  %s17 = inlined_call_operand.hbm [shape: f32[1,128], index: 17, kind: input, shape index: {}]
  %s18 = inlined_call_operand.hbm [shape: f32[128,128], index: 18, kind: input, shape index: {}]
  %s19 = inlined_call_operand.hbm [shape: f32[1,128], index: 19, kind: input, shape index: {}]
  %s20 = inlined_call_operand.hbm [shape: f32[8,128], index: 20, kind: output, shape index: {}]
  %s21 = sld [smem:[#allocation0]]
  $region162: #{tpu_custom_call.1} parent=0
    _
  %s23 = ssub.s32 1, %s21
  %s24 = scalar_select 0, %s23, %s21
  $region1: #{tpu_custom_call.1} parent=0
    #allocation2 [shape = 'u8[8192]{0}', space=vmem, size = 0x2000, scoped, tag = 'input window, operand 0, single buffered']
    #allocation3 [shape = 's32[1]{0}', space=sflag, size = 0x4, scoped, tag = 'scoped memory for tpu_custom_call.1']
    #allocation4 [shape = 's32[1]{0}', space=sflag, size = 0x4, scoped, tag = 'scoped memory for tpu_custom_call.1']
    #allocation5 [shape = 'u8[4096]{0}', space=vmem, size = 0x1000, scoped, tag = 'input window, operand 1, single buffered']
    #allocation6 [shape = 's32[1]{0}', space=sflag, size = 0x4, scoped, tag = 'scoped memory for tpu_custom_call.1']
    #allocation7 [shape = 'u8[4096]{0}', space=vmem, size = 0x1000, scoped, tag = 'input window, operand 2, single buffered']
    #allocation8 [shape = 'u8[4096]{0}', space=vmem, size = 0x1000, scoped, tag = 'input window, operand 3, single buffered']
    #allocation9 [shape = 's32[1]{0}', space=sflag, size = 0x4, scoped, tag = 'scoped memory for tpu_custom_call.1']
    #allocation10 [shape = 'u8[4096]{0}', space=vmem, size = 0x1000, scoped, tag = 'input window, operand 4, single buffered']
    #allocation11 [shape = 'u8[4096]{0}', space=vmem, size = 0x1000, scoped, tag = 'input window, operand 6, single buffered']
    #allocation12 [shape = 's32[1]{0}', space=sflag, size = 0x4, scoped, tag = 'scoped memory for tpu_custom_call.1']
    #allocation13 [shape = 'u8[4096]{0}', space=vmem, size = 0x1000, scoped, tag = 'input window, operand 7, single buffered']
    #allocation14 [shape = 'u8[4096]{0}', space=vmem, size = 0x1000, scoped, tag = 'input window, operand 8, single buffered']
    #allocation15 [shape = 's32[1]{0}', space=sflag, size = 0x4, scoped, tag = 'scoped memory for tpu_custom_call.1']
    #allocation16 [shape = 'u8[1179648]{0}', space=vmem, size = 0x120000, scoped, tag = 'input window, operand 10, single buffered']
    #allocation17 [shape = 'u8[9216]{0}', space=vmem, size = 0x2400, scoped, tag = 'input window, operand 11, single buffered']
    #allocation18 [shape = 's32[1]{0}', space=sflag, size = 0x4, scoped, tag = 'scoped memory for tpu_custom_call.1']
    #allocation19 [shape = 'u8[1179648]{0}', space=vmem, size = 0x120000, scoped, tag = 'input window, operand 12, single buffered']
    #allocation20 [shape = 'u8[4096]{0}', space=vmem, size = 0x1000, scoped, tag = 'input window, operand 13, single buffered']
    #allocation21 [shape = 's32[1]{0}', space=sflag, size = 0x4, scoped, tag = 'scoped memory for tpu_custom_call.1']
    #allocation22 [shape = 'u8[65536]{0}', space=vmem, size = 0x10000, scoped, tag = 'input window, operand 14, single buffered']
    #allocation23 [shape = 'u8[65536]{0}', space=vmem, size = 0x10000, scoped, tag = 'input window, operand 15, single buffered']
    #allocation24 [shape = 's32[1]{0}', space=sflag, size = 0x4, scoped, tag = 'scoped memory for tpu_custom_call.1']
    #allocation25 [shape = 'u8[65536]{0}', space=vmem, size = 0x10000, scoped, tag = 'input window, operand 16, single buffered']
    #allocation26 [shape = 'u8[512]{0}', space=vmem, size = 0x400, scoped, tag = 'input window, operand 17, single buffered']
    #allocation27 [shape = 's32[1]{0}', space=sflag, size = 0x4, scoped, tag = 'scoped memory for tpu_custom_call.1']
    #allocation28 [shape = 'u8[65536]{0}', space=vmem, size = 0x10000, scoped, tag = 'input window, operand 18, single buffered']
    #allocation29 [shape = 'u8[512]{0}', space=vmem, size = 0x400, scoped, tag = 'input window, operand 19, single buffered']
    #allocation30 [shape = 's32[1]{0}', space=sflag, size = 0x4, scoped, tag = 'scoped memory for tpu_custom_call.1']
    #allocation31 [shape = 'u8[4096]{0}', space=vmem, size = 0x1000, scoped, tag = 'output window, operand 0, single buffered']
    %25 = vsyncpa [#allocation3], 0
    %26 = vsyncpa [#allocation6], 0
    %27 = vsyncpa [#allocation9], 0
    %28 = vsyncpa [#allocation12], 0
    %29 = vsyncpa [#allocation15], 0
    %30 = vsyncpa [#allocation18], 0
    %31 = vsyncpa [#allocation21], 0
    %32 = vsyncpa [#allocation24], 0
    %33 = vsyncpa [#allocation27], 0
    %34 = vsyncpa [#allocation30], 0
    %35 = vsyncpa [#allocation4], 0
    // Predicated region
    $region2: #{tpu_custom_call.1} parent=1 // pred_check
      _
    $region3: #{tpu_custom_call.1} parent=1 // pred_check_branch
      %37 = sbr.rel (0) target = $region5
    $region4: #{tpu_custom_call.1} parent=1 // pred_region
      %s39 = ssub.s32 256, 256
      %40 = vsyncadd [#allocation3], %s39
      %s41 = sshll.u32 [#allocation2], 4
      %s42 = int_to_ptr.vmem [resolvable:$true] %s41
      %47 = dma.hbm_to_vmem [thread:$0]  %s0, 256, %s42, [#allocation3], 128, 128, 8
    $region5: #{tpu_custom_call.1} parent=1 // pred_fallthru
      _
    // Predicated region
    $region6: #{tpu_custom_call.1} parent=1 // pred_check
      _
    $region7: #{tpu_custom_call.1} parent=1 // pred_check_branch
      %49 = sbr.rel (0) target = $region9
    $region8: #{tpu_custom_call.1} parent=1 // pred_region
      %s51 = ssub.s32 128, 128
      %52 = vsyncadd [#allocation6], %s51
      %s54 = sshll.u32 [#allocation5], 4
      %s55 = int_to_ptr.vmem [resolvable:$true] %s54
      %57 = dma.hbm_to_vmem [thread:$0]  %s1, 128, %s55, [#allocation6]
    $region9: #{tpu_custom_call.1} parent=1 // pred_fallthru
      _
    // Predicated region
    $region10: #{tpu_custom_call.1} parent=1 // pred_check
      _
    $region11: #{tpu_custom_call.1} parent=1 // pred_check_branch
      %59 = sbr.rel (0) target = $region13
    $region12: #{tpu_custom_call.1} parent=1 // pred_region
      %s61 = ssub.s32 128, 128
      %62 = vsyncadd [#allocation6], %s61
      %s64 = sshll.u32 [#allocation7], 4
      %s65 = int_to_ptr.vmem [resolvable:$true] %s64
      %67 = dma.hbm_to_vmem [thread:$0]  %s2, 128, %s65, [#allocation6]
    $region13: #{tpu_custom_call.1} parent=1 // pred_fallthru
      _
    // Predicated region
    $region14: #{tpu_custom_call.1} parent=1 // pred_check
      _
    $region15: #{tpu_custom_call.1} parent=1 // pred_check_branch
      %69 = sbr.rel (0) target = $region17
    $region16: #{tpu_custom_call.1} parent=1 // pred_region
      %s71 = ssub.s32 128, 128
      %72 = vsyncadd [#allocation9], %s71
      %s74 = sshll.u32 [#allocation8], 4
      %s75 = int_to_ptr.vmem [resolvable:$true] %s74
      %77 = dma.hbm_to_vmem [thread:$0]  %s3, 128, %s75, [#allocation9]
    $region17: #{tpu_custom_call.1} parent=1 // pred_fallthru
      _
    // Predicated region
    $region18: #{tpu_custom_call.1} parent=1 // pred_check
      _
    $region19: #{tpu_custom_call.1} parent=1 // pred_check_branch
      %79 = sbr.rel (0) target = $region21
    $region20: #{tpu_custom_call.1} parent=1 // pred_region
      %s81 = ssub.s32 128, 128
      %82 = vsyncadd [#allocation9], %s81
      %s84 = sshll.u32 [#allocation10], 4
      %s85 = int_to_ptr.vmem [resolvable:$true] %s84
      %87 = dma.hbm_to_vmem [thread:$0]  %s4, 128, %s85, [#allocation9]
    $region21: #{tpu_custom_call.1} parent=1 // pred_fallthru
      _
    // Predicated region
    $region22: #{tpu_custom_call.1} parent=1 // pred_check
      _
    $region23: #{tpu_custom_call.1} parent=1 // pred_check_branch
      %89 = sbr.rel (0) target = $region25
    $region24: #{tpu_custom_call.1} parent=1 // pred_region
      _
    $region25: #{tpu_custom_call.1} parent=1 // pred_fallthru
      _
    // Predicated region
    $region26: #{tpu_custom_call.1} parent=1 // pred_check
      _
    $region27: #{tpu_custom_call.1} parent=1 // pred_check_branch
      %91 = sbr.rel (0) target = $region29
    $region28: #{tpu_custom_call.1} parent=1 // pred_region
      %s93 = ssub.s32 128, 128
      %94 = vsyncadd [#allocation12], %s93
      %s96 = sshll.u32 [#allocation11], 4
      %s97 = int_to_ptr.vmem [resolvable:$true] %s96
      %99 = dma.hbm_to_vmem [thread:$0]  %s6, 128, %s97, [#allocation12]
    $region29: #{tpu_custom_call.1} parent=1 // pred_fallthru
      _
    // Predicated region
    $region30: #{tpu_custom_call.1} parent=1 // pred_check
      _
    $region31: #{tpu_custom_call.1} parent=1 // pred_check_branch
      %101 = sbr.rel (0) target = $region33
    $region32: #{tpu_custom_call.1} parent=1 // pred_region
      %s103 = ssub.s32 128, 128
      %104 = vsyncadd [#allocation12], %s103
      %s106 = sshll.u32 [#allocation13], 4
      %s107 = int_to_ptr.vmem [resolvable:$true] %s106
      %109 = dma.hbm_to_vmem [thread:$0]  %s7, 128, %s107, [#allocation12]
    $region33: #{tpu_custom_call.1} parent=1 // pred_fallthru
      _
    // Predicated region
    $region34: #{tpu_custom_call.1} parent=1 // pred_check
      _
    $region35: #{tpu_custom_call.1} parent=1 // pred_check_branch
      %111 = sbr.rel (0) target = $region37
    $region36: #{tpu_custom_call.1} parent=1 // pred_region
      %s113 = ssub.s32 128, 128
      %114 = vsyncadd [#allocation15], %s113
      %s116 = sshll.u32 [#allocation14], 4
      %s117 = int_to_ptr.vmem [resolvable:$true] %s116
      %119 = dma.hbm_to_vmem [thread:$0]  %s8, 128, %s117, [#allocation15]
    $region37: #{tpu_custom_call.1} parent=1 // pred_fallthru
      _
    // Predicated region
    $region38: #{tpu_custom_call.1} parent=1 // pred_check
      _
    $region39: #{tpu_custom_call.1} parent=1 // pred_check_branch
      %121 = sbr.rel (0) target = $region41
    $region40: #{tpu_custom_call.1} parent=1 // pred_region
      _
    $region41: #{tpu_custom_call.1} parent=1 // pred_fallthru
      _
    // Predicated region
    $region42: #{tpu_custom_call.1} parent=1 // pred_check
      _
    $region43: #{tpu_custom_call.1} parent=1 // pred_check_branch
      %123 = sbr.rel (0) target = $region45
    $region44: #{tpu_custom_call.1} parent=1 // pred_region
      %s125 = ssub.s32 36864, 36864
      %126 = vsyncadd [#allocation15], %s125
      %s127 = sshll.u32 [#allocation16], 4
      %s128 = int_to_ptr.vmem [resolvable:$true] %s127
      %133 = dma.hbm_to_vmem [thread:$0]  %s10, 36864, %s128, [#allocation15], 128, 128, 8
    $region45: #{tpu_custom_call.1} parent=1 // pred_fallthru
      _
    // Predicated region
    $region46: #{tpu_custom_call.1} parent=1 // pred_check
      _
    $region47: #{tpu_custom_call.1} parent=1 // pred_check_branch
      %135 = sbr.rel (0) target = $region49
    $region48: #{tpu_custom_call.1} parent=1 // pred_region
      %s137 = ssub.s32 288, 288
      %138 = vsyncadd [#allocation18], %s137
      %s139 = sshll.u32 [#allocation17], 4
      %s140 = int_to_ptr.vmem [resolvable:$true] %s139
      %145 = dma.hbm_to_vmem [thread:$0]  %s11, 288, %s140, [#allocation18], 16, 16, 1
    $region49: #{tpu_custom_call.1} parent=1 // pred_fallthru
      _
    // Predicated region
    $region50: #{tpu_custom_call.1} parent=1 // pred_check
      _
    $region51: #{tpu_custom_call.1} parent=1 // pred_check_branch
      %147 = sbr.rel (0) target = $region53
    $region52: #{tpu_custom_call.1} parent=1 // pred_region
      %s149 = ssub.s32 36864, 36864
      %150 = vsyncadd [#allocation18], %s149
      %s151 = sshll.u32 [#allocation19], 4
      %s152 = int_to_ptr.vmem [resolvable:$true] %s151
      %157 = dma.hbm_to_vmem [thread:$0]  %s12, 36864, %s152, [#allocation18], 128, 128, 8
    $region53: #{tpu_custom_call.1} parent=1 // pred_fallthru
      _
    // Predicated region
    $region54: #{tpu_custom_call.1} parent=1 // pred_check
      _
    $region55: #{tpu_custom_call.1} parent=1 // pred_check_branch
      %159 = sbr.rel (0) target = $region57
    $region56: #{tpu_custom_call.1} parent=1 // pred_region
      %s161 = ssub.s32 128, 128
      %162 = vsyncadd [#allocation21], %s161
      %s164 = sshll.u32 [#allocation20], 4
      %s165 = int_to_ptr.vmem [resolvable:$true] %s164
      %167 = dma.hbm_to_vmem [thread:$0]  %s13, 128, %s165, [#allocation21]
    $region57: #{tpu_custom_call.1} parent=1 // pred_fallthru
      _
    // Predicated region
    $region58: #{tpu_custom_call.1} parent=1 // pred_check
      _
    $region59: #{tpu_custom_call.1} parent=1 // pred_check_branch
      %169 = sbr.rel (0) target = $region61
    $region60: #{tpu_custom_call.1} parent=1 // pred_region
      %s171 = ssub.s32 2048, 2048
      %172 = vsyncadd [#allocation21], %s171
      %s173 = sshll.u32 [#allocation22], 4
      %s174 = int_to_ptr.vmem [resolvable:$true] %s173
      %179 = dma.hbm_to_vmem [thread:$0]  %s14, 2048, %s174, [#allocation21], 128, 128, 8
    $region61: #{tpu_custom_call.1} parent=1 // pred_fallthru
      _
    // Predicated region
    $region62: #{tpu_custom_call.1} parent=1 // pred_check
      _
    $region63: #{tpu_custom_call.1} parent=1 // pred_check_branch
      %181 = sbr.rel (0) target = $region65
    $region64: #{tpu_custom_call.1} parent=1 // pred_region
      %s183 = ssub.s32 2048, 2048
      %184 = vsyncadd [#allocation24], %s183
      %s185 = sshll.u32 [#allocation23], 4
      %s186 = int_to_ptr.vmem [resolvable:$true] %s185
      %191 = dma.hbm_to_vmem [thread:$0]  %s15, 2048, %s186, [#allocation24], 128, 128, 8
    $region65: #{tpu_custom_call.1} parent=1 // pred_fallthru
      _
    // Predicated region
    $region66: #{tpu_custom_call.1} parent=1 // pred_check
      _
    $region67: #{tpu_custom_call.1} parent=1 // pred_check_branch
      %193 = sbr.rel (0) target = $region69
    $region68: #{tpu_custom_call.1} parent=1 // pred_region
      %s195 = ssub.s32 2048, 2048
      %196 = vsyncadd [#allocation24], %s195
      %s197 = sshll.u32 [#allocation25], 4
      %s198 = int_to_ptr.vmem [resolvable:$true] %s197
      %203 = dma.hbm_to_vmem [thread:$0]  %s16, 2048, %s198, [#allocation24], 128, 128, 8
    $region69: #{tpu_custom_call.1} parent=1 // pred_fallthru
      _
    // Predicated region
    $region70: #{tpu_custom_call.1} parent=1 // pred_check
      _
    $region71: #{tpu_custom_call.1} parent=1 // pred_check_branch
      %205 = sbr.rel (0) target = $region73
    $region72: #{tpu_custom_call.1} parent=1 // pred_region
      %s207 = ssub.s32 16, 16
      %208 = vsyncadd [#allocation27], %s207
      %s210 = sshll.u32 [#allocation26], 4
      %s211 = int_to_ptr.vmem [resolvable:$true] %s210
      %213 = dma.hbm_to_vmem [thread:$0]  %s17, 16, %s211, [#allocation27]
    $region73: #{tpu_custom_call.1} parent=1 // pred_fallthru
      _
    // Predicated region
    $region74: #{tpu_custom_call.1} parent=1 // pred_check
      _
    $region75: #{tpu_custom_call.1} parent=1 // pred_check_branch
      %215 = sbr.rel (0) target = $region77
    $region76: #{tpu_custom_call.1} parent=1 // pred_region
      %s217 = ssub.s32 2048, 2048
      %218 = vsyncadd [#allocation27], %s217
      %s219 = sshll.u32 [#allocation28], 4
      %s220 = int_to_ptr.vmem [resolvable:$true] %s219
      %225 = dma.hbm_to_vmem [thread:$0]  %s18, 2048, %s220, [#allocation27], 128, 128, 8
    $region77: #{tpu_custom_call.1} parent=1 // pred_fallthru
      _
    // Predicated region
    $region78: #{tpu_custom_call.1} parent=1 // pred_check
      _
    $region79: #{tpu_custom_call.1} parent=1 // pred_check_branch
      %227 = sbr.rel (0) target = $region81
    $region80: #{tpu_custom_call.1} parent=1 // pred_region
      %s229 = ssub.s32 16, 16
      %230 = vsyncadd [#allocation30], %s229
      %s232 = sshll.u32 [#allocation29], 4
      %s233 = int_to_ptr.vmem [resolvable:$true] %s232
      %235 = dma.hbm_to_vmem [thread:$0]  %s19, 16, %s233, [#allocation30]
    $region81: #{tpu_custom_call.1} parent=1 // pred_fallthru
      _
    // Predicated region
    $region82: #{tpu_custom_call.1} parent=1 // pred_check
      _
    $region83: #{tpu_custom_call.1} parent=1 // pred_check_branch
      %237 = sbr.rel (0) target = $region85
    $region84: #{tpu_custom_call.1} parent=1 // pred_region
      %238 = dma.done [#allocation3], 256
    $region85: #{tpu_custom_call.1} parent=1 // pred_fallthru
      _
    // Predicated region
    $region86: #{tpu_custom_call.1} parent=1 // pred_check
      _
    $region87: #{tpu_custom_call.1} parent=1 // pred_check_branch
      %240 = sbr.rel (0) target = $region89
    $region88: #{tpu_custom_call.1} parent=1 // pred_region
      %241 = dma.done [#allocation6], 128
    $region89: #{tpu_custom_call.1} parent=1 // pred_fallthru
      _
    // Predicated region
    $region90: #{tpu_custom_call.1} parent=1 // pred_check
      _
    $region91: #{tpu_custom_call.1} parent=1 // pred_check_branch
      %243 = sbr.rel (0) target = $region93
    $region92: #{tpu_custom_call.1} parent=1 // pred_region
      %244 = dma.done [#allocation6], 128
    $region93: #{tpu_custom_call.1} parent=1 // pred_fallthru
      _
    // Predicated region
    $region94: #{tpu_custom_call.1} parent=1 // pred_check
      _
    $region95: #{tpu_custom_call.1} parent=1 // pred_check_branch
      %246 = sbr.rel (0) target = $region97
    $region96: #{tpu_custom_call.1} parent=1 // pred_region
      %247 = dma.done [#allocation9], 128
    $region97: #{tpu_custom_call.1} parent=1 // pred_fallthru
      _
    // Predicated region
    $region98: #{tpu_custom_call.1} parent=1 // pred_check
      _
    $region99: #{tpu_custom_call.1} parent=1 // pred_check_branch
      %249 = sbr.rel (0) target = $region101
    $region100: #{tpu_custom_call.1} parent=1 // pred_region
      %250 = dma.done [#allocation9], 128
    $region101: #{tpu_custom_call.1} parent=1 // pred_fallthru
      _
    // Predicated region
    $region102: #{tpu_custom_call.1} parent=1 // pred_check
      _
    $region103: #{tpu_custom_call.1} parent=1 // pred_check_branch
      %252 = sbr.rel (0) target = $region105
    $region104: #{tpu_custom_call.1} parent=1 // pred_region
      %253 = dma.done [#allocation12], 128
    $region105: #{tpu_custom_call.1} parent=1 // pred_fallthru
      _
    // Predicated region
    $region106: #{tpu_custom_call.1} parent=1 // pred_check
      _
    $region107: #{tpu_custom_call.1} parent=1 // pred_check_branch
      %255 = sbr.rel (0) target = $region109
    $region108: #{tpu_custom_call.1} parent=1 // pred_region
      %256 = dma.done [#allocation12], 128
    $region109: #{tpu_custom_call.1} parent=1 // pred_fallthru
      _
    // Predicated region
    $region110: #{tpu_custom_call.1} parent=1 // pred_check
      _
    $region111: #{tpu_custom_call.1} parent=1 // pred_check_branch
      %258 = sbr.rel (0) target = $region113
    $region112: #{tpu_custom_call.1} parent=1 // pred_region
      %259 = dma.done [#allocation15], 128
    $region113: #{tpu_custom_call.1} parent=1 // pred_fallthru
      _
    // Predicated region
    $region114: #{tpu_custom_call.1} parent=1 // pred_check
      _
    $region115: #{tpu_custom_call.1} parent=1 // pred_check_branch
      %261 = sbr.rel (0) target = $region117
    $region116: #{tpu_custom_call.1} parent=1 // pred_region
      %262 = dma.done [#allocation15], 36864
    $region117: #{tpu_custom_call.1} parent=1 // pred_fallthru
      _
    // Predicated region
    $region118: #{tpu_custom_call.1} parent=1 // pred_check
      _
    $region119: #{tpu_custom_call.1} parent=1 // pred_check_branch
      %264 = sbr.rel (0) target = $region121
    $region120: #{tpu_custom_call.1} parent=1 // pred_region
      %265 = dma.done [#allocation18], 288
    $region121: #{tpu_custom_call.1} parent=1 // pred_fallthru
      _
    // Predicated region
    $region122: #{tpu_custom_call.1} parent=1 // pred_check
      _
    $region123: #{tpu_custom_call.1} parent=1 // pred_check_branch
      %267 = sbr.rel (0) target = $region125
    $region124: #{tpu_custom_call.1} parent=1 // pred_region
      %268 = dma.done [#allocation18], 36864
    $region125: #{tpu_custom_call.1} parent=1 // pred_fallthru
      _
    // Predicated region
    $region126: #{tpu_custom_call.1} parent=1 // pred_check
      _
    $region127: #{tpu_custom_call.1} parent=1 // pred_check_branch
      %270 = sbr.rel (0) target = $region129
    $region128: #{tpu_custom_call.1} parent=1 // pred_region
      %271 = dma.done [#allocation21], 128
    $region129: #{tpu_custom_call.1} parent=1 // pred_fallthru
      _
    // Predicated region
    $region130: #{tpu_custom_call.1} parent=1 // pred_check
      _
    $region131: #{tpu_custom_call.1} parent=1 // pred_check_branch
      %273 = sbr.rel (0) target = $region133
    $region132: #{tpu_custom_call.1} parent=1 // pred_region
      %274 = dma.done [#allocation21], 2048
    $region133: #{tpu_custom_call.1} parent=1 // pred_fallthru
      _
    // Predicated region
    $region134: #{tpu_custom_call.1} parent=1 // pred_check
      _
    $region135: #{tpu_custom_call.1} parent=1 // pred_check_branch
      %276 = sbr.rel (0) target = $region137
    $region136: #{tpu_custom_call.1} parent=1 // pred_region
      %277 = dma.done [#allocation24], 2048
    $region137: #{tpu_custom_call.1} parent=1 // pred_fallthru
      _
    // Predicated region
    $region138: #{tpu_custom_call.1} parent=1 // pred_check
      _
    $region139: #{tpu_custom_call.1} parent=1 // pred_check_branch
      %279 = sbr.rel (0) target = $region141
    $region140: #{tpu_custom_call.1} parent=1 // pred_region
      %280 = dma.done [#allocation24], 2048
    $region141: #{tpu_custom_call.1} parent=1 // pred_fallthru
      _
    // Predicated region
    $region142: #{tpu_custom_call.1} parent=1 // pred_check
      _
    $region143: #{tpu_custom_call.1} parent=1 // pred_check_branch
      %282 = sbr.rel (0) target = $region145
    $region144: #{tpu_custom_call.1} parent=1 // pred_region
      %283 = dma.done [#allocation27], 16
    $region145: #{tpu_custom_call.1} parent=1 // pred_fallthru
      _
    // Predicated region
    $region146: #{tpu_custom_call.1} parent=1 // pred_check
      _
    $region147: #{tpu_custom_call.1} parent=1 // pred_check_branch
      %285 = sbr.rel (0) target = $region149
    $region148: #{tpu_custom_call.1} parent=1 // pred_region
      %286 = dma.done [#allocation27], 2048
    $region149: #{tpu_custom_call.1} parent=1 // pred_fallthru
      _
    // Predicated region
    $region150: #{tpu_custom_call.1} parent=1 // pred_check
      _
    $region151: #{tpu_custom_call.1} parent=1 // pred_check_branch
      %288 = sbr.rel (0) target = $region153
    $region152: #{tpu_custom_call.1} parent=1 // pred_region
      %289 = dma.done [#allocation30], 16
    $region153: #{tpu_custom_call.1} parent=1 // pred_fallthru
      _
    %v290 = vld [vmem:[#allocation2] sm:$0xff]
    %v291 = vld [vmem:[#allocation2 + $0x8] sm:$0xff]
    %v292 = vld [vmem:[#allocation5] sm:$0xff]
    %v293 = vld [vmem:[#allocation7] sm:$0xff]
    %v294 = vld [vmem:[#allocation8] sm:$0xff]
    %v295 = vld [vmem:[#allocation10] sm:$0xff]
    %v296 = vld [vmem:[%s5] sm:$0xff]
    %v297 = vld [vmem:[%s5 + $0x8] sm:$0xff]
    %v298 = vld [vmem:[#allocation11] sm:$0xff]
    %v299 = vld [vmem:[#allocation13] sm:$0xff]
    %v300 = vld [vmem:[#allocation14] sm:$0xff]
    %v301 = vld [vmem:[%s9] sm:$0xff]
    %v302 = vld [vmem:[%s9 + $0x8] sm:$0xff]
    %vm303 = vcmask 130048
    %v305 = vsel %vm303, %v295, 0
    %307 = vmatprep.subr.mxu0 0.0
    %308 = vmatpush1.msra.mxu0 0.0
    %309 = vmatprep.subr.mxu0 0.0
    %310 = vmatpush1.msra.mxu0 0.0
    %311 = vmatprep.subr.mxu0 0.0
    %312 = vmatpush1.msra.mxu0 0.0
    %313 = vmatprep.subr.mxu0 0.0
    %314 = vmatpush1.msra.mxu0 0.0
    %315 = vmatprep.subr.mxu0 0.0
    %316 = vmatpush1.msra.mxu0 0.0
    %317 = vmatprep.subr.mxu0 0.0
    %318 = vmatpush1.msra.mxu0 0.0
    %319 = vmatprep.subr.mxu0 0.0
    %320 = vmatpush1.msra.mxu0 0.0
    %321 = vmatprep.subr.mxu0 0.0
    %322 = vmatpush1.msra.mxu0 0.0
    %323 = vmatprep.subr.mxu0 0.0
    %324 = vmatpush1.msra.mxu0 0.0
    %325 = vmatprep.subr.mxu0 0.0
    %326 = vmatpush1.msra.mxu0 0.0
    %327 = vmatprep.subr.mxu0 0.0
    %328 = vmatpush1.msra.mxu0 0.0
    %329 = vmatprep.subr.mxu0 0.0
    %330 = vmatpush1.msra.mxu0 0.0
    %331 = vmatprep.subr.mxu0 0.0
    %332 = vmatpush1.msra.mxu0 0.0
    %333 = vmatprep.subr.mxu0 0.0
    %334 = vmatpush1.msra.mxu0 0.0
    %335 = vmatprep.subr.mxu0 0.0
    %336 = vmatpush1.msra.mxu0 %v291
    %337 = vmatprep.subr.mxu0 0.0
    %338 = vmatpush1.msra.mxu0 %v290
    %339 = vmatprep.subr.mxu0 0.0
    %340 = vmatpush2.msra.mxu0 0.0
    %341 = vmatprep.subr.mxu0 0.0
    %342 = vmatpush2.msra.mxu0 0.0
    %343 = vmatprep.subr.mxu0 0.0
    %344 = vmatpush2.msra.mxu0 0.0
    %345 = vmatprep.subr.mxu0 0.0
    %346 = vmatpush2.msra.mxu0 0.0
    %347 = vmatprep.subr.mxu0 0.0
    %348 = vmatpush2.msra.mxu0 0.0
    %349 = vmatprep.subr.mxu0 0.0
    %350 = vmatpush2.msra.mxu0 0.0
    %351 = vmatprep.subr.mxu0 0.0
    %352 = vmatpush2.msra.mxu0 0.0
    %353 = vmatprep.subr.mxu0 0.0
    %354 = vmatpush2.msra.mxu0 0.0
    %355 = vmatprep.subr.mxu0 0.0
    %356 = vmatpush2.msra.mxu0 0.0
    %357 = vmatprep.subr.mxu0 0.0
    %358 = vmatpush2.msra.mxu0 0.0
    %359 = vmatprep.subr.mxu0 0.0
    %360 = vmatpush2.msra.mxu0 0.0
    %361 = vmatprep.subr.mxu0 0.0
    %362 = vmatpush2.msra.mxu0 0.0
    %363 = vmatprep.subr.mxu0 0.0
    %364 = vmatpush2.msra.mxu0 0.0
    %365 = vmatprep.subr.mxu0 0.0
    %366 = vmatpush2.msra.mxu0 0.0
    %367 = vmatprep.subr.mxu0 0.0
    %368 = vmatpush2.msra.mxu0 0.0
    %369 = vmatprep.subr.mxu0 0.0
    %370 = vmatpush2.msra.mxu0 0.0
    %371 = vmatprep.mubr.f32.mxu0 0.0
    %372 = vmatmul.mubr.f32.gmra.mxu0 %v305
    %v373 = vpop.f32.mrf.mxu0
    %v374 = vadd.f32 0.0, %v373
    %v375 = vpop.f32.mrf.mxu0
    %376 = vdwg.mxu0
    %v377 = vld [vmem:[#allocation16] sm:$0xff]
    %v378 = vld [vmem:[#allocation16 + $0x8] sm:$0xff]
    %v379 = vld [vmem:[#allocation16 + $0x10] sm:$0xff]
    %v380 = vld [vmem:[#allocation16 + $0x18] sm:$0xff]
    %v381 = vld [vmem:[#allocation16 + $0x20] sm:$0xff]
    %v382 = vld [vmem:[#allocation16 + $0x28] sm:$0xff]
    %v383 = vld [vmem:[#allocation16 + $0x30] sm:$0xff]
    %v384 = vld [vmem:[#allocation16 + $0x38] sm:$0xff]
    %v385 = vld [vmem:[#allocation16 + $0x40] sm:$0xff]
    %v386 = vld [vmem:[#allocation16 + $0x48] sm:$0xff]
    %v387 = vld [vmem:[#allocation16 + $0x50] sm:$0xff]
    %v388 = vld [vmem:[#allocation16 + $0x58] sm:$0xff]
    %v389 = vld [vmem:[#allocation16 + $0x60] sm:$0xff]
    %v390 = vld [vmem:[#allocation16 + $0x68] sm:$0xff]
    %v391 = vld [vmem:[#allocation16 + $0x70] sm:$0xff]
    %v392 = vld [vmem:[#allocation16 + $0x78] sm:$0xff]
    %v393 = vld [vmem:[#allocation17] sm:$0x1]
    %v395 = vlaneseq
    %v396 = vshrl.u32 %v395, 7
    %v397 = vsub.s32 0, %v396
    %v398 = vrot.slane %v393, %v397
    %400 = vmatprep.subr.mxu0 0.0
    %401 = vmatpush1.msra.mxu0 %v392
    %402 = vmatprep.subr.mxu0 0.0
    %403 = vmatpush1.msra.mxu0 %v391
    %404 = vmatprep.subr.mxu0 0.0
    %405 = vmatpush1.msra.mxu0 %v390
    %406 = vmatprep.subr.mxu0 0.0
    %407 = vmatpush1.msra.mxu0 %v389
    %408 = vmatprep.subr.mxu0 0.0
    %409 = vmatpush1.msra.mxu0 %v388
    %410 = vmatprep.subr.mxu0 0.0
    %411 = vmatpush1.msra.mxu0 %v387
    %412 = vmatprep.subr.mxu0 0.0
    %413 = vmatpush1.msra.mxu0 %v386
    %414 = vmatprep.subr.mxu0 0.0
    %415 = vmatpush1.msra.mxu0 %v385
    %416 = vmatprep.subr.mxu0 0.0
    %417 = vmatpush1.msra.mxu0 %v384
    %418 = vmatprep.subr.mxu0 0.0
    %419 = vmatpush1.msra.mxu0 %v383
    %420 = vmatprep.subr.mxu0 0.0
    %421 = vmatpush1.msra.mxu0 %v382
    %422 = vmatprep.subr.mxu0 0.0
    %423 = vmatpush1.msra.mxu0 %v381
    %424 = vmatprep.subr.mxu0 0.0
    %425 = vmatpush1.msra.mxu0 %v380
    %426 = vmatprep.subr.mxu0 0.0
    %427 = vmatpush1.msra.mxu0 %v379
    %428 = vmatprep.subr.mxu0 0.0
    %429 = vmatpush1.msra.mxu0 %v378
    %430 = vmatprep.subr.mxu0 0.0
    %431 = vmatpush1.msra.mxu0 %v377
    %432 = vmatprep.subr.mxu0 0.0
    %433 = vmatpush2.msra.mxu0 0.0
    %434 = vmatprep.subr.mxu0 0.0
    %435 = vmatpush2.msra.mxu0 0.0
    %436 = vmatprep.subr.mxu0 0.0
    %437 = vmatpush2.msra.mxu0 0.0
    %438 = vmatprep.subr.mxu0 0.0
    %439 = vmatpush2.msra.mxu0 0.0
    %440 = vmatprep.subr.mxu0 0.0
    %441 = vmatpush2.msra.mxu0 0.0
    %442 = vmatprep.subr.mxu0 0.0
    %443 = vmatpush2.msra.mxu0 0.0
    %444 = vmatprep.subr.mxu0 0.0
    %445 = vmatpush2.msra.mxu0 0.0
    %446 = vmatprep.subr.mxu0 0.0
    %447 = vmatpush2.msra.mxu0 0.0
    %448 = vmatprep.subr.mxu0 0.0
    %449 = vmatpush2.msra.mxu0 0.0
    %450 = vmatprep.subr.mxu0 0.0
    %451 = vmatpush2.msra.mxu0 0.0
    %452 = vmatprep.subr.mxu0 0.0
    %453 = vmatpush2.msra.mxu0 0.0
    %454 = vmatprep.subr.mxu0 0.0
    %455 = vmatpush2.msra.mxu0 0.0
    %456 = vmatprep.subr.mxu0 0.0
    %457 = vmatpush2.msra.mxu0 0.0
    %458 = vmatprep.subr.mxu0 0.0
    %459 = vmatpush2.msra.mxu0 0.0
    %460 = vmatprep.subr.mxu0 0.0
    %461 = vmatpush2.msra.mxu0 0.0
    %462 = vmatprep.subr.mxu0 0.0
    %463 = vmatpush2.msra.mxu0 0.0
    %464 = vmatprep.mubr.f32.mxu0 0.0
    %465 = vmatmul.mubr.f32.gmra.mxu0 %v374
    %v466 = vpop.f32.mrf.mxu0
    %v467 = vadd.f32 %v398, %v466
    %v468 = vpop.f32.mrf.mxu0
    %469 = vdwg.mxu0
    %v470 = vld [vmem:[#allocation19] sm:$0xff]
    %v471 = vld [vmem:[#allocation19 + $0x8] sm:$0xff]
    %v472 = vld [vmem:[#allocation19 + $0x10] sm:$0xff]
    %v473 = vld [vmem:[#allocation19 + $0x18] sm:$0xff]
    %v474 = vld [vmem:[#allocation19 + $0x20] sm:$0xff]
    %v475 = vld [vmem:[#allocation19 + $0x28] sm:$0xff]
    %v476 = vld [vmem:[#allocation19 + $0x30] sm:$0xff]
    %v477 = vld [vmem:[#allocation19 + $0x38] sm:$0xff]
    %v478 = vld [vmem:[#allocation19 + $0x40] sm:$0xff]
    %v479 = vld [vmem:[#allocation19 + $0x48] sm:$0xff]
    %v480 = vld [vmem:[#allocation19 + $0x50] sm:$0xff]
    %v481 = vld [vmem:[#allocation19 + $0x58] sm:$0xff]
    %v482 = vld [vmem:[#allocation19 + $0x60] sm:$0xff]
    %v483 = vld [vmem:[#allocation19 + $0x68] sm:$0xff]
    %v484 = vld [vmem:[#allocation19 + $0x70] sm:$0xff]
    %v485 = vld [vmem:[#allocation19 + $0x78] sm:$0xff]
    %486 = vmatprep.subr.mxu0 0.0
    %487 = vmatpush1.msra.mxu0 %v485
    %488 = vmatprep.subr.mxu0 0.0
    %489 = vmatpush1.msra.mxu0 %v484
    %490 = vmatprep.subr.mxu0 0.0
    %491 = vmatpush1.msra.mxu0 %v483
    %492 = vmatprep.subr.mxu0 0.0
    %493 = vmatpush1.msra.mxu0 %v482
    %494 = vmatprep.subr.mxu0 0.0
    %495 = vmatpush1.msra.mxu0 %v481
    %496 = vmatprep.subr.mxu0 0.0
    %497 = vmatpush1.msra.mxu0 %v480
    %498 = vmatprep.subr.mxu0 0.0
    %499 = vmatpush1.msra.mxu0 %v479
    %500 = vmatprep.subr.mxu0 0.0
    %501 = vmatpush1.msra.mxu0 %v478
    %502 = vmatprep.subr.mxu0 0.0
    %503 = vmatpush1.msra.mxu0 %v477
    %504 = vmatprep.subr.mxu0 0.0
    %505 = vmatpush1.msra.mxu0 %v476
    %506 = vmatprep.subr.mxu0 0.0
    %507 = vmatpush1.msra.mxu0 %v475
    %508 = vmatprep.subr.mxu0 0.0
    %509 = vmatpush1.msra.mxu0 %v474
    %510 = vmatprep.subr.mxu0 0.0
    %511 = vmatpush1.msra.mxu0 %v473
    %512 = vmatprep.subr.mxu0 0.0
    %513 = vmatpush1.msra.mxu0 %v472
    %514 = vmatprep.subr.mxu0 0.0
    %515 = vmatpush1.msra.mxu0 %v471
    %516 = vmatprep.subr.mxu0 0.0
    %517 = vmatpush1.msra.mxu0 %v470
    %518 = vmatprep.subr.mxu0 0.0
    %519 = vmatpush2.msra.mxu0 0.0
    %520 = vmatprep.subr.mxu0 0.0
    %521 = vmatpush2.msra.mxu0 0.0
    %522 = vmatprep.subr.mxu0 0.0
    %523 = vmatpush2.msra.mxu0 0.0
    %524 = vmatprep.subr.mxu0 0.0
    %525 = vmatpush2.msra.mxu0 0.0
    %526 = vmatprep.subr.mxu0 0.0
    %527 = vmatpush2.msra.mxu0 0.0
    %528 = vmatprep.subr.mxu0 0.0
    %529 = vmatpush2.msra.mxu0 0.0
    %530 = vmatprep.subr.mxu0 0.0
    %531 = vmatpush2.msra.mxu0 0.0
    %532 = vmatprep.subr.mxu0 0.0
    %533 = vmatpush2.msra.mxu0 0.0
    %534 = vmatprep.subr.mxu0 0.0
    %535 = vmatpush2.msra.mxu0 0.0
    %536 = vmatprep.subr.mxu0 0.0
    %537 = vmatpush2.msra.mxu0 0.0
    %538 = vmatprep.subr.mxu0 0.0
    %539 = vmatpush2.msra.mxu0 0.0
    %540 = vmatprep.subr.mxu0 0.0
    %541 = vmatpush2.msra.mxu0 0.0
    %542 = vmatprep.subr.mxu0 0.0
    %543 = vmatpush2.msra.mxu0 0.0
    %544 = vmatprep.subr.mxu0 0.0
    %545 = vmatpush2.msra.mxu0 0.0
    %546 = vmatprep.subr.mxu0 0.0
    %547 = vmatpush2.msra.mxu0 0.0
    %548 = vmatprep.subr.mxu0 0.0
    %549 = vmatpush2.msra.mxu0 0.0
    %550 = vmatprep.mubr.f32.mxu0 0.0
    %551 = vmatmul.mubr.f32.gmra.mxu0 %v292
    %v552 = vpop.f32.mrf.mxu0
    %v553 = vadd.f32 0.0, %v552
    %v554 = vpop.f32.mrf.mxu0
    %555 = vdwg.mxu0
    %v556 = vadd.f32 %v467, %v553
    %vm557 = vcmask 64512
    %v559 = vsel %vm557, %v296, 0
    %v562 = vsel %vm557, %v297, 0
    %564 = vmatprep.subr.mxu0 0.0
    %565 = vmatpush1.msra.mxu0 0.0
    %566 = vmatprep.subr.mxu0 0.0
    %567 = vmatpush1.msra.mxu0 0.0
    %568 = vmatprep.subr.mxu0 0.0
    %569 = vmatpush1.msra.mxu0 0.0
    %570 = vmatprep.subr.mxu0 0.0
    %571 = vmatpush1.msra.mxu0 0.0
    %572 = vmatprep.subr.mxu0 0.0
    %573 = vmatpush1.msra.mxu0 0.0
    %574 = vmatprep.subr.mxu0 0.0
    %575 = vmatpush1.msra.mxu0 0.0
    %576 = vmatprep.subr.mxu0 0.0
    %577 = vmatpush1.msra.mxu0 0.0
    %578 = vmatprep.subr.mxu0 0.0
    %579 = vmatpush1.msra.mxu0 0.0
    %580 = vmatprep.subr.mxu0 0.0
    %581 = vmatpush1.msra.mxu0 0.0
    %582 = vmatprep.subr.mxu0 0.0
    %583 = vmatpush1.msra.mxu0 0.0
    %584 = vmatprep.subr.mxu0 0.0
    %585 = vmatpush1.msra.mxu0 0.0
    %586 = vmatprep.subr.mxu0 0.0
    %587 = vmatpush1.msra.mxu0 0.0
    %588 = vmatprep.subr.mxu0 0.0
    %589 = vmatpush1.msra.mxu0 0.0
    %590 = vmatprep.subr.mxu0 0.0
    %591 = vmatpush1.msra.mxu0 0.0
    %592 = vmatprep.subr.mxu0 0.0
    %593 = vmatpush1.msra.mxu0 0.0
    %594 = vmatprep.subr.mxu0 0.0
    %595 = vmatpush1.msra.mxu0 %v292
    %596 = vmatprep.subr.mxu0 0.0
    %597 = vmatpush2.msra.mxu0 0.0
    %598 = vmatprep.subr.mxu0 0.0
    %599 = vmatpush2.msra.mxu0 0.0
    %600 = vmatprep.subr.mxu0 0.0
    %601 = vmatpush2.msra.mxu0 0.0
    %602 = vmatprep.subr.mxu0 0.0
    %603 = vmatpush2.msra.mxu0 0.0
    %604 = vmatprep.subr.mxu0 0.0
    %605 = vmatpush2.msra.mxu0 0.0
    %606 = vmatprep.subr.mxu0 0.0
    %607 = vmatpush2.msra.mxu0 0.0
    %608 = vmatprep.subr.mxu0 0.0
    %609 = vmatpush2.msra.mxu0 0.0
    %610 = vmatprep.subr.mxu0 0.0
    %611 = vmatpush2.msra.mxu0 0.0
    %612 = vmatprep.subr.mxu0 0.0
    %613 = vmatpush2.msra.mxu0 0.0
    %614 = vmatprep.subr.mxu0 0.0
    %615 = vmatpush2.msra.mxu0 0.0
    %616 = vmatprep.subr.mxu0 0.0
    %617 = vmatpush2.msra.mxu0 0.0
    %618 = vmatprep.subr.mxu0 0.0
    %619 = vmatpush2.msra.mxu0 0.0
    %620 = vmatprep.subr.mxu0 0.0
    %621 = vmatpush2.msra.mxu0 0.0
    %622 = vmatprep.subr.mxu0 0.0
    %623 = vmatpush2.msra.mxu0 0.0
    %624 = vmatprep.subr.mxu0 0.0
    %625 = vmatpush2.msra.mxu0 0.0
    %626 = vmatprep.subr.mxu0 0.0
    %627 = vmatpush2.msra.mxu0 0.0
    %628 = vmatprep.mubr.f32.mxu0 0.0
    %629 = vmatmul.mubr.f32.gmra.mxu0 %v559
    %v630 = vpop.f32.mrf.mxu0
    %v631 = vadd.f32 0.0, %v630
    %v632 = vpop.f32.mrf.mxu0
    %633 = vmatprep.mubr.f32.mxu0 0.0
    %634 = vmatmul.mubr.f32.gmra.mxu0 %v562
    %v635 = vpop.f32.mrf.mxu0
    %v636 = vadd.f32 0.0, %v635
    %v637 = vpop.f32.mrf.mxu0
    %638 = vdwg.mxu0
    %s639 = scalar_lea.vmem [#allocation16], 128
    %v640 = vld [vmem:[%s639] sm:$0xff]
    %v641 = vld [vmem:[%s639 + $0x8] sm:$0xff]
    %v642 = vld [vmem:[%s639 + $0x10] sm:$0xff]
    %v643 = vld [vmem:[%s639 + $0x18] sm:$0xff]
    %v644 = vld [vmem:[%s639 + $0x20] sm:$0xff]
    %v645 = vld [vmem:[%s639 + $0x28] sm:$0xff]
    %v646 = vld [vmem:[%s639 + $0x30] sm:$0xff]
    %v647 = vld [vmem:[%s639 + $0x38] sm:$0xff]
    %v648 = vld [vmem:[%s639 + $0x40] sm:$0xff]
    %v649 = vld [vmem:[%s639 + $0x48] sm:$0xff]
    %v650 = vld [vmem:[%s639 + $0x50] sm:$0xff]
    %v651 = vld [vmem:[%s639 + $0x58] sm:$0xff]
    %v652 = vld [vmem:[%s639 + $0x60] sm:$0xff]
    %v653 = vld [vmem:[%s639 + $0x68] sm:$0xff]
    %v654 = vld [vmem:[%s639 + $0x70] sm:$0xff]
    %v655 = vld [vmem:[%s639 + $0x78] sm:$0xff]
    %s656 = scalar_lea.vmem [#allocation17], 1
    %v657 = vld [vmem:[%s656] sm:$0x1]
    %v659 = vlaneseq
    %v660 = vshrl.u32 %v659, 7
    %v661 = vsub.s32 0, %v660
    %v662 = vrot.slane %v657, %v661
    %664 = vmatprep.subr.mxu0 0.0
    %665 = vmatpush1.msra.mxu0 %v655
    %666 = vmatprep.subr.mxu0 0.0
    %667 = vmatpush1.msra.mxu0 %v654
    %668 = vmatprep.subr.mxu0 0.0
    %669 = vmatpush1.msra.mxu0 %v653
    %670 = vmatprep.subr.mxu0 0.0
    %671 = vmatpush1.msra.mxu0 %v652
    %672 = vmatprep.subr.mxu0 0.0
    %673 = vmatpush1.msra.mxu0 %v651
    %674 = vmatprep.subr.mxu0 0.0
    %675 = vmatpush1.msra.mxu0 %v650
    %676 = vmatprep.subr.mxu0 0.0
    %677 = vmatpush1.msra.mxu0 %v649
    %678 = vmatprep.subr.mxu0 0.0
    %679 = vmatpush1.msra.mxu0 %v648
    %680 = vmatprep.subr.mxu0 0.0
    %681 = vmatpush1.msra.mxu0 %v647
    %682 = vmatprep.subr.mxu0 0.0
    %683 = vmatpush1.msra.mxu0 %v646
    %684 = vmatprep.subr.mxu0 0.0
    %685 = vmatpush1.msra.mxu0 %v645
    %686 = vmatprep.subr.mxu0 0.0
    %687 = vmatpush1.msra.mxu0 %v644
    %688 = vmatprep.subr.mxu0 0.0
    %689 = vmatpush1.msra.mxu0 %v643
    %690 = vmatprep.subr.mxu0 0.0
    %691 = vmatpush1.msra.mxu0 %v642
    %692 = vmatprep.subr.mxu0 0.0
    %693 = vmatpush1.msra.mxu0 %v641
    %694 = vmatprep.subr.mxu0 0.0
    %695 = vmatpush1.msra.mxu0 %v640
    %696 = vmatprep.subr.mxu0 0.0
    %697 = vmatpush2.msra.mxu0 0.0
    %698 = vmatprep.subr.mxu0 0.0
    %699 = vmatpush2.msra.mxu0 0.0
    %700 = vmatprep.subr.mxu0 0.0
    %701 = vmatpush2.msra.mxu0 0.0
    %702 = vmatprep.subr.mxu0 0.0
    %703 = vmatpush2.msra.mxu0 0.0
    %704 = vmatprep.subr.mxu0 0.0
    %705 = vmatpush2.msra.mxu0 0.0
    %706 = vmatprep.subr.mxu0 0.0
    %707 = vmatpush2.msra.mxu0 0.0
    %708 = vmatprep.subr.mxu0 0.0
    %709 = vmatpush2.msra.mxu0 0.0
    %710 = vmatprep.subr.mxu0 0.0
    %711 = vmatpush2.msra.mxu0 0.0
    %712 = vmatprep.subr.mxu0 0.0
    %713 = vmatpush2.msra.mxu0 0.0
    %714 = vmatprep.subr.mxu0 0.0
    %715 = vmatpush2.msra.mxu0 0.0
    %716 = vmatprep.subr.mxu0 0.0
    %717 = vmatpush2.msra.mxu0 0.0
    %718 = vmatprep.subr.mxu0 0.0
    %719 = vmatpush2.msra.mxu0 0.0
    %720 = vmatprep.subr.mxu0 0.0
    %721 = vmatpush2.msra.mxu0 0.0
    %722 = vmatprep.subr.mxu0 0.0
    %723 = vmatpush2.msra.mxu0 0.0
    %724 = vmatprep.subr.mxu0 0.0
    %725 = vmatpush2.msra.mxu0 0.0
    %726 = vmatprep.subr.mxu0 0.0
    %727 = vmatpush2.msra.mxu0 0.0
    %728 = vmatprep.mubr.f32.mxu0 0.0
    %729 = vmatmul.mubr.f32.gmra.mxu0 %v631
    %v730 = vpop.f32.mrf.mxu0
    %v731 = vadd.f32 %v662, %v730
    %v732 = vpop.f32.mrf.mxu0
    %733 = vmatprep.mubr.f32.mxu0 0.0
    %734 = vmatmul.mubr.f32.gmra.mxu0 %v636
    %v735 = vpop.f32.mrf.mxu0
    %v736 = vadd.f32 %v662, %v735
    %v737 = vpop.f32.mrf.mxu0
    %738 = vdwg.mxu0
    %s739 = scalar_lea.vmem [#allocation19], 128
    %v740 = vld [vmem:[%s739] sm:$0xff]
    %v741 = vld [vmem:[%s739 + $0x8] sm:$0xff]
    %v742 = vld [vmem:[%s739 + $0x10] sm:$0xff]
    %v743 = vld [vmem:[%s739 + $0x18] sm:$0xff]
    %v744 = vld [vmem:[%s739 + $0x20] sm:$0xff]
    %v745 = vld [vmem:[%s739 + $0x28] sm:$0xff]
    %v746 = vld [vmem:[%s739 + $0x30] sm:$0xff]
    %v747 = vld [vmem:[%s739 + $0x38] sm:$0xff]
    %v748 = vld [vmem:[%s739 + $0x40] sm:$0xff]
    %v749 = vld [vmem:[%s739 + $0x48] sm:$0xff]
    %v750 = vld [vmem:[%s739 + $0x50] sm:$0xff]
    %v751 = vld [vmem:[%s739 + $0x58] sm:$0xff]
    %v752 = vld [vmem:[%s739 + $0x60] sm:$0xff]
    %v753 = vld [vmem:[%s739 + $0x68] sm:$0xff]
    %v754 = vld [vmem:[%s739 + $0x70] sm:$0xff]
    %v755 = vld [vmem:[%s739 + $0x78] sm:$0xff]
    %756 = vmatprep.subr.mxu0 0.0
    %757 = vmatpush1.msra.mxu0 %v755
    %758 = vmatprep.subr.mxu0 0.0
    %759 = vmatpush1.msra.mxu0 %v754
    %760 = vmatprep.subr.mxu0 0.0
    %761 = vmatpush1.msra.mxu0 %v753
    %762 = vmatprep.subr.mxu0 0.0
    %763 = vmatpush1.msra.mxu0 %v752
    %764 = vmatprep.subr.mxu0 0.0
    %765 = vmatpush1.msra.mxu0 %v751
    %766 = vmatprep.subr.mxu0 0.0
    %767 = vmatpush1.msra.mxu0 %v750
    %768 = vmatprep.subr.mxu0 0.0
    %769 = vmatpush1.msra.mxu0 %v749
    %770 = vmatprep.subr.mxu0 0.0
    %771 = vmatpush1.msra.mxu0 %v748
    %772 = vmatprep.subr.mxu0 0.0
    %773 = vmatpush1.msra.mxu0 %v747
    %774 = vmatprep.subr.mxu0 0.0
    %775 = vmatpush1.msra.mxu0 %v746
    %776 = vmatprep.subr.mxu0 0.0
    %777 = vmatpush1.msra.mxu0 %v745
    %778 = vmatprep.subr.mxu0 0.0
    %779 = vmatpush1.msra.mxu0 %v744
    %780 = vmatprep.subr.mxu0 0.0
    %781 = vmatpush1.msra.mxu0 %v743
    %782 = vmatprep.subr.mxu0 0.0
    %783 = vmatpush1.msra.mxu0 %v742
    %784 = vmatprep.subr.mxu0 0.0
    %785 = vmatpush1.msra.mxu0 %v741
    %786 = vmatprep.subr.mxu0 0.0
    %787 = vmatpush1.msra.mxu0 %v740
    %788 = vmatprep.subr.mxu0 0.0
    %789 = vmatpush2.msra.mxu0 0.0
    %790 = vmatprep.subr.mxu0 0.0
    %791 = vmatpush2.msra.mxu0 0.0
    %792 = vmatprep.subr.mxu0 0.0
    %793 = vmatpush2.msra.mxu0 0.0
    %794 = vmatprep.subr.mxu0 0.0
    %795 = vmatpush2.msra.mxu0 0.0
    %796 = vmatprep.subr.mxu0 0.0
    %797 = vmatpush2.msra.mxu0 0.0
    %798 = vmatprep.subr.mxu0 0.0
    %799 = vmatpush2.msra.mxu0 0.0
    %800 = vmatprep.subr.mxu0 0.0
    %801 = vmatpush2.msra.mxu0 0.0
    %802 = vmatprep.subr.mxu0 0.0
    %803 = vmatpush2.msra.mxu0 0.0
    %804 = vmatprep.subr.mxu0 0.0
    %805 = vmatpush2.msra.mxu0 0.0
    %806 = vmatprep.subr.mxu0 0.0
    %807 = vmatpush2.msra.mxu0 0.0
    %808 = vmatprep.subr.mxu0 0.0
    %809 = vmatpush2.msra.mxu0 0.0
    %810 = vmatprep.subr.mxu0 0.0
    %811 = vmatpush2.msra.mxu0 0.0
    %812 = vmatprep.subr.mxu0 0.0
    %813 = vmatpush2.msra.mxu0 0.0
    %814 = vmatprep.subr.mxu0 0.0
    %815 = vmatpush2.msra.mxu0 0.0
    %816 = vmatprep.subr.mxu0 0.0
    %817 = vmatpush2.msra.mxu0 0.0
    %818 = vmatprep.subr.mxu0 0.0
    %819 = vmatpush2.msra.mxu0 0.0
    %820 = vmatprep.mubr.f32.mxu0 0.0
    %821 = vmatmul.mubr.f32.gmra.mxu0 %v290
    %v822 = vpop.f32.mrf.mxu0
    %v823 = vadd.f32 0.0, %v822
    %v824 = vpop.f32.mrf.mxu0
    %825 = vmatprep.mubr.f32.mxu0 0.0
    %826 = vmatmul.mubr.f32.gmra.mxu0 %v291
    %v827 = vpop.f32.mrf.mxu0
    %v828 = vadd.f32 0.0, %v827
    %v829 = vpop.f32.mrf.mxu0
    %830 = vdwg.mxu0
    %v831 = vadd.f32 %v731, %v823
    %v832 = vadd.f32 %v736, %v828
    %v834 = vsel %vm557, %v298, 0
    %836 = vmatprep.subr.mxu0 0.0
    %837 = vmatpush1.msra.mxu0 0.0
    %838 = vmatprep.subr.mxu0 0.0
    %839 = vmatpush1.msra.mxu0 0.0
    %840 = vmatprep.subr.mxu0 0.0
    %841 = vmatpush1.msra.mxu0 0.0
    %842 = vmatprep.subr.mxu0 0.0
    %843 = vmatpush1.msra.mxu0 0.0
    %844 = vmatprep.subr.mxu0 0.0
    %845 = vmatpush1.msra.mxu0 0.0
    %846 = vmatprep.subr.mxu0 0.0
    %847 = vmatpush1.msra.mxu0 0.0
    %848 = vmatprep.subr.mxu0 0.0
    %849 = vmatpush1.msra.mxu0 0.0
    %850 = vmatprep.subr.mxu0 0.0
    %851 = vmatpush1.msra.mxu0 0.0
    %852 = vmatprep.subr.mxu0 0.0
    %853 = vmatpush1.msra.mxu0 0.0
    %854 = vmatprep.subr.mxu0 0.0
    %855 = vmatpush1.msra.mxu0 0.0
    %856 = vmatprep.subr.mxu0 0.0
    %857 = vmatpush1.msra.mxu0 0.0
    %858 = vmatprep.subr.mxu0 0.0
    %859 = vmatpush1.msra.mxu0 0.0
    %860 = vmatprep.subr.mxu0 0.0
    %861 = vmatpush1.msra.mxu0 0.0
    %862 = vmatprep.subr.mxu0 0.0
    %863 = vmatpush1.msra.mxu0 0.0
    %864 = vmatprep.subr.mxu0 0.0
    %865 = vmatpush1.msra.mxu0 0.0
    %866 = vmatprep.subr.mxu0 0.0
    %867 = vmatpush1.msra.mxu0 %v293
    %868 = vmatprep.subr.mxu0 0.0
    %869 = vmatpush2.msra.mxu0 0.0
    %870 = vmatprep.subr.mxu0 0.0
    %871 = vmatpush2.msra.mxu0 0.0
    %872 = vmatprep.subr.mxu0 0.0
    %873 = vmatpush2.msra.mxu0 0.0
    %874 = vmatprep.subr.mxu0 0.0
    %875 = vmatpush2.msra.mxu0 0.0
    %876 = vmatprep.subr.mxu0 0.0
    %877 = vmatpush2.msra.mxu0 0.0
    %878 = vmatprep.subr.mxu0 0.0
    %879 = vmatpush2.msra.mxu0 0.0
    %880 = vmatprep.subr.mxu0 0.0
    %881 = vmatpush2.msra.mxu0 0.0
    %882 = vmatprep.subr.mxu0 0.0
    %883 = vmatpush2.msra.mxu0 0.0
    %884 = vmatprep.subr.mxu0 0.0
    %885 = vmatpush2.msra.mxu0 0.0
    %886 = vmatprep.subr.mxu0 0.0
    %887 = vmatpush2.msra.mxu0 0.0
    %888 = vmatprep.subr.mxu0 0.0
    %889 = vmatpush2.msra.mxu0 0.0
    %890 = vmatprep.subr.mxu0 0.0
    %891 = vmatpush2.msra.mxu0 0.0
    %892 = vmatprep.subr.mxu0 0.0
    %893 = vmatpush2.msra.mxu0 0.0
    %894 = vmatprep.subr.mxu0 0.0
    %895 = vmatpush2.msra.mxu0 0.0
    %896 = vmatprep.subr.mxu0 0.0
    %897 = vmatpush2.msra.mxu0 0.0
    %898 = vmatprep.subr.mxu0 0.0
    %899 = vmatpush2.msra.mxu0 0.0
    %900 = vmatprep.mubr.f32.mxu0 0.0
    %901 = vmatmul.mubr.f32.gmra.mxu0 %v834
    %v902 = vpop.f32.mrf.mxu0
    %v903 = vadd.f32 0.0, %v902
    %v904 = vpop.f32.mrf.mxu0
    %905 = vdwg.mxu0
    %s906 = scalar_lea.vmem [#allocation16], 256
    %v907 = vld [vmem:[%s906] sm:$0xff]
    %v908 = vld [vmem:[%s906 + $0x8] sm:$0xff]
    %v909 = vld [vmem:[%s906 + $0x10] sm:$0xff]
    %v910 = vld [vmem:[%s906 + $0x18] sm:$0xff]
    %v911 = vld [vmem:[%s906 + $0x20] sm:$0xff]
    %v912 = vld [vmem:[%s906 + $0x28] sm:$0xff]
    %v913 = vld [vmem:[%s906 + $0x30] sm:$0xff]
    %v914 = vld [vmem:[%s906 + $0x38] sm:$0xff]
    %v915 = vld [vmem:[%s906 + $0x40] sm:$0xff]
    %v916 = vld [vmem:[%s906 + $0x48] sm:$0xff]
    %v917 = vld [vmem:[%s906 + $0x50] sm:$0xff]
    %v918 = vld [vmem:[%s906 + $0x58] sm:$0xff]
    %v919 = vld [vmem:[%s906 + $0x60] sm:$0xff]
    %v920 = vld [vmem:[%s906 + $0x68] sm:$0xff]
    %v921 = vld [vmem:[%s906 + $0x70] sm:$0xff]
    %v922 = vld [vmem:[%s906 + $0x78] sm:$0xff]
    %s923 = scalar_lea.vmem [#allocation17], 2
    %v924 = vld [vmem:[%s923] sm:$0x1]
    %v926 = vlaneseq
    %v927 = vshrl.u32 %v926, 7
    %v928 = vsub.s32 0, %v927
    %v929 = vrot.slane %v924, %v928
    %931 = vmatprep.subr.mxu0 0.0
    %932 = vmatpush1.msra.mxu0 %v922
    %933 = vmatprep.subr.mxu0 0.0
    %934 = vmatpush1.msra.mxu0 %v921
    %935 = vmatprep.subr.mxu0 0.0
    %936 = vmatpush1.msra.mxu0 %v920
    %937 = vmatprep.subr.mxu0 0.0
    %938 = vmatpush1.msra.mxu0 %v919
    %939 = vmatprep.subr.mxu0 0.0
    %940 = vmatpush1.msra.mxu0 %v918
    %941 = vmatprep.subr.mxu0 0.0
    %942 = vmatpush1.msra.mxu0 %v917
    %943 = vmatprep.subr.mxu0 0.0
    %944 = vmatpush1.msra.mxu0 %v916
    %945 = vmatprep.subr.mxu0 0.0
    %946 = vmatpush1.msra.mxu0 %v915
    %947 = vmatprep.subr.mxu0 0.0
    %948 = vmatpush1.msra.mxu0 %v914
    %949 = vmatprep.subr.mxu0 0.0
    %950 = vmatpush1.msra.mxu0 %v913
    %951 = vmatprep.subr.mxu0 0.0
    %952 = vmatpush1.msra.mxu0 %v912
    %953 = vmatprep.subr.mxu0 0.0
    %954 = vmatpush1.msra.mxu0 %v911
    %955 = vmatprep.subr.mxu0 0.0
    %956 = vmatpush1.msra.mxu0 %v910
    %957 = vmatprep.subr.mxu0 0.0
    %958 = vmatpush1.msra.mxu0 %v909
    %959 = vmatprep.subr.mxu0 0.0
    %960 = vmatpush1.msra.mxu0 %v908
    %961 = vmatprep.subr.mxu0 0.0
    %962 = vmatpush1.msra.mxu0 %v907
    %963 = vmatprep.subr.mxu0 0.0
    %964 = vmatpush2.msra.mxu0 0.0
    %965 = vmatprep.subr.mxu0 0.0
    %966 = vmatpush2.msra.mxu0 0.0
    %967 = vmatprep.subr.mxu0 0.0
    %968 = vmatpush2.msra.mxu0 0.0
    %969 = vmatprep.subr.mxu0 0.0
    %970 = vmatpush2.msra.mxu0 0.0
    %971 = vmatprep.subr.mxu0 0.0
    %972 = vmatpush2.msra.mxu0 0.0
    %973 = vmatprep.subr.mxu0 0.0
    %974 = vmatpush2.msra.mxu0 0.0
    %975 = vmatprep.subr.mxu0 0.0
    %976 = vmatpush2.msra.mxu0 0.0
    %977 = vmatprep.subr.mxu0 0.0
    %978 = vmatpush2.msra.mxu0 0.0
    %979 = vmatprep.subr.mxu0 0.0
    %980 = vmatpush2.msra.mxu0 0.0
    %981 = vmatprep.subr.mxu0 0.0
    %982 = vmatpush2.msra.mxu0 0.0
    %983 = vmatprep.subr.mxu0 0.0
    %984 = vmatpush2.msra.mxu0 0.0
    %985 = vmatprep.subr.mxu0 0.0
    %986 = vmatpush2.msra.mxu0 0.0
    %987 = vmatprep.subr.mxu0 0.0
    %988 = vmatpush2.msra.mxu0 0.0
    %989 = vmatprep.subr.mxu0 0.0
    %990 = vmatpush2.msra.mxu0 0.0
    %991 = vmatprep.subr.mxu0 0.0
    %992 = vmatpush2.msra.mxu0 0.0
    %993 = vmatprep.subr.mxu0 0.0
    %994 = vmatpush2.msra.mxu0 0.0
    %995 = vmatprep.mubr.f32.mxu0 0.0
    %996 = vmatmul.mubr.f32.gmra.mxu0 %v903
    %v997 = vpop.f32.mrf.mxu0
    %v998 = vadd.f32 %v929, %v997
    %v999 = vpop.f32.mrf.mxu0
    %1000 = vdwg.mxu0
    %s1001 = scalar_lea.vmem [#allocation19], 256
    %v1002 = vld [vmem:[%s1001] sm:$0xff]
    %v1003 = vld [vmem:[%s1001 + $0x8] sm:$0xff]
    %v1004 = vld [vmem:[%s1001 + $0x10] sm:$0xff]
    %v1005 = vld [vmem:[%s1001 + $0x18] sm:$0xff]
    %v1006 = vld [vmem:[%s1001 + $0x20] sm:$0xff]
    %v1007 = vld [vmem:[%s1001 + $0x28] sm:$0xff]
    %v1008 = vld [vmem:[%s1001 + $0x30] sm:$0xff]
    %v1009 = vld [vmem:[%s1001 + $0x38] sm:$0xff]
    %v1010 = vld [vmem:[%s1001 + $0x40] sm:$0xff]
    %v1011 = vld [vmem:[%s1001 + $0x48] sm:$0xff]
    %v1012 = vld [vmem:[%s1001 + $0x50] sm:$0xff]
    %v1013 = vld [vmem:[%s1001 + $0x58] sm:$0xff]
    %v1014 = vld [vmem:[%s1001 + $0x60] sm:$0xff]
    %v1015 = vld [vmem:[%s1001 + $0x68] sm:$0xff]
    %v1016 = vld [vmem:[%s1001 + $0x70] sm:$0xff]
    %v1017 = vld [vmem:[%s1001 + $0x78] sm:$0xff]
    %1018 = vmatprep.subr.mxu0 0.0
    %1019 = vmatpush1.msra.mxu0 %v1017
    %1020 = vmatprep.subr.mxu0 0.0
    %1021 = vmatpush1.msra.mxu0 %v1016
    %1022 = vmatprep.subr.mxu0 0.0
    %1023 = vmatpush1.msra.mxu0 %v1015
    %1024 = vmatprep.subr.mxu0 0.0
    %1025 = vmatpush1.msra.mxu0 %v1014
    %1026 = vmatprep.subr.mxu0 0.0
    %1027 = vmatpush1.msra.mxu0 %v1013
    %1028 = vmatprep.subr.mxu0 0.0
    %1029 = vmatpush1.msra.mxu0 %v1012
    %1030 = vmatprep.subr.mxu0 0.0
    %1031 = vmatpush1.msra.mxu0 %v1011
    %1032 = vmatprep.subr.mxu0 0.0
    %1033 = vmatpush1.msra.mxu0 %v1010
    %1034 = vmatprep.subr.mxu0 0.0
    %1035 = vmatpush1.msra.mxu0 %v1009
    %1036 = vmatprep.subr.mxu0 0.0
    %1037 = vmatpush1.msra.mxu0 %v1008
    %1038 = vmatprep.subr.mxu0 0.0
    %1039 = vmatpush1.msra.mxu0 %v1007
    %1040 = vmatprep.subr.mxu0 0.0
    %1041 = vmatpush1.msra.mxu0 %v1006
    %1042 = vmatprep.subr.mxu0 0.0
    %1043 = vmatpush1.msra.mxu0 %v1005
    %1044 = vmatprep.subr.mxu0 0.0
    %1045 = vmatpush1.msra.mxu0 %v1004
    %1046 = vmatprep.subr.mxu0 0.0
    %1047 = vmatpush1.msra.mxu0 %v1003
    %1048 = vmatprep.subr.mxu0 0.0
    %1049 = vmatpush1.msra.mxu0 %v1002
    %1050 = vmatprep.subr.mxu0 0.0
    %1051 = vmatpush2.msra.mxu0 0.0
    %1052 = vmatprep.subr.mxu0 0.0
    %1053 = vmatpush2.msra.mxu0 0.0
    %1054 = vmatprep.subr.mxu0 0.0
    %1055 = vmatpush2.msra.mxu0 0.0
    %1056 = vmatprep.subr.mxu0 0.0
    %1057 = vmatpush2.msra.mxu0 0.0
    %1058 = vmatprep.subr.mxu0 0.0
    %1059 = vmatpush2.msra.mxu0 0.0
    %1060 = vmatprep.subr.mxu0 0.0
    %1061 = vmatpush2.msra.mxu0 0.0
    %1062 = vmatprep.subr.mxu0 0.0
    %1063 = vmatpush2.msra.mxu0 0.0
    %1064 = vmatprep.subr.mxu0 0.0
    %1065 = vmatpush2.msra.mxu0 0.0
    %1066 = vmatprep.subr.mxu0 0.0
    %1067 = vmatpush2.msra.mxu0 0.0
    %1068 = vmatprep.subr.mxu0 0.0
    %1069 = vmatpush2.msra.mxu0 0.0
    %1070 = vmatprep.subr.mxu0 0.0
    %1071 = vmatpush2.msra.mxu0 0.0
    %1072 = vmatprep.subr.mxu0 0.0
    %1073 = vmatpush2.msra.mxu0 0.0
    %1074 = vmatprep.subr.mxu0 0.0
    %1075 = vmatpush2.msra.mxu0 0.0
    %1076 = vmatprep.subr.mxu0 0.0
    %1077 = vmatpush2.msra.mxu0 0.0
    %1078 = vmatprep.subr.mxu0 0.0
    %1079 = vmatpush2.msra.mxu0 0.0
    %1080 = vmatprep.subr.mxu0 0.0
    %1081 = vmatpush2.msra.mxu0 0.0
    %1082 = vmatprep.mubr.f32.mxu0 0.0
    %1083 = vmatmul.mubr.f32.gmra.mxu0 %v294
    %v1084 = vpop.f32.mrf.mxu0
    %v1085 = vadd.f32 0.0, %v1084
    %v1086 = vpop.f32.mrf.mxu0
    %1087 = vdwg.mxu0
    %v1088 = vadd.f32 %v998, %v1085
    %v1090 = vsel %vm557, %v299, 0
    %1092 = vmatprep.subr.mxu0 0.0
    %1093 = vmatpush1.msra.mxu0 0.0
    %1094 = vmatprep.subr.mxu0 0.0
    %1095 = vmatpush1.msra.mxu0 0.0
    %1096 = vmatprep.subr.mxu0 0.0
    %1097 = vmatpush1.msra.mxu0 0.0
    %1098 = vmatprep.subr.mxu0 0.0
    %1099 = vmatpush1.msra.mxu0 0.0
    %1100 = vmatprep.subr.mxu0 0.0
    %1101 = vmatpush1.msra.mxu0 0.0
    %1102 = vmatprep.subr.mxu0 0.0
    %1103 = vmatpush1.msra.mxu0 0.0
    %1104 = vmatprep.subr.mxu0 0.0
    %1105 = vmatpush1.msra.mxu0 0.0
    %1106 = vmatprep.subr.mxu0 0.0
    %1107 = vmatpush1.msra.mxu0 0.0
    %1108 = vmatprep.subr.mxu0 0.0
    %1109 = vmatpush1.msra.mxu0 0.0
    %1110 = vmatprep.subr.mxu0 0.0
    %1111 = vmatpush1.msra.mxu0 0.0
    %1112 = vmatprep.subr.mxu0 0.0
    %1113 = vmatpush1.msra.mxu0 0.0
    %1114 = vmatprep.subr.mxu0 0.0
    %1115 = vmatpush1.msra.mxu0 0.0
    %1116 = vmatprep.subr.mxu0 0.0
    %1117 = vmatpush1.msra.mxu0 0.0
    %1118 = vmatprep.subr.mxu0 0.0
    %1119 = vmatpush1.msra.mxu0 0.0
    %1120 = vmatprep.subr.mxu0 0.0
    %1121 = vmatpush1.msra.mxu0 0.0
    %1122 = vmatprep.subr.mxu0 0.0
    %1123 = vmatpush1.msra.mxu0 %v294
    %1124 = vmatprep.subr.mxu0 0.0
    %1125 = vmatpush2.msra.mxu0 0.0
    %1126 = vmatprep.subr.mxu0 0.0
    %1127 = vmatpush2.msra.mxu0 0.0
    %1128 = vmatprep.subr.mxu0 0.0
    %1129 = vmatpush2.msra.mxu0 0.0
    %1130 = vmatprep.subr.mxu0 0.0
    %1131 = vmatpush2.msra.mxu0 0.0
    %1132 = vmatprep.subr.mxu0 0.0
    %1133 = vmatpush2.msra.mxu0 0.0
    %1134 = vmatprep.subr.mxu0 0.0
    %1135 = vmatpush2.msra.mxu0 0.0
    %1136 = vmatprep.subr.mxu0 0.0
    %1137 = vmatpush2.msra.mxu0 0.0
    %1138 = vmatprep.subr.mxu0 0.0
    %1139 = vmatpush2.msra.mxu0 0.0
    %1140 = vmatprep.subr.mxu0 0.0
    %1141 = vmatpush2.msra.mxu0 0.0
    %1142 = vmatprep.subr.mxu0 0.0
    %1143 = vmatpush2.msra.mxu0 0.0
    %1144 = vmatprep.subr.mxu0 0.0
    %1145 = vmatpush2.msra.mxu0 0.0
    %1146 = vmatprep.subr.mxu0 0.0
    %1147 = vmatpush2.msra.mxu0 0.0
    %1148 = vmatprep.subr.mxu0 0.0
    %1149 = vmatpush2.msra.mxu0 0.0
    %1150 = vmatprep.subr.mxu0 0.0
    %1151 = vmatpush2.msra.mxu0 0.0
    %1152 = vmatprep.subr.mxu0 0.0
    %1153 = vmatpush2.msra.mxu0 0.0
    %1154 = vmatprep.subr.mxu0 0.0
    %1155 = vmatpush2.msra.mxu0 0.0
    %1156 = vmatprep.mubr.f32.mxu0 0.0
    %1157 = vmatmul.mubr.f32.gmra.mxu0 %v1090
    %v1158 = vpop.f32.mrf.mxu0
    %v1159 = vadd.f32 0.0, %v1158
    %v1160 = vpop.f32.mrf.mxu0
    %1161 = vdwg.mxu0
    %s1162 = scalar_lea.vmem [#allocation16], 384
    %v1163 = vld [vmem:[%s1162] sm:$0xff]
    %v1164 = vld [vmem:[%s1162 + $0x8] sm:$0xff]
    %v1165 = vld [vmem:[%s1162 + $0x10] sm:$0xff]
    %v1166 = vld [vmem:[%s1162 + $0x18] sm:$0xff]
    %v1167 = vld [vmem:[%s1162 + $0x20] sm:$0xff]
    %v1168 = vld [vmem:[%s1162 + $0x28] sm:$0xff]
    %v1169 = vld [vmem:[%s1162 + $0x30] sm:$0xff]
    %v1170 = vld [vmem:[%s1162 + $0x38] sm:$0xff]
    %v1171 = vld [vmem:[%s1162 + $0x40] sm:$0xff]
    %v1172 = vld [vmem:[%s1162 + $0x48] sm:$0xff]
    %v1173 = vld [vmem:[%s1162 + $0x50] sm:$0xff]
    %v1174 = vld [vmem:[%s1162 + $0x58] sm:$0xff]
    %v1175 = vld [vmem:[%s1162 + $0x60] sm:$0xff]
    %v1176 = vld [vmem:[%s1162 + $0x68] sm:$0xff]
    %v1177 = vld [vmem:[%s1162 + $0x70] sm:$0xff]
    %v1178 = vld [vmem:[%s1162 + $0x78] sm:$0xff]
    %s1179 = scalar_lea.vmem [#allocation17], 3
    %v1180 = vld [vmem:[%s1179] sm:$0x1]
    %v1182 = vlaneseq
    %v1183 = vshrl.u32 %v1182, 7
    %v1184 = vsub.s32 0, %v1183
    %v1185 = vrot.slane %v1180, %v1184
    %1187 = vmatprep.subr.mxu0 0.0
    %1188 = vmatpush1.msra.mxu0 %v1178
    %1189 = vmatprep.subr.mxu0 0.0
    %1190 = vmatpush1.msra.mxu0 %v1177
    %1191 = vmatprep.subr.mxu0 0.0
    %1192 = vmatpush1.msra.mxu0 %v1176
    %1193 = vmatprep.subr.mxu0 0.0
    %1194 = vmatpush1.msra.mxu0 %v1175
    %1195 = vmatprep.subr.mxu0 0.0
    %1196 = vmatpush1.msra.mxu0 %v1174
    %1197 = vmatprep.subr.mxu0 0.0
    %1198 = vmatpush1.msra.mxu0 %v1173
    %1199 = vmatprep.subr.mxu0 0.0
    %1200 = vmatpush1.msra.mxu0 %v1172
    %1201 = vmatprep.subr.mxu0 0.0
    %1202 = vmatpush1.msra.mxu0 %v1171
    %1203 = vmatprep.subr.mxu0 0.0
    %1204 = vmatpush1.msra.mxu0 %v1170
    %1205 = vmatprep.subr.mxu0 0.0
    %1206 = vmatpush1.msra.mxu0 %v1169
    %1207 = vmatprep.subr.mxu0 0.0
    %1208 = vmatpush1.msra.mxu0 %v1168
    %1209 = vmatprep.subr.mxu0 0.0
    %1210 = vmatpush1.msra.mxu0 %v1167
    %1211 = vmatprep.subr.mxu0 0.0
    %1212 = vmatpush1.msra.mxu0 %v1166
    %1213 = vmatprep.subr.mxu0 0.0
    %1214 = vmatpush1.msra.mxu0 %v1165
    %1215 = vmatprep.subr.mxu0 0.0
    %1216 = vmatpush1.msra.mxu0 %v1164
    %1217 = vmatprep.subr.mxu0 0.0
    %1218 = vmatpush1.msra.mxu0 %v1163
    %1219 = vmatprep.subr.mxu0 0.0
    %1220 = vmatpush2.msra.mxu0 0.0
    %1221 = vmatprep.subr.mxu0 0.0
    %1222 = vmatpush2.msra.mxu0 0.0
    %1223 = vmatprep.subr.mxu0 0.0
    %1224 = vmatpush2.msra.mxu0 0.0
    %1225 = vmatprep.subr.mxu0 0.0
    %1226 = vmatpush2.msra.mxu0 0.0
    %1227 = vmatprep.subr.mxu0 0.0
    %1228 = vmatpush2.msra.mxu0 0.0
    %1229 = vmatprep.subr.mxu0 0.0
    %1230 = vmatpush2.msra.mxu0 0.0
    %1231 = vmatprep.subr.mxu0 0.0
    %1232 = vmatpush2.msra.mxu0 0.0
    %1233 = vmatprep.subr.mxu0 0.0
    %1234 = vmatpush2.msra.mxu0 0.0
    %1235 = vmatprep.subr.mxu0 0.0
    %1236 = vmatpush2.msra.mxu0 0.0
    %1237 = vmatprep.subr.mxu0 0.0
    %1238 = vmatpush2.msra.mxu0 0.0
    %1239 = vmatprep.subr.mxu0 0.0
    %1240 = vmatpush2.msra.mxu0 0.0
    %1241 = vmatprep.subr.mxu0 0.0
    %1242 = vmatpush2.msra.mxu0 0.0
    %1243 = vmatprep.subr.mxu0 0.0
    %1244 = vmatpush2.msra.mxu0 0.0
    %1245 = vmatprep.subr.mxu0 0.0
    %1246 = vmatpush2.msra.mxu0 0.0
    %1247 = vmatprep.subr.mxu0 0.0
    %1248 = vmatpush2.msra.mxu0 0.0
    %1249 = vmatprep.subr.mxu0 0.0
    %1250 = vmatpush2.msra.mxu0 0.0
    %1251 = vmatprep.mubr.f32.mxu0 0.0
    %1252 = vmatmul.mubr.f32.gmra.mxu0 %v1159
    %v1253 = vpop.f32.mrf.mxu0
    %v1254 = vadd.f32 %v1185, %v1253
    %v1255 = vpop.f32.mrf.mxu0
    %1256 = vdwg.mxu0
    %s1257 = scalar_lea.vmem [#allocation19], 384
    %v1258 = vld [vmem:[%s1257] sm:$0xff]
    %v1259 = vld [vmem:[%s1257 + $0x8] sm:$0xff]
    %v1260 = vld [vmem:[%s1257 + $0x10] sm:$0xff]
    %v1261 = vld [vmem:[%s1257 + $0x18] sm:$0xff]
    %v1262 = vld [vmem:[%s1257 + $0x20] sm:$0xff]
    %v1263 = vld [vmem:[%s1257 + $0x28] sm:$0xff]
    %v1264 = vld [vmem:[%s1257 + $0x30] sm:$0xff]
    %v1265 = vld [vmem:[%s1257 + $0x38] sm:$0xff]
    %v1266 = vld [vmem:[%s1257 + $0x40] sm:$0xff]
    %v1267 = vld [vmem:[%s1257 + $0x48] sm:$0xff]
    %v1268 = vld [vmem:[%s1257 + $0x50] sm:$0xff]
    %v1269 = vld [vmem:[%s1257 + $0x58] sm:$0xff]
    %v1270 = vld [vmem:[%s1257 + $0x60] sm:$0xff]
    %v1271 = vld [vmem:[%s1257 + $0x68] sm:$0xff]
    %v1272 = vld [vmem:[%s1257 + $0x70] sm:$0xff]
    %v1273 = vld [vmem:[%s1257 + $0x78] sm:$0xff]
    %1274 = vmatprep.subr.mxu0 0.0
    %1275 = vmatpush1.msra.mxu0 %v1273
    %1276 = vmatprep.subr.mxu0 0.0
    %1277 = vmatpush1.msra.mxu0 %v1272
    %1278 = vmatprep.subr.mxu0 0.0
    %1279 = vmatpush1.msra.mxu0 %v1271
    %1280 = vmatprep.subr.mxu0 0.0
    %1281 = vmatpush1.msra.mxu0 %v1270
    %1282 = vmatprep.subr.mxu0 0.0
    %1283 = vmatpush1.msra.mxu0 %v1269
    %1284 = vmatprep.subr.mxu0 0.0
    %1285 = vmatpush1.msra.mxu0 %v1268
    %1286 = vmatprep.subr.mxu0 0.0
    %1287 = vmatpush1.msra.mxu0 %v1267
    %1288 = vmatprep.subr.mxu0 0.0
    %1289 = vmatpush1.msra.mxu0 %v1266
    %1290 = vmatprep.subr.mxu0 0.0
    %1291 = vmatpush1.msra.mxu0 %v1265
    %1292 = vmatprep.subr.mxu0 0.0
    %1293 = vmatpush1.msra.mxu0 %v1264
    %1294 = vmatprep.subr.mxu0 0.0
    %1295 = vmatpush1.msra.mxu0 %v1263
    %1296 = vmatprep.subr.mxu0 0.0
    %1297 = vmatpush1.msra.mxu0 %v1262
    %1298 = vmatprep.subr.mxu0 0.0
    %1299 = vmatpush1.msra.mxu0 %v1261
    %1300 = vmatprep.subr.mxu0 0.0
    %1301 = vmatpush1.msra.mxu0 %v1260
    %1302 = vmatprep.subr.mxu0 0.0
    %1303 = vmatpush1.msra.mxu0 %v1259
    %1304 = vmatprep.subr.mxu0 0.0
    %1305 = vmatpush1.msra.mxu0 %v1258
    %1306 = vmatprep.subr.mxu0 0.0
    %1307 = vmatpush2.msra.mxu0 0.0
    %1308 = vmatprep.subr.mxu0 0.0
    %1309 = vmatpush2.msra.mxu0 0.0
    %1310 = vmatprep.subr.mxu0 0.0
    %1311 = vmatpush2.msra.mxu0 0.0
    %1312 = vmatprep.subr.mxu0 0.0
    %1313 = vmatpush2.msra.mxu0 0.0
    %1314 = vmatprep.subr.mxu0 0.0
    %1315 = vmatpush2.msra.mxu0 0.0
    %1316 = vmatprep.subr.mxu0 0.0
    %1317 = vmatpush2.msra.mxu0 0.0
    %1318 = vmatprep.subr.mxu0 0.0
    %1319 = vmatpush2.msra.mxu0 0.0
    %1320 = vmatprep.subr.mxu0 0.0
    %1321 = vmatpush2.msra.mxu0 0.0
    %1322 = vmatprep.subr.mxu0 0.0
    %1323 = vmatpush2.msra.mxu0 0.0
    %1324 = vmatprep.subr.mxu0 0.0
    %1325 = vmatpush2.msra.mxu0 0.0
    %1326 = vmatprep.subr.mxu0 0.0
    %1327 = vmatpush2.msra.mxu0 0.0
    %1328 = vmatprep.subr.mxu0 0.0
    %1329 = vmatpush2.msra.mxu0 0.0
    %1330 = vmatprep.subr.mxu0 0.0
    %1331 = vmatpush2.msra.mxu0 0.0
    %1332 = vmatprep.subr.mxu0 0.0
    %1333 = vmatpush2.msra.mxu0 0.0
    %1334 = vmatprep.subr.mxu0 0.0
    %1335 = vmatpush2.msra.mxu0 0.0
    %1336 = vmatprep.subr.mxu0 0.0
    %1337 = vmatpush2.msra.mxu0 0.0
    %1338 = vmatprep.mubr.f32.mxu0 0.0
    %1339 = vmatmul.mubr.f32.gmra.mxu0 %v293
    %v1340 = vpop.f32.mrf.mxu0
    %v1341 = vadd.f32 0.0, %v1340
    %v1342 = vpop.f32.mrf.mxu0
    %1343 = vdwg.mxu0
    %v1344 = vadd.f32 %v1254, %v1341
    %v1346 = vsel %vm303, %v300, 0
    %1348 = vmatprep.subr.mxu0 0.0
    %1349 = vmatpush1.msra.mxu0 0.0
    %1350 = vmatprep.subr.mxu0 0.0
    %1351 = vmatpush1.msra.mxu0 0.0
    %1352 = vmatprep.subr.mxu0 0.0
    %1353 = vmatpush1.msra.mxu0 0.0
    %1354 = vmatprep.subr.mxu0 0.0
    %1355 = vmatpush1.msra.mxu0 0.0
    %1356 = vmatprep.subr.mxu0 0.0
    %1357 = vmatpush1.msra.mxu0 0.0
    %1358 = vmatprep.subr.mxu0 0.0
    %1359 = vmatpush1.msra.mxu0 0.0
    %1360 = vmatprep.subr.mxu0 0.0
    %1361 = vmatpush1.msra.mxu0 0.0
    %1362 = vmatprep.subr.mxu0 0.0
    %1363 = vmatpush1.msra.mxu0 0.0
    %1364 = vmatprep.subr.mxu0 0.0
    %1365 = vmatpush1.msra.mxu0 0.0
    %1366 = vmatprep.subr.mxu0 0.0
    %1367 = vmatpush1.msra.mxu0 0.0
    %1368 = vmatprep.subr.mxu0 0.0
    %1369 = vmatpush1.msra.mxu0 0.0
    %1370 = vmatprep.subr.mxu0 0.0
    %1371 = vmatpush1.msra.mxu0 0.0
    %1372 = vmatprep.subr.mxu0 0.0
    %1373 = vmatpush1.msra.mxu0 0.0
    %1374 = vmatprep.subr.mxu0 0.0
    %1375 = vmatpush1.msra.mxu0 0.0
    %1376 = vmatprep.subr.mxu0 0.0
    %1377 = vmatpush1.msra.mxu0 %v291
    %1378 = vmatprep.subr.mxu0 0.0
    %1379 = vmatpush1.msra.mxu0 %v290
    %1380 = vmatprep.subr.mxu0 0.0
    %1381 = vmatpush2.msra.mxu0 0.0
    %1382 = vmatprep.subr.mxu0 0.0
    %1383 = vmatpush2.msra.mxu0 0.0
    %1384 = vmatprep.subr.mxu0 0.0
    %1385 = vmatpush2.msra.mxu0 0.0
    %1386 = vmatprep.subr.mxu0 0.0
    %1387 = vmatpush2.msra.mxu0 0.0
    %1388 = vmatprep.subr.mxu0 0.0
    %1389 = vmatpush2.msra.mxu0 0.0
    %1390 = vmatprep.subr.mxu0 0.0
    %1391 = vmatpush2.msra.mxu0 0.0
    %1392 = vmatprep.subr.mxu0 0.0
    %1393 = vmatpush2.msra.mxu0 0.0
    %1394 = vmatprep.subr.mxu0 0.0
    %1395 = vmatpush2.msra.mxu0 0.0
    %1396 = vmatprep.subr.mxu0 0.0
    %1397 = vmatpush2.msra.mxu0 0.0
    %1398 = vmatprep.subr.mxu0 0.0
    %1399 = vmatpush2.msra.mxu0 0.0
    %1400 = vmatprep.subr.mxu0 0.0
    %1401 = vmatpush2.msra.mxu0 0.0
    %1402 = vmatprep.subr.mxu0 0.0
    %1403 = vmatpush2.msra.mxu0 0.0
    %1404 = vmatprep.subr.mxu0 0.0
    %1405 = vmatpush2.msra.mxu0 0.0
    %1406 = vmatprep.subr.mxu0 0.0
    %1407 = vmatpush2.msra.mxu0 0.0
    %1408 = vmatprep.subr.mxu0 0.0
    %1409 = vmatpush2.msra.mxu0 0.0
    %1410 = vmatprep.subr.mxu0 0.0
    %1411 = vmatpush2.msra.mxu0 0.0
    %1412 = vmatprep.mubr.f32.mxu0 0.0
    %1413 = vmatmul.mubr.f32.gmra.mxu0 %v1346
    %v1414 = vpop.f32.mrf.mxu0
    %v1415 = vadd.f32 0.0, %v1414
    %v1416 = vpop.f32.mrf.mxu0
    %1417 = vdwg.mxu0
    %s1418 = scalar_lea.vmem [#allocation16], 512
    %v1419 = vld [vmem:[%s1418] sm:$0xff]
    %v1420 = vld [vmem:[%s1418 + $0x8] sm:$0xff]
    %v1421 = vld [vmem:[%s1418 + $0x10] sm:$0xff]
    %v1422 = vld [vmem:[%s1418 + $0x18] sm:$0xff]
    %v1423 = vld [vmem:[%s1418 + $0x20] sm:$0xff]
    %v1424 = vld [vmem:[%s1418 + $0x28] sm:$0xff]
    %v1425 = vld [vmem:[%s1418 + $0x30] sm:$0xff]
    %v1426 = vld [vmem:[%s1418 + $0x38] sm:$0xff]
    %v1427 = vld [vmem:[%s1418 + $0x40] sm:$0xff]
    %v1428 = vld [vmem:[%s1418 + $0x48] sm:$0xff]
    %v1429 = vld [vmem:[%s1418 + $0x50] sm:$0xff]
    %v1430 = vld [vmem:[%s1418 + $0x58] sm:$0xff]
    %v1431 = vld [vmem:[%s1418 + $0x60] sm:$0xff]
    %v1432 = vld [vmem:[%s1418 + $0x68] sm:$0xff]
    %v1433 = vld [vmem:[%s1418 + $0x70] sm:$0xff]
    %v1434 = vld [vmem:[%s1418 + $0x78] sm:$0xff]
    %s1435 = scalar_lea.vmem [#allocation17], 4
    %v1436 = vld [vmem:[%s1435] sm:$0x1]
    %v1438 = vlaneseq
    %v1439 = vshrl.u32 %v1438, 7
    %v1440 = vsub.s32 0, %v1439
    %v1441 = vrot.slane %v1436, %v1440
    %1443 = vmatprep.subr.mxu0 0.0
    %1444 = vmatpush1.msra.mxu0 %v1434
    %1445 = vmatprep.subr.mxu0 0.0
    %1446 = vmatpush1.msra.mxu0 %v1433
    %1447 = vmatprep.subr.mxu0 0.0
    %1448 = vmatpush1.msra.mxu0 %v1432
    %1449 = vmatprep.subr.mxu0 0.0
    %1450 = vmatpush1.msra.mxu0 %v1431
    %1451 = vmatprep.subr.mxu0 0.0
    %1452 = vmatpush1.msra.mxu0 %v1430
    %1453 = vmatprep.subr.mxu0 0.0
    %1454 = vmatpush1.msra.mxu0 %v1429
    %1455 = vmatprep.subr.mxu0 0.0
    %1456 = vmatpush1.msra.mxu0 %v1428
    %1457 = vmatprep.subr.mxu0 0.0
    %1458 = vmatpush1.msra.mxu0 %v1427
    %1459 = vmatprep.subr.mxu0 0.0
    %1460 = vmatpush1.msra.mxu0 %v1426
    %1461 = vmatprep.subr.mxu0 0.0
    %1462 = vmatpush1.msra.mxu0 %v1425
    %1463 = vmatprep.subr.mxu0 0.0
    %1464 = vmatpush1.msra.mxu0 %v1424
    %1465 = vmatprep.subr.mxu0 0.0
    %1466 = vmatpush1.msra.mxu0 %v1423
    %1467 = vmatprep.subr.mxu0 0.0
    %1468 = vmatpush1.msra.mxu0 %v1422
    %1469 = vmatprep.subr.mxu0 0.0
    %1470 = vmatpush1.msra.mxu0 %v1421
    %1471 = vmatprep.subr.mxu0 0.0
    %1472 = vmatpush1.msra.mxu0 %v1420
    %1473 = vmatprep.subr.mxu0 0.0
    %1474 = vmatpush1.msra.mxu0 %v1419
    %1475 = vmatprep.subr.mxu0 0.0
    %1476 = vmatpush2.msra.mxu0 0.0
    %1477 = vmatprep.subr.mxu0 0.0
    %1478 = vmatpush2.msra.mxu0 0.0
    %1479 = vmatprep.subr.mxu0 0.0
    %1480 = vmatpush2.msra.mxu0 0.0
    %1481 = vmatprep.subr.mxu0 0.0
    %1482 = vmatpush2.msra.mxu0 0.0
    %1483 = vmatprep.subr.mxu0 0.0
    %1484 = vmatpush2.msra.mxu0 0.0
    %1485 = vmatprep.subr.mxu0 0.0
    %1486 = vmatpush2.msra.mxu0 0.0
    %1487 = vmatprep.subr.mxu0 0.0
    %1488 = vmatpush2.msra.mxu0 0.0
    %1489 = vmatprep.subr.mxu0 0.0
    %1490 = vmatpush2.msra.mxu0 0.0
    %1491 = vmatprep.subr.mxu0 0.0
    %1492 = vmatpush2.msra.mxu0 0.0
    %1493 = vmatprep.subr.mxu0 0.0
    %1494 = vmatpush2.msra.mxu0 0.0
    %1495 = vmatprep.subr.mxu0 0.0
    %1496 = vmatpush2.msra.mxu0 0.0
    %1497 = vmatprep.subr.mxu0 0.0
    %1498 = vmatpush2.msra.mxu0 0.0
    %1499 = vmatprep.subr.mxu0 0.0
    %1500 = vmatpush2.msra.mxu0 0.0
    %1501 = vmatprep.subr.mxu0 0.0
    %1502 = vmatpush2.msra.mxu0 0.0
    %1503 = vmatprep.subr.mxu0 0.0
    %1504 = vmatpush2.msra.mxu0 0.0
    %1505 = vmatprep.subr.mxu0 0.0
    %1506 = vmatpush2.msra.mxu0 0.0
    %1507 = vmatprep.mubr.f32.mxu0 0.0
    %1508 = vmatmul.mubr.f32.gmra.mxu0 %v1415
    %v1509 = vpop.f32.mrf.mxu0
    %v1510 = vadd.f32 %v1441, %v1509
    %v1511 = vpop.f32.mrf.mxu0
    %1512 = vdwg.mxu0
    %s1513 = scalar_lea.vmem [#allocation19], 512
    %v1514 = vld [vmem:[%s1513] sm:$0xff]
    %v1515 = vld [vmem:[%s1513 + $0x8] sm:$0xff]
    %v1516 = vld [vmem:[%s1513 + $0x10] sm:$0xff]
    %v1517 = vld [vmem:[%s1513 + $0x18] sm:$0xff]
    %v1518 = vld [vmem:[%s1513 + $0x20] sm:$0xff]
    %v1519 = vld [vmem:[%s1513 + $0x28] sm:$0xff]
    %v1520 = vld [vmem:[%s1513 + $0x30] sm:$0xff]
    %v1521 = vld [vmem:[%s1513 + $0x38] sm:$0xff]
    %v1522 = vld [vmem:[%s1513 + $0x40] sm:$0xff]
    %v1523 = vld [vmem:[%s1513 + $0x48] sm:$0xff]
    %v1524 = vld [vmem:[%s1513 + $0x50] sm:$0xff]
    %v1525 = vld [vmem:[%s1513 + $0x58] sm:$0xff]
    %v1526 = vld [vmem:[%s1513 + $0x60] sm:$0xff]
    %v1527 = vld [vmem:[%s1513 + $0x68] sm:$0xff]
    %v1528 = vld [vmem:[%s1513 + $0x70] sm:$0xff]
    %v1529 = vld [vmem:[%s1513 + $0x78] sm:$0xff]
    %1530 = vmatprep.subr.mxu0 0.0
    %1531 = vmatpush1.msra.mxu0 %v1529
    %1532 = vmatprep.subr.mxu0 0.0
    %1533 = vmatpush1.msra.mxu0 %v1528
    %1534 = vmatprep.subr.mxu0 0.0
    %1535 = vmatpush1.msra.mxu0 %v1527
    %1536 = vmatprep.subr.mxu0 0.0
    %1537 = vmatpush1.msra.mxu0 %v1526
    %1538 = vmatprep.subr.mxu0 0.0
    %1539 = vmatpush1.msra.mxu0 %v1525
    %1540 = vmatprep.subr.mxu0 0.0
    %1541 = vmatpush1.msra.mxu0 %v1524
    %1542 = vmatprep.subr.mxu0 0.0
    %1543 = vmatpush1.msra.mxu0 %v1523
    %1544 = vmatprep.subr.mxu0 0.0
    %1545 = vmatpush1.msra.mxu0 %v1522
    %1546 = vmatprep.subr.mxu0 0.0
    %1547 = vmatpush1.msra.mxu0 %v1521
    %1548 = vmatprep.subr.mxu0 0.0
    %1549 = vmatpush1.msra.mxu0 %v1520
    %1550 = vmatprep.subr.mxu0 0.0
    %1551 = vmatpush1.msra.mxu0 %v1519
    %1552 = vmatprep.subr.mxu0 0.0
    %1553 = vmatpush1.msra.mxu0 %v1518
    %1554 = vmatprep.subr.mxu0 0.0
    %1555 = vmatpush1.msra.mxu0 %v1517
    %1556 = vmatprep.subr.mxu0 0.0
    %1557 = vmatpush1.msra.mxu0 %v1516
    %1558 = vmatprep.subr.mxu0 0.0
    %1559 = vmatpush1.msra.mxu0 %v1515
    %1560 = vmatprep.subr.mxu0 0.0
    %1561 = vmatpush1.msra.mxu0 %v1514
    %1562 = vmatprep.subr.mxu0 0.0
    %1563 = vmatpush2.msra.mxu0 0.0
    %1564 = vmatprep.subr.mxu0 0.0
    %1565 = vmatpush2.msra.mxu0 0.0
    %1566 = vmatprep.subr.mxu0 0.0
    %1567 = vmatpush2.msra.mxu0 0.0
    %1568 = vmatprep.subr.mxu0 0.0
    %1569 = vmatpush2.msra.mxu0 0.0
    %1570 = vmatprep.subr.mxu0 0.0
    %1571 = vmatpush2.msra.mxu0 0.0
    %1572 = vmatprep.subr.mxu0 0.0
    %1573 = vmatpush2.msra.mxu0 0.0
    %1574 = vmatprep.subr.mxu0 0.0
    %1575 = vmatpush2.msra.mxu0 0.0
    %1576 = vmatprep.subr.mxu0 0.0
    %1577 = vmatpush2.msra.mxu0 0.0
    %1578 = vmatprep.subr.mxu0 0.0
    %1579 = vmatpush2.msra.mxu0 0.0
    %1580 = vmatprep.subr.mxu0 0.0
    %1581 = vmatpush2.msra.mxu0 0.0
    %1582 = vmatprep.subr.mxu0 0.0
    %1583 = vmatpush2.msra.mxu0 0.0
    %1584 = vmatprep.subr.mxu0 0.0
    %1585 = vmatpush2.msra.mxu0 0.0
    %1586 = vmatprep.subr.mxu0 0.0
    %1587 = vmatpush2.msra.mxu0 0.0
    %1588 = vmatprep.subr.mxu0 0.0
    %1589 = vmatpush2.msra.mxu0 0.0
    %1590 = vmatprep.subr.mxu0 0.0
    %1591 = vmatpush2.msra.mxu0 0.0
    %1592 = vmatprep.subr.mxu0 0.0
    %1593 = vmatpush2.msra.mxu0 0.0
    %1594 = vmatprep.mubr.f32.mxu0 0.0
    %1595 = vmatmul.mubr.f32.gmra.mxu0 %v293
    %v1596 = vpop.f32.mrf.mxu0
    %v1597 = vadd.f32 0.0, %v1596
    %v1598 = vpop.f32.mrf.mxu0
    %1599 = vdwg.mxu0
    %v1600 = vadd.f32 %v1510, %v1597
    %v1601 = vadd.f32 %v1344, %v1600
    %v1603 = vsel %vm557, %v301, 0
    %v1606 = vsel %vm557, %v302, 0
    %1608 = vmatprep.subr.mxu0 0.0
    %1609 = vmatpush1.msra.mxu0 0.0
    %1610 = vmatprep.subr.mxu0 0.0
    %1611 = vmatpush1.msra.mxu0 0.0
    %1612 = vmatprep.subr.mxu0 0.0
    %1613 = vmatpush1.msra.mxu0 0.0
    %1614 = vmatprep.subr.mxu0 0.0
    %1615 = vmatpush1.msra.mxu0 0.0
    %1616 = vmatprep.subr.mxu0 0.0
    %1617 = vmatpush1.msra.mxu0 0.0
    %1618 = vmatprep.subr.mxu0 0.0
    %1619 = vmatpush1.msra.mxu0 0.0
    %1620 = vmatprep.subr.mxu0 0.0
    %1621 = vmatpush1.msra.mxu0 0.0
    %1622 = vmatprep.subr.mxu0 0.0
    %1623 = vmatpush1.msra.mxu0 0.0
    %1624 = vmatprep.subr.mxu0 0.0
    %1625 = vmatpush1.msra.mxu0 0.0
    %1626 = vmatprep.subr.mxu0 0.0
    %1627 = vmatpush1.msra.mxu0 0.0
    %1628 = vmatprep.subr.mxu0 0.0
    %1629 = vmatpush1.msra.mxu0 0.0
    %1630 = vmatprep.subr.mxu0 0.0
    %1631 = vmatpush1.msra.mxu0 0.0
    %1632 = vmatprep.subr.mxu0 0.0
    %1633 = vmatpush1.msra.mxu0 0.0
    %1634 = vmatprep.subr.mxu0 0.0
    %1635 = vmatpush1.msra.mxu0 0.0
    %1636 = vmatprep.subr.mxu0 0.0
    %1637 = vmatpush1.msra.mxu0 0.0
    %1638 = vmatprep.subr.mxu0 0.0
    %1639 = vmatpush1.msra.mxu0 %v293
    %1640 = vmatprep.subr.mxu0 0.0
    %1641 = vmatpush2.msra.mxu0 0.0
    %1642 = vmatprep.subr.mxu0 0.0
    %1643 = vmatpush2.msra.mxu0 0.0
    %1644 = vmatprep.subr.mxu0 0.0
    %1645 = vmatpush2.msra.mxu0 0.0
    %1646 = vmatprep.subr.mxu0 0.0
    %1647 = vmatpush2.msra.mxu0 0.0
    %1648 = vmatprep.subr.mxu0 0.0
    %1649 = vmatpush2.msra.mxu0 0.0
    %1650 = vmatprep.subr.mxu0 0.0
    %1651 = vmatpush2.msra.mxu0 0.0
    %1652 = vmatprep.subr.mxu0 0.0
    %1653 = vmatpush2.msra.mxu0 0.0
    %1654 = vmatprep.subr.mxu0 0.0
    %1655 = vmatpush2.msra.mxu0 0.0
    %1656 = vmatprep.subr.mxu0 0.0
    %1657 = vmatpush2.msra.mxu0 0.0
    %1658 = vmatprep.subr.mxu0 0.0
    %1659 = vmatpush2.msra.mxu0 0.0
    %1660 = vmatprep.subr.mxu0 0.0
    %1661 = vmatpush2.msra.mxu0 0.0
    %1662 = vmatprep.subr.mxu0 0.0
    %1663 = vmatpush2.msra.mxu0 0.0
    %1664 = vmatprep.subr.mxu0 0.0
    %1665 = vmatpush2.msra.mxu0 0.0
    %1666 = vmatprep.subr.mxu0 0.0
    %1667 = vmatpush2.msra.mxu0 0.0
    %1668 = vmatprep.subr.mxu0 0.0
    %1669 = vmatpush2.msra.mxu0 0.0
    %1670 = vmatprep.subr.mxu0 0.0
    %1671 = vmatpush2.msra.mxu0 0.0
    %1672 = vmatprep.mubr.f32.mxu0 0.0
    %1673 = vmatmul.mubr.f32.gmra.mxu0 %v1603
    %v1674 = vpop.f32.mrf.mxu0
    %v1675 = vadd.f32 0.0, %v1674
    %v1676 = vpop.f32.mrf.mxu0
    %1677 = vmatprep.mubr.f32.mxu0 0.0
    %1678 = vmatmul.mubr.f32.gmra.mxu0 %v1606
    %v1679 = vpop.f32.mrf.mxu0
    %v1680 = vadd.f32 0.0, %v1679
    %v1681 = vpop.f32.mrf.mxu0
    %1682 = vdwg.mxu0
    %s1683 = scalar_lea.vmem [#allocation16], 640
    %v1684 = vld [vmem:[%s1683] sm:$0xff]
    %v1685 = vld [vmem:[%s1683 + $0x8] sm:$0xff]
    %v1686 = vld [vmem:[%s1683 + $0x10] sm:$0xff]
    %v1687 = vld [vmem:[%s1683 + $0x18] sm:$0xff]
    %v1688 = vld [vmem:[%s1683 + $0x20] sm:$0xff]
    %v1689 = vld [vmem:[%s1683 + $0x28] sm:$0xff]
    %v1690 = vld [vmem:[%s1683 + $0x30] sm:$0xff]
    %v1691 = vld [vmem:[%s1683 + $0x38] sm:$0xff]
    %v1692 = vld [vmem:[%s1683 + $0x40] sm:$0xff]
    %v1693 = vld [vmem:[%s1683 + $0x48] sm:$0xff]
    %v1694 = vld [vmem:[%s1683 + $0x50] sm:$0xff]
    %v1695 = vld [vmem:[%s1683 + $0x58] sm:$0xff]
    %v1696 = vld [vmem:[%s1683 + $0x60] sm:$0xff]
    %v1697 = vld [vmem:[%s1683 + $0x68] sm:$0xff]
    %v1698 = vld [vmem:[%s1683 + $0x70] sm:$0xff]
    %v1699 = vld [vmem:[%s1683 + $0x78] sm:$0xff]
    %s1700 = scalar_lea.vmem [#allocation17], 5
    %v1701 = vld [vmem:[%s1700] sm:$0x1]
    %v1703 = vlaneseq
    %v1704 = vshrl.u32 %v1703, 7
    %v1705 = vsub.s32 0, %v1704
    %v1706 = vrot.slane %v1701, %v1705
    %1708 = vmatprep.subr.mxu0 0.0
    %1709 = vmatpush1.msra.mxu0 %v1699
    %1710 = vmatprep.subr.mxu0 0.0
    %1711 = vmatpush1.msra.mxu0 %v1698
    %1712 = vmatprep.subr.mxu0 0.0
    %1713 = vmatpush1.msra.mxu0 %v1697
    %1714 = vmatprep.subr.mxu0 0.0
    %1715 = vmatpush1.msra.mxu0 %v1696
    %1716 = vmatprep.subr.mxu0 0.0
    %1717 = vmatpush1.msra.mxu0 %v1695
    %1718 = vmatprep.subr.mxu0 0.0
    %1719 = vmatpush1.msra.mxu0 %v1694
    %1720 = vmatprep.subr.mxu0 0.0
    %1721 = vmatpush1.msra.mxu0 %v1693
    %1722 = vmatprep.subr.mxu0 0.0
    %1723 = vmatpush1.msra.mxu0 %v1692
    %1724 = vmatprep.subr.mxu0 0.0
    %1725 = vmatpush1.msra.mxu0 %v1691
    %1726 = vmatprep.subr.mxu0 0.0
    %1727 = vmatpush1.msra.mxu0 %v1690
    %1728 = vmatprep.subr.mxu0 0.0
    %1729 = vmatpush1.msra.mxu0 %v1689
    %1730 = vmatprep.subr.mxu0 0.0
    %1731 = vmatpush1.msra.mxu0 %v1688
    %1732 = vmatprep.subr.mxu0 0.0
    %1733 = vmatpush1.msra.mxu0 %v1687
    %1734 = vmatprep.subr.mxu0 0.0
    %1735 = vmatpush1.msra.mxu0 %v1686
    %1736 = vmatprep.subr.mxu0 0.0
    %1737 = vmatpush1.msra.mxu0 %v1685
    %1738 = vmatprep.subr.mxu0 0.0
    %1739 = vmatpush1.msra.mxu0 %v1684
    %1740 = vmatprep.subr.mxu0 0.0
    %1741 = vmatpush2.msra.mxu0 0.0
    %1742 = vmatprep.subr.mxu0 0.0
    %1743 = vmatpush2.msra.mxu0 0.0
    %1744 = vmatprep.subr.mxu0 0.0
    %1745 = vmatpush2.msra.mxu0 0.0
    %1746 = vmatprep.subr.mxu0 0.0
    %1747 = vmatpush2.msra.mxu0 0.0
    %1748 = vmatprep.subr.mxu0 0.0
    %1749 = vmatpush2.msra.mxu0 0.0
    %1750 = vmatprep.subr.mxu0 0.0
    %1751 = vmatpush2.msra.mxu0 0.0
    %1752 = vmatprep.subr.mxu0 0.0
    %1753 = vmatpush2.msra.mxu0 0.0
    %1754 = vmatprep.subr.mxu0 0.0
    %1755 = vmatpush2.msra.mxu0 0.0
    %1756 = vmatprep.subr.mxu0 0.0
    %1757 = vmatpush2.msra.mxu0 0.0
    %1758 = vmatprep.subr.mxu0 0.0
    %1759 = vmatpush2.msra.mxu0 0.0
    %1760 = vmatprep.subr.mxu0 0.0
    %1761 = vmatpush2.msra.mxu0 0.0
    %1762 = vmatprep.subr.mxu0 0.0
    %1763 = vmatpush2.msra.mxu0 0.0
    %1764 = vmatprep.subr.mxu0 0.0
    %1765 = vmatpush2.msra.mxu0 0.0
    %1766 = vmatprep.subr.mxu0 0.0
    %1767 = vmatpush2.msra.mxu0 0.0
    %1768 = vmatprep.subr.mxu0 0.0
    %1769 = vmatpush2.msra.mxu0 0.0
    %1770 = vmatprep.subr.mxu0 0.0
    %1771 = vmatpush2.msra.mxu0 0.0
    %1772 = vmatprep.mubr.f32.mxu0 0.0
    %1773 = vmatmul.mubr.f32.gmra.mxu0 %v1675
    %v1774 = vpop.f32.mrf.mxu0
    %v1775 = vadd.f32 %v1706, %v1774
    %v1776 = vpop.f32.mrf.mxu0
    %1777 = vmatprep.mubr.f32.mxu0 0.0
    %1778 = vmatmul.mubr.f32.gmra.mxu0 %v1680
    %v1779 = vpop.f32.mrf.mxu0
    %v1780 = vadd.f32 %v1706, %v1779
    %v1781 = vpop.f32.mrf.mxu0
    %1782 = vdwg.mxu0
    %s1783 = scalar_lea.vmem [#allocation19], 640
    %v1784 = vld [vmem:[%s1783] sm:$0xff]
    %v1785 = vld [vmem:[%s1783 + $0x8] sm:$0xff]
    %v1786 = vld [vmem:[%s1783 + $0x10] sm:$0xff]
    %v1787 = vld [vmem:[%s1783 + $0x18] sm:$0xff]
    %v1788 = vld [vmem:[%s1783 + $0x20] sm:$0xff]
    %v1789 = vld [vmem:[%s1783 + $0x28] sm:$0xff]
    %v1790 = vld [vmem:[%s1783 + $0x30] sm:$0xff]
    %v1791 = vld [vmem:[%s1783 + $0x38] sm:$0xff]
    %v1792 = vld [vmem:[%s1783 + $0x40] sm:$0xff]
    %v1793 = vld [vmem:[%s1783 + $0x48] sm:$0xff]
    %v1794 = vld [vmem:[%s1783 + $0x50] sm:$0xff]
    %v1795 = vld [vmem:[%s1783 + $0x58] sm:$0xff]
    %v1796 = vld [vmem:[%s1783 + $0x60] sm:$0xff]
    %v1797 = vld [vmem:[%s1783 + $0x68] sm:$0xff]
    %v1798 = vld [vmem:[%s1783 + $0x70] sm:$0xff]
    %v1799 = vld [vmem:[%s1783 + $0x78] sm:$0xff]
    %1800 = vmatprep.subr.mxu0 0.0
    %1801 = vmatpush1.msra.mxu0 %v1799
    %1802 = vmatprep.subr.mxu0 0.0
    %1803 = vmatpush1.msra.mxu0 %v1798
    %1804 = vmatprep.subr.mxu0 0.0
    %1805 = vmatpush1.msra.mxu0 %v1797
    %1806 = vmatprep.subr.mxu0 0.0
    %1807 = vmatpush1.msra.mxu0 %v1796
    %1808 = vmatprep.subr.mxu0 0.0
    %1809 = vmatpush1.msra.mxu0 %v1795
    %1810 = vmatprep.subr.mxu0 0.0
    %1811 = vmatpush1.msra.mxu0 %v1794
    %1812 = vmatprep.subr.mxu0 0.0
    %1813 = vmatpush1.msra.mxu0 %v1793
    %1814 = vmatprep.subr.mxu0 0.0
    %1815 = vmatpush1.msra.mxu0 %v1792
    %1816 = vmatprep.subr.mxu0 0.0
    %1817 = vmatpush1.msra.mxu0 %v1791
    %1818 = vmatprep.subr.mxu0 0.0
    %1819 = vmatpush1.msra.mxu0 %v1790
    %1820 = vmatprep.subr.mxu0 0.0
    %1821 = vmatpush1.msra.mxu0 %v1789
    %1822 = vmatprep.subr.mxu0 0.0
    %1823 = vmatpush1.msra.mxu0 %v1788
    %1824 = vmatprep.subr.mxu0 0.0
    %1825 = vmatpush1.msra.mxu0 %v1787
    %1826 = vmatprep.subr.mxu0 0.0
    %1827 = vmatpush1.msra.mxu0 %v1786
    %1828 = vmatprep.subr.mxu0 0.0
    %1829 = vmatpush1.msra.mxu0 %v1785
    %1830 = vmatprep.subr.mxu0 0.0
    %1831 = vmatpush1.msra.mxu0 %v1784
    %1832 = vmatprep.subr.mxu0 0.0
    %1833 = vmatpush2.msra.mxu0 0.0
    %1834 = vmatprep.subr.mxu0 0.0
    %1835 = vmatpush2.msra.mxu0 0.0
    %1836 = vmatprep.subr.mxu0 0.0
    %1837 = vmatpush2.msra.mxu0 0.0
    %1838 = vmatprep.subr.mxu0 0.0
    %1839 = vmatpush2.msra.mxu0 0.0
    %1840 = vmatprep.subr.mxu0 0.0
    %1841 = vmatpush2.msra.mxu0 0.0
    %1842 = vmatprep.subr.mxu0 0.0
    %1843 = vmatpush2.msra.mxu0 0.0
    %1844 = vmatprep.subr.mxu0 0.0
    %1845 = vmatpush2.msra.mxu0 0.0
    %1846 = vmatprep.subr.mxu0 0.0
    %1847 = vmatpush2.msra.mxu0 0.0
    %1848 = vmatprep.subr.mxu0 0.0
    %1849 = vmatpush2.msra.mxu0 0.0
    %1850 = vmatprep.subr.mxu0 0.0
    %1851 = vmatpush2.msra.mxu0 0.0
    %1852 = vmatprep.subr.mxu0 0.0
    %1853 = vmatpush2.msra.mxu0 0.0
    %1854 = vmatprep.subr.mxu0 0.0
    %1855 = vmatpush2.msra.mxu0 0.0
    %1856 = vmatprep.subr.mxu0 0.0
    %1857 = vmatpush2.msra.mxu0 0.0
    %1858 = vmatprep.subr.mxu0 0.0
    %1859 = vmatpush2.msra.mxu0 0.0
    %1860 = vmatprep.subr.mxu0 0.0
    %1861 = vmatpush2.msra.mxu0 0.0
    %1862 = vmatprep.subr.mxu0 0.0
    %1863 = vmatpush2.msra.mxu0 0.0
    %1864 = vmatprep.mubr.f32.mxu0 0.0
    %1865 = vmatmul.mubr.f32.gmra.mxu0 %v290
    %v1866 = vpop.f32.mrf.mxu0
    %v1867 = vadd.f32 0.0, %v1866
    %v1868 = vpop.f32.mrf.mxu0
    %1869 = vmatprep.mubr.f32.mxu0 0.0
    %1870 = vmatmul.mubr.f32.gmra.mxu0 %v291
    %v1871 = vpop.f32.mrf.mxu0
    %v1872 = vadd.f32 0.0, %v1871
    %v1873 = vpop.f32.mrf.mxu0
    %1874 = vdwg.mxu0
    %v1875 = vadd.f32 %v1775, %v1867
    %v1876 = vadd.f32 %v1780, %v1872
    %v1877 = vadd.f32 %v831, %v1875
    %v1878 = vadd.f32 %v832, %v1876
    %v1879 = vmax.f32 %v556, 0.0
    %v1880 = vmax.f32 %v1877, 0.0
    %v1881 = vmax.f32 %v1878, 0.0
    %v1882 = vmax.f32 %v1088, 0.0
    %v1883 = vmax.f32 %v1601, 0.0
    %1884 = vmatprep.subr.mxu0 0.0
    %1885 = vmatpush1.msra.mxu0 0.0
    %1886 = vmatprep.subr.mxu0 0.0
    %1887 = vmatpush1.msra.mxu0 0.0
    %1888 = vmatprep.subr.mxu0 0.0
    %1889 = vmatpush1.msra.mxu0 0.0
    %1890 = vmatprep.subr.mxu0 0.0
    %1891 = vmatpush1.msra.mxu0 0.0
    %1892 = vmatprep.subr.mxu0 0.0
    %1893 = vmatpush1.msra.mxu0 0.0
    %1894 = vmatprep.subr.mxu0 0.0
    %1895 = vmatpush1.msra.mxu0 0.0
    %1896 = vmatprep.subr.mxu0 0.0
    %1897 = vmatpush1.msra.mxu0 0.0
    %1898 = vmatprep.subr.mxu0 0.0
    %1899 = vmatpush1.msra.mxu0 0.0
    %1900 = vmatprep.subr.mxu0 0.0
    %1901 = vmatpush1.msra.mxu0 0.0
    %1902 = vmatprep.subr.mxu0 0.0
    %1903 = vmatpush1.msra.mxu0 0.0
    %1904 = vmatprep.subr.mxu0 0.0
    %1905 = vmatpush1.msra.mxu0 0.0
    %1906 = vmatprep.subr.mxu0 0.0
    %1907 = vmatpush1.msra.mxu0 0.0
    %1908 = vmatprep.subr.mxu0 0.0
    %1909 = vmatpush1.msra.mxu0 0.0
    %1910 = vmatprep.subr.mxu0 0.0
    %1911 = vmatpush1.msra.mxu0 0.0
    %1912 = vmatprep.subr.mxu0 0.0
    %1913 = vmatpush1.msra.mxu0 %v1881
    %1914 = vmatprep.subr.mxu0 0.0
    %1915 = vmatpush1.msra.mxu0 %v1880
    %1916 = vmatprep.subr.mxu0 0.0
    %1917 = vmatpush2.msra.mxu0 0.0
    %1918 = vmatprep.subr.mxu0 0.0
    %1919 = vmatpush2.msra.mxu0 0.0
    %1920 = vmatprep.subr.mxu0 0.0
    %1921 = vmatpush2.msra.mxu0 0.0
    %1922 = vmatprep.subr.mxu0 0.0
    %1923 = vmatpush2.msra.mxu0 0.0
    %1924 = vmatprep.subr.mxu0 0.0
    %1925 = vmatpush2.msra.mxu0 0.0
    %1926 = vmatprep.subr.mxu0 0.0
    %1927 = vmatpush2.msra.mxu0 0.0
    %1928 = vmatprep.subr.mxu0 0.0
    %1929 = vmatpush2.msra.mxu0 0.0
    %1930 = vmatprep.subr.mxu0 0.0
    %1931 = vmatpush2.msra.mxu0 0.0
    %1932 = vmatprep.subr.mxu0 0.0
    %1933 = vmatpush2.msra.mxu0 0.0
    %1934 = vmatprep.subr.mxu0 0.0
    %1935 = vmatpush2.msra.mxu0 0.0
    %1936 = vmatprep.subr.mxu0 0.0
    %1937 = vmatpush2.msra.mxu0 0.0
    %1938 = vmatprep.subr.mxu0 0.0
    %1939 = vmatpush2.msra.mxu0 0.0
    %1940 = vmatprep.subr.mxu0 0.0
    %1941 = vmatpush2.msra.mxu0 0.0
    %1942 = vmatprep.subr.mxu0 0.0
    %1943 = vmatpush2.msra.mxu0 0.0
    %1944 = vmatprep.subr.mxu0 0.0
    %1945 = vmatpush2.msra.mxu0 0.0
    %1946 = vmatprep.subr.mxu0 0.0
    %1947 = vmatpush2.msra.mxu0 0.0
    %1948 = vmatprep.mubr.f32.mxu0 0.0
    %1949 = vmatmul.mubr.f32.gmra.mxu0 %v305
    %v1950 = vpop.f32.mrf.mxu0
    %v1951 = vadd.f32 0.0, %v1950
    %v1952 = vpop.f32.mrf.mxu0
    %1953 = vdwg.mxu0
    %s1954 = scalar_lea.vmem [#allocation16], 768
    %v1955 = vld [vmem:[%s1954] sm:$0xff]
    %v1956 = vld [vmem:[%s1954 + $0x8] sm:$0xff]
    %v1957 = vld [vmem:[%s1954 + $0x10] sm:$0xff]
    %v1958 = vld [vmem:[%s1954 + $0x18] sm:$0xff]
    %v1959 = vld [vmem:[%s1954 + $0x20] sm:$0xff]
    %v1960 = vld [vmem:[%s1954 + $0x28] sm:$0xff]
    %v1961 = vld [vmem:[%s1954 + $0x30] sm:$0xff]
    %v1962 = vld [vmem:[%s1954 + $0x38] sm:$0xff]
    %v1963 = vld [vmem:[%s1954 + $0x40] sm:$0xff]
    %v1964 = vld [vmem:[%s1954 + $0x48] sm:$0xff]
    %v1965 = vld [vmem:[%s1954 + $0x50] sm:$0xff]
    %v1966 = vld [vmem:[%s1954 + $0x58] sm:$0xff]
    %v1967 = vld [vmem:[%s1954 + $0x60] sm:$0xff]
    %v1968 = vld [vmem:[%s1954 + $0x68] sm:$0xff]
    %v1969 = vld [vmem:[%s1954 + $0x70] sm:$0xff]
    %v1970 = vld [vmem:[%s1954 + $0x78] sm:$0xff]
    %s1971 = scalar_lea.vmem [#allocation17], 6
    %v1972 = vld [vmem:[%s1971] sm:$0x1]
    %v1974 = vlaneseq
    %v1975 = vshrl.u32 %v1974, 7
    %v1976 = vsub.s32 0, %v1975
    %v1977 = vrot.slane %v1972, %v1976
    %1979 = vmatprep.subr.mxu0 0.0
    %1980 = vmatpush1.msra.mxu0 %v1970
    %1981 = vmatprep.subr.mxu0 0.0
    %1982 = vmatpush1.msra.mxu0 %v1969
    %1983 = vmatprep.subr.mxu0 0.0
    %1984 = vmatpush1.msra.mxu0 %v1968
    %1985 = vmatprep.subr.mxu0 0.0
    %1986 = vmatpush1.msra.mxu0 %v1967
    %1987 = vmatprep.subr.mxu0 0.0
    %1988 = vmatpush1.msra.mxu0 %v1966
    %1989 = vmatprep.subr.mxu0 0.0
    %1990 = vmatpush1.msra.mxu0 %v1965
    %1991 = vmatprep.subr.mxu0 0.0
    %1992 = vmatpush1.msra.mxu0 %v1964
    %1993 = vmatprep.subr.mxu0 0.0
    %1994 = vmatpush1.msra.mxu0 %v1963
    %1995 = vmatprep.subr.mxu0 0.0
    %1996 = vmatpush1.msra.mxu0 %v1962
    %1997 = vmatprep.subr.mxu0 0.0
    %1998 = vmatpush1.msra.mxu0 %v1961
    %1999 = vmatprep.subr.mxu0 0.0
    %2000 = vmatpush1.msra.mxu0 %v1960
    %2001 = vmatprep.subr.mxu0 0.0
    %2002 = vmatpush1.msra.mxu0 %v1959
    %2003 = vmatprep.subr.mxu0 0.0
    %2004 = vmatpush1.msra.mxu0 %v1958
    %2005 = vmatprep.subr.mxu0 0.0
    %2006 = vmatpush1.msra.mxu0 %v1957
    %2007 = vmatprep.subr.mxu0 0.0
    %2008 = vmatpush1.msra.mxu0 %v1956
    %2009 = vmatprep.subr.mxu0 0.0
    %2010 = vmatpush1.msra.mxu0 %v1955
    %2011 = vmatprep.subr.mxu0 0.0
    %2012 = vmatpush2.msra.mxu0 0.0
    %2013 = vmatprep.subr.mxu0 0.0
    %2014 = vmatpush2.msra.mxu0 0.0
    %2015 = vmatprep.subr.mxu0 0.0
    %2016 = vmatpush2.msra.mxu0 0.0
    %2017 = vmatprep.subr.mxu0 0.0
    %2018 = vmatpush2.msra.mxu0 0.0
    %2019 = vmatprep.subr.mxu0 0.0
    %2020 = vmatpush2.msra.mxu0 0.0
    %2021 = vmatprep.subr.mxu0 0.0
    %2022 = vmatpush2.msra.mxu0 0.0
    %2023 = vmatprep.subr.mxu0 0.0
    %2024 = vmatpush2.msra.mxu0 0.0
    %2025 = vmatprep.subr.mxu0 0.0
    %2026 = vmatpush2.msra.mxu0 0.0
    %2027 = vmatprep.subr.mxu0 0.0
    %2028 = vmatpush2.msra.mxu0 0.0
    %2029 = vmatprep.subr.mxu0 0.0
    %2030 = vmatpush2.msra.mxu0 0.0
    %2031 = vmatprep.subr.mxu0 0.0
    %2032 = vmatpush2.msra.mxu0 0.0
    %2033 = vmatprep.subr.mxu0 0.0
    %2034 = vmatpush2.msra.mxu0 0.0
    %2035 = vmatprep.subr.mxu0 0.0
    %2036 = vmatpush2.msra.mxu0 0.0
    %2037 = vmatprep.subr.mxu0 0.0
    %2038 = vmatpush2.msra.mxu0 0.0
    %2039 = vmatprep.subr.mxu0 0.0
    %2040 = vmatpush2.msra.mxu0 0.0
    %2041 = vmatprep.subr.mxu0 0.0
    %2042 = vmatpush2.msra.mxu0 0.0
    %2043 = vmatprep.mubr.f32.mxu0 0.0
    %2044 = vmatmul.mubr.f32.gmra.mxu0 %v1951
    %v2045 = vpop.f32.mrf.mxu0
    %v2046 = vadd.f32 %v1977, %v2045
    %v2047 = vpop.f32.mrf.mxu0
    %2048 = vdwg.mxu0
    %s2049 = scalar_lea.vmem [#allocation19], 768
    %v2050 = vld [vmem:[%s2049] sm:$0xff]
    %v2051 = vld [vmem:[%s2049 + $0x8] sm:$0xff]
    %v2052 = vld [vmem:[%s2049 + $0x10] sm:$0xff]
    %v2053 = vld [vmem:[%s2049 + $0x18] sm:$0xff]
    %v2054 = vld [vmem:[%s2049 + $0x20] sm:$0xff]
    %v2055 = vld [vmem:[%s2049 + $0x28] sm:$0xff]
    %v2056 = vld [vmem:[%s2049 + $0x30] sm:$0xff]
    %v2057 = vld [vmem:[%s2049 + $0x38] sm:$0xff]
    %v2058 = vld [vmem:[%s2049 + $0x40] sm:$0xff]
    %v2059 = vld [vmem:[%s2049 + $0x48] sm:$0xff]
    %v2060 = vld [vmem:[%s2049 + $0x50] sm:$0xff]
    %v2061 = vld [vmem:[%s2049 + $0x58] sm:$0xff]
    %v2062 = vld [vmem:[%s2049 + $0x60] sm:$0xff]
    %v2063 = vld [vmem:[%s2049 + $0x68] sm:$0xff]
    %v2064 = vld [vmem:[%s2049 + $0x70] sm:$0xff]
    %v2065 = vld [vmem:[%s2049 + $0x78] sm:$0xff]
    %2066 = vmatprep.subr.mxu0 0.0
    %2067 = vmatpush1.msra.mxu0 %v2065
    %2068 = vmatprep.subr.mxu0 0.0
    %2069 = vmatpush1.msra.mxu0 %v2064
    %2070 = vmatprep.subr.mxu0 0.0
    %2071 = vmatpush1.msra.mxu0 %v2063
    %2072 = vmatprep.subr.mxu0 0.0
    %2073 = vmatpush1.msra.mxu0 %v2062
    %2074 = vmatprep.subr.mxu0 0.0
    %2075 = vmatpush1.msra.mxu0 %v2061
    %2076 = vmatprep.subr.mxu0 0.0
    %2077 = vmatpush1.msra.mxu0 %v2060
    %2078 = vmatprep.subr.mxu0 0.0
    %2079 = vmatpush1.msra.mxu0 %v2059
    %2080 = vmatprep.subr.mxu0 0.0
    %2081 = vmatpush1.msra.mxu0 %v2058
    %2082 = vmatprep.subr.mxu0 0.0
    %2083 = vmatpush1.msra.mxu0 %v2057
    %2084 = vmatprep.subr.mxu0 0.0
    %2085 = vmatpush1.msra.mxu0 %v2056
    %2086 = vmatprep.subr.mxu0 0.0
    %2087 = vmatpush1.msra.mxu0 %v2055
    %2088 = vmatprep.subr.mxu0 0.0
    %2089 = vmatpush1.msra.mxu0 %v2054
    %2090 = vmatprep.subr.mxu0 0.0
    %2091 = vmatpush1.msra.mxu0 %v2053
    %2092 = vmatprep.subr.mxu0 0.0
    %2093 = vmatpush1.msra.mxu0 %v2052
    %2094 = vmatprep.subr.mxu0 0.0
    %2095 = vmatpush1.msra.mxu0 %v2051
    %2096 = vmatprep.subr.mxu0 0.0
    %2097 = vmatpush1.msra.mxu0 %v2050
    %2098 = vmatprep.subr.mxu0 0.0
    %2099 = vmatpush2.msra.mxu0 0.0
    %2100 = vmatprep.subr.mxu0 0.0
    %2101 = vmatpush2.msra.mxu0 0.0
    %2102 = vmatprep.subr.mxu0 0.0
    %2103 = vmatpush2.msra.mxu0 0.0
    %2104 = vmatprep.subr.mxu0 0.0
    %2105 = vmatpush2.msra.mxu0 0.0
    %2106 = vmatprep.subr.mxu0 0.0
    %2107 = vmatpush2.msra.mxu0 0.0
    %2108 = vmatprep.subr.mxu0 0.0
    %2109 = vmatpush2.msra.mxu0 0.0
    %2110 = vmatprep.subr.mxu0 0.0
    %2111 = vmatpush2.msra.mxu0 0.0
    %2112 = vmatprep.subr.mxu0 0.0
    %2113 = vmatpush2.msra.mxu0 0.0
    %2114 = vmatprep.subr.mxu0 0.0
    %2115 = vmatpush2.msra.mxu0 0.0
    %2116 = vmatprep.subr.mxu0 0.0
    %2117 = vmatpush2.msra.mxu0 0.0
    %2118 = vmatprep.subr.mxu0 0.0
    %2119 = vmatpush2.msra.mxu0 0.0
    %2120 = vmatprep.subr.mxu0 0.0
    %2121 = vmatpush2.msra.mxu0 0.0
    %2122 = vmatprep.subr.mxu0 0.0
    %2123 = vmatpush2.msra.mxu0 0.0
    %2124 = vmatprep.subr.mxu0 0.0
    %2125 = vmatpush2.msra.mxu0 0.0
    %2126 = vmatprep.subr.mxu0 0.0
    %2127 = vmatpush2.msra.mxu0 0.0
    %2128 = vmatprep.subr.mxu0 0.0
    %2129 = vmatpush2.msra.mxu0 0.0
    %2130 = vmatprep.mubr.f32.mxu0 0.0
    %2131 = vmatmul.mubr.f32.gmra.mxu0 %v1879
    %v2132 = vpop.f32.mrf.mxu0
    %v2133 = vadd.f32 0.0, %v2132
    %v2134 = vpop.f32.mrf.mxu0
    %2135 = vdwg.mxu0
    %v2136 = vadd.f32 %v2046, %v2133
    %2137 = vmatprep.subr.mxu0 0.0
    %2138 = vmatpush1.msra.mxu0 0.0
    %2139 = vmatprep.subr.mxu0 0.0
    %2140 = vmatpush1.msra.mxu0 0.0
    %2141 = vmatprep.subr.mxu0 0.0
    %2142 = vmatpush1.msra.mxu0 0.0
    %2143 = vmatprep.subr.mxu0 0.0
    %2144 = vmatpush1.msra.mxu0 0.0
    %2145 = vmatprep.subr.mxu0 0.0
    %2146 = vmatpush1.msra.mxu0 0.0
    %2147 = vmatprep.subr.mxu0 0.0
    %2148 = vmatpush1.msra.mxu0 0.0
    %2149 = vmatprep.subr.mxu0 0.0
    %2150 = vmatpush1.msra.mxu0 0.0
    %2151 = vmatprep.subr.mxu0 0.0
    %2152 = vmatpush1.msra.mxu0 0.0
    %2153 = vmatprep.subr.mxu0 0.0
    %2154 = vmatpush1.msra.mxu0 0.0
    %2155 = vmatprep.subr.mxu0 0.0
    %2156 = vmatpush1.msra.mxu0 0.0
    %2157 = vmatprep.subr.mxu0 0.0
    %2158 = vmatpush1.msra.mxu0 0.0
    %2159 = vmatprep.subr.mxu0 0.0
    %2160 = vmatpush1.msra.mxu0 0.0
    %2161 = vmatprep.subr.mxu0 0.0
    %2162 = vmatpush1.msra.mxu0 0.0
    %2163 = vmatprep.subr.mxu0 0.0
    %2164 = vmatpush1.msra.mxu0 0.0
    %2165 = vmatprep.subr.mxu0 0.0
    %2166 = vmatpush1.msra.mxu0 0.0
    %2167 = vmatprep.subr.mxu0 0.0
    %2168 = vmatpush1.msra.mxu0 %v1879
    %2169 = vmatprep.subr.mxu0 0.0
    %2170 = vmatpush2.msra.mxu0 0.0
    %2171 = vmatprep.subr.mxu0 0.0
    %2172 = vmatpush2.msra.mxu0 0.0
    %2173 = vmatprep.subr.mxu0 0.0
    %2174 = vmatpush2.msra.mxu0 0.0
    %2175 = vmatprep.subr.mxu0 0.0
    %2176 = vmatpush2.msra.mxu0 0.0
    %2177 = vmatprep.subr.mxu0 0.0
    %2178 = vmatpush2.msra.mxu0 0.0
    %2179 = vmatprep.subr.mxu0 0.0
    %2180 = vmatpush2.msra.mxu0 0.0
    %2181 = vmatprep.subr.mxu0 0.0
    %2182 = vmatpush2.msra.mxu0 0.0
    %2183 = vmatprep.subr.mxu0 0.0
    %2184 = vmatpush2.msra.mxu0 0.0
    %2185 = vmatprep.subr.mxu0 0.0
    %2186 = vmatpush2.msra.mxu0 0.0
    %2187 = vmatprep.subr.mxu0 0.0
    %2188 = vmatpush2.msra.mxu0 0.0
    %2189 = vmatprep.subr.mxu0 0.0
    %2190 = vmatpush2.msra.mxu0 0.0
    %2191 = vmatprep.subr.mxu0 0.0
    %2192 = vmatpush2.msra.mxu0 0.0
    %2193 = vmatprep.subr.mxu0 0.0
    %2194 = vmatpush2.msra.mxu0 0.0
    %2195 = vmatprep.subr.mxu0 0.0
    %2196 = vmatpush2.msra.mxu0 0.0
    %2197 = vmatprep.subr.mxu0 0.0
    %2198 = vmatpush2.msra.mxu0 0.0
    %2199 = vmatprep.subr.mxu0 0.0
    %2200 = vmatpush2.msra.mxu0 0.0
    %2201 = vmatprep.mubr.f32.mxu0 0.0
    %2202 = vmatmul.mubr.f32.gmra.mxu0 %v559
    %v2203 = vpop.f32.mrf.mxu0
    %v2204 = vadd.f32 0.0, %v2203
    %v2205 = vpop.f32.mrf.mxu0
    %2206 = vmatprep.mubr.f32.mxu0 0.0
    %2207 = vmatmul.mubr.f32.gmra.mxu0 %v562
    %v2208 = vpop.f32.mrf.mxu0
    %v2209 = vadd.f32 0.0, %v2208
    %v2210 = vpop.f32.mrf.mxu0
    %2211 = vdwg.mxu0
    %s2212 = scalar_lea.vmem [#allocation16], 896
    %v2213 = vld [vmem:[%s2212] sm:$0xff]
    %v2214 = vld [vmem:[%s2212 + $0x8] sm:$0xff]
    %v2215 = vld [vmem:[%s2212 + $0x10] sm:$0xff]
    %v2216 = vld [vmem:[%s2212 + $0x18] sm:$0xff]
    %v2217 = vld [vmem:[%s2212 + $0x20] sm:$0xff]
    %v2218 = vld [vmem:[%s2212 + $0x28] sm:$0xff]
    %v2219 = vld [vmem:[%s2212 + $0x30] sm:$0xff]
    %v2220 = vld [vmem:[%s2212 + $0x38] sm:$0xff]
    %v2221 = vld [vmem:[%s2212 + $0x40] sm:$0xff]
    %v2222 = vld [vmem:[%s2212 + $0x48] sm:$0xff]
    %v2223 = vld [vmem:[%s2212 + $0x50] sm:$0xff]
    %v2224 = vld [vmem:[%s2212 + $0x58] sm:$0xff]
    %v2225 = vld [vmem:[%s2212 + $0x60] sm:$0xff]
    %v2226 = vld [vmem:[%s2212 + $0x68] sm:$0xff]
    %v2227 = vld [vmem:[%s2212 + $0x70] sm:$0xff]
    %v2228 = vld [vmem:[%s2212 + $0x78] sm:$0xff]
    %s2229 = scalar_lea.vmem [#allocation17], 7
    %v2230 = vld [vmem:[%s2229] sm:$0x1]
    %v2232 = vlaneseq
    %v2233 = vshrl.u32 %v2232, 7
    %v2234 = vsub.s32 0, %v2233
    %v2235 = vrot.slane %v2230, %v2234
    %2237 = vmatprep.subr.mxu0 0.0
    %2238 = vmatpush1.msra.mxu0 %v2228
    %2239 = vmatprep.subr.mxu0 0.0
    %2240 = vmatpush1.msra.mxu0 %v2227
    %2241 = vmatprep.subr.mxu0 0.0
    %2242 = vmatpush1.msra.mxu0 %v2226
    %2243 = vmatprep.subr.mxu0 0.0
    %2244 = vmatpush1.msra.mxu0 %v2225
    %2245 = vmatprep.subr.mxu0 0.0
    %2246 = vmatpush1.msra.mxu0 %v2224
    %2247 = vmatprep.subr.mxu0 0.0
    %2248 = vmatpush1.msra.mxu0 %v2223
    %2249 = vmatprep.subr.mxu0 0.0
    %2250 = vmatpush1.msra.mxu0 %v2222
    %2251 = vmatprep.subr.mxu0 0.0
    %2252 = vmatpush1.msra.mxu0 %v2221
    %2253 = vmatprep.subr.mxu0 0.0
    %2254 = vmatpush1.msra.mxu0 %v2220
    %2255 = vmatprep.subr.mxu0 0.0
    %2256 = vmatpush1.msra.mxu0 %v2219
    %2257 = vmatprep.subr.mxu0 0.0
    %2258 = vmatpush1.msra.mxu0 %v2218
    %2259 = vmatprep.subr.mxu0 0.0
    %2260 = vmatpush1.msra.mxu0 %v2217
    %2261 = vmatprep.subr.mxu0 0.0
    %2262 = vmatpush1.msra.mxu0 %v2216
    %2263 = vmatprep.subr.mxu0 0.0
    %2264 = vmatpush1.msra.mxu0 %v2215
    %2265 = vmatprep.subr.mxu0 0.0
    %2266 = vmatpush1.msra.mxu0 %v2214
    %2267 = vmatprep.subr.mxu0 0.0
    %2268 = vmatpush1.msra.mxu0 %v2213
    %2269 = vmatprep.subr.mxu0 0.0
    %2270 = vmatpush2.msra.mxu0 0.0
    %2271 = vmatprep.subr.mxu0 0.0
    %2272 = vmatpush2.msra.mxu0 0.0
    %2273 = vmatprep.subr.mxu0 0.0
    %2274 = vmatpush2.msra.mxu0 0.0
    %2275 = vmatprep.subr.mxu0 0.0
    %2276 = vmatpush2.msra.mxu0 0.0
    %2277 = vmatprep.subr.mxu0 0.0
    %2278 = vmatpush2.msra.mxu0 0.0
    %2279 = vmatprep.subr.mxu0 0.0
    %2280 = vmatpush2.msra.mxu0 0.0
    %2281 = vmatprep.subr.mxu0 0.0
    %2282 = vmatpush2.msra.mxu0 0.0
    %2283 = vmatprep.subr.mxu0 0.0
    %2284 = vmatpush2.msra.mxu0 0.0
    %2285 = vmatprep.subr.mxu0 0.0
    %2286 = vmatpush2.msra.mxu0 0.0
    %2287 = vmatprep.subr.mxu0 0.0
    %2288 = vmatpush2.msra.mxu0 0.0
    %2289 = vmatprep.subr.mxu0 0.0
    %2290 = vmatpush2.msra.mxu0 0.0
    %2291 = vmatprep.subr.mxu0 0.0
    %2292 = vmatpush2.msra.mxu0 0.0
    %2293 = vmatprep.subr.mxu0 0.0
    %2294 = vmatpush2.msra.mxu0 0.0
    %2295 = vmatprep.subr.mxu0 0.0
    %2296 = vmatpush2.msra.mxu0 0.0
    %2297 = vmatprep.subr.mxu0 0.0
    %2298 = vmatpush2.msra.mxu0 0.0
    %2299 = vmatprep.subr.mxu0 0.0
    %2300 = vmatpush2.msra.mxu0 0.0
    %2301 = vmatprep.mubr.f32.mxu0 0.0
    %2302 = vmatmul.mubr.f32.gmra.mxu0 %v2204
    %v2303 = vpop.f32.mrf.mxu0
    %v2304 = vadd.f32 %v2235, %v2303
    %v2305 = vpop.f32.mrf.mxu0
    %2306 = vmatprep.mubr.f32.mxu0 0.0
    %2307 = vmatmul.mubr.f32.gmra.mxu0 %v2209
    %v2308 = vpop.f32.mrf.mxu0
    %v2309 = vadd.f32 %v2235, %v2308
    %v2310 = vpop.f32.mrf.mxu0
    %2311 = vdwg.mxu0
    %s2312 = scalar_lea.vmem [#allocation19], 896
    %v2313 = vld [vmem:[%s2312] sm:$0xff]
    %v2314 = vld [vmem:[%s2312 + $0x8] sm:$0xff]
    %v2315 = vld [vmem:[%s2312 + $0x10] sm:$0xff]
    %v2316 = vld [vmem:[%s2312 + $0x18] sm:$0xff]
    %v2317 = vld [vmem:[%s2312 + $0x20] sm:$0xff]
    %v2318 = vld [vmem:[%s2312 + $0x28] sm:$0xff]
    %v2319 = vld [vmem:[%s2312 + $0x30] sm:$0xff]
    %v2320 = vld [vmem:[%s2312 + $0x38] sm:$0xff]
    %v2321 = vld [vmem:[%s2312 + $0x40] sm:$0xff]
    %v2322 = vld [vmem:[%s2312 + $0x48] sm:$0xff]
    %v2323 = vld [vmem:[%s2312 + $0x50] sm:$0xff]
    %v2324 = vld [vmem:[%s2312 + $0x58] sm:$0xff]
    %v2325 = vld [vmem:[%s2312 + $0x60] sm:$0xff]
    %v2326 = vld [vmem:[%s2312 + $0x68] sm:$0xff]
    %v2327 = vld [vmem:[%s2312 + $0x70] sm:$0xff]
    %v2328 = vld [vmem:[%s2312 + $0x78] sm:$0xff]
    %2329 = vmatprep.subr.mxu0 0.0
    %2330 = vmatpush1.msra.mxu0 %v2328
    %2331 = vmatprep.subr.mxu0 0.0
    %2332 = vmatpush1.msra.mxu0 %v2327
    %2333 = vmatprep.subr.mxu0 0.0
    %2334 = vmatpush1.msra.mxu0 %v2326
    %2335 = vmatprep.subr.mxu0 0.0
    %2336 = vmatpush1.msra.mxu0 %v2325
    %2337 = vmatprep.subr.mxu0 0.0
    %2338 = vmatpush1.msra.mxu0 %v2324
    %2339 = vmatprep.subr.mxu0 0.0
    %2340 = vmatpush1.msra.mxu0 %v2323
    %2341 = vmatprep.subr.mxu0 0.0
    %2342 = vmatpush1.msra.mxu0 %v2322
    %2343 = vmatprep.subr.mxu0 0.0
    %2344 = vmatpush1.msra.mxu0 %v2321
    %2345 = vmatprep.subr.mxu0 0.0
    %2346 = vmatpush1.msra.mxu0 %v2320
    %2347 = vmatprep.subr.mxu0 0.0
    %2348 = vmatpush1.msra.mxu0 %v2319
    %2349 = vmatprep.subr.mxu0 0.0
    %2350 = vmatpush1.msra.mxu0 %v2318
    %2351 = vmatprep.subr.mxu0 0.0
    %2352 = vmatpush1.msra.mxu0 %v2317
    %2353 = vmatprep.subr.mxu0 0.0
    %2354 = vmatpush1.msra.mxu0 %v2316
    %2355 = vmatprep.subr.mxu0 0.0
    %2356 = vmatpush1.msra.mxu0 %v2315
    %2357 = vmatprep.subr.mxu0 0.0
    %2358 = vmatpush1.msra.mxu0 %v2314
    %2359 = vmatprep.subr.mxu0 0.0
    %2360 = vmatpush1.msra.mxu0 %v2313
    %2361 = vmatprep.subr.mxu0 0.0
    %2362 = vmatpush2.msra.mxu0 0.0
    %2363 = vmatprep.subr.mxu0 0.0
    %2364 = vmatpush2.msra.mxu0 0.0
    %2365 = vmatprep.subr.mxu0 0.0
    %2366 = vmatpush2.msra.mxu0 0.0
    %2367 = vmatprep.subr.mxu0 0.0
    %2368 = vmatpush2.msra.mxu0 0.0
    %2369 = vmatprep.subr.mxu0 0.0
    %2370 = vmatpush2.msra.mxu0 0.0
    %2371 = vmatprep.subr.mxu0 0.0
    %2372 = vmatpush2.msra.mxu0 0.0
    %2373 = vmatprep.subr.mxu0 0.0
    %2374 = vmatpush2.msra.mxu0 0.0
    %2375 = vmatprep.subr.mxu0 0.0
    %2376 = vmatpush2.msra.mxu0 0.0
    %2377 = vmatprep.subr.mxu0 0.0
    %2378 = vmatpush2.msra.mxu0 0.0
    %2379 = vmatprep.subr.mxu0 0.0
    %2380 = vmatpush2.msra.mxu0 0.0
    %2381 = vmatprep.subr.mxu0 0.0
    %2382 = vmatpush2.msra.mxu0 0.0
    %2383 = vmatprep.subr.mxu0 0.0
    %2384 = vmatpush2.msra.mxu0 0.0
    %2385 = vmatprep.subr.mxu0 0.0
    %2386 = vmatpush2.msra.mxu0 0.0
    %2387 = vmatprep.subr.mxu0 0.0
    %2388 = vmatpush2.msra.mxu0 0.0
    %2389 = vmatprep.subr.mxu0 0.0
    %2390 = vmatpush2.msra.mxu0 0.0
    %2391 = vmatprep.subr.mxu0 0.0
    %2392 = vmatpush2.msra.mxu0 0.0
    %2393 = vmatprep.mubr.f32.mxu0 0.0
    %2394 = vmatmul.mubr.f32.gmra.mxu0 %v1880
    %v2395 = vpop.f32.mrf.mxu0
    %v2396 = vadd.f32 0.0, %v2395
    %v2397 = vpop.f32.mrf.mxu0
    %2398 = vmatprep.mubr.f32.mxu0 0.0
    %2399 = vmatmul.mubr.f32.gmra.mxu0 %v1881
    %v2400 = vpop.f32.mrf.mxu0
    %v2401 = vadd.f32 0.0, %v2400
    %v2402 = vpop.f32.mrf.mxu0
    %2403 = vdwg.mxu0
    %v2404 = vadd.f32 %v2304, %v2396
    %v2405 = vadd.f32 %v2309, %v2401
    %2406 = vmatprep.subr.mxu0 0.0
    %2407 = vmatpush1.msra.mxu0 0.0
    %2408 = vmatprep.subr.mxu0 0.0
    %2409 = vmatpush1.msra.mxu0 0.0
    %2410 = vmatprep.subr.mxu0 0.0
    %2411 = vmatpush1.msra.mxu0 0.0
    %2412 = vmatprep.subr.mxu0 0.0
    %2413 = vmatpush1.msra.mxu0 0.0
    %2414 = vmatprep.subr.mxu0 0.0
    %2415 = vmatpush1.msra.mxu0 0.0
    %2416 = vmatprep.subr.mxu0 0.0
    %2417 = vmatpush1.msra.mxu0 0.0
    %2418 = vmatprep.subr.mxu0 0.0
    %2419 = vmatpush1.msra.mxu0 0.0
    %2420 = vmatprep.subr.mxu0 0.0
    %2421 = vmatpush1.msra.mxu0 0.0
    %2422 = vmatprep.subr.mxu0 0.0
    %2423 = vmatpush1.msra.mxu0 0.0
    %2424 = vmatprep.subr.mxu0 0.0
    %2425 = vmatpush1.msra.mxu0 0.0
    %2426 = vmatprep.subr.mxu0 0.0
    %2427 = vmatpush1.msra.mxu0 0.0
    %2428 = vmatprep.subr.mxu0 0.0
    %2429 = vmatpush1.msra.mxu0 0.0
    %2430 = vmatprep.subr.mxu0 0.0
    %2431 = vmatpush1.msra.mxu0 0.0
    %2432 = vmatprep.subr.mxu0 0.0
    %2433 = vmatpush1.msra.mxu0 0.0
    %2434 = vmatprep.subr.mxu0 0.0
    %2435 = vmatpush1.msra.mxu0 0.0
    %2436 = vmatprep.subr.mxu0 0.0
    %2437 = vmatpush1.msra.mxu0 %v1883
    %2438 = vmatprep.subr.mxu0 0.0
    %2439 = vmatpush2.msra.mxu0 0.0
    %2440 = vmatprep.subr.mxu0 0.0
    %2441 = vmatpush2.msra.mxu0 0.0
    %2442 = vmatprep.subr.mxu0 0.0
    %2443 = vmatpush2.msra.mxu0 0.0
    %2444 = vmatprep.subr.mxu0 0.0
    %2445 = vmatpush2.msra.mxu0 0.0
    %2446 = vmatprep.subr.mxu0 0.0
    %2447 = vmatpush2.msra.mxu0 0.0
    %2448 = vmatprep.subr.mxu0 0.0
    %2449 = vmatpush2.msra.mxu0 0.0
    %2450 = vmatprep.subr.mxu0 0.0
    %2451 = vmatpush2.msra.mxu0 0.0
    %2452 = vmatprep.subr.mxu0 0.0
    %2453 = vmatpush2.msra.mxu0 0.0
    %2454 = vmatprep.subr.mxu0 0.0
    %2455 = vmatpush2.msra.mxu0 0.0
    %2456 = vmatprep.subr.mxu0 0.0
    %2457 = vmatpush2.msra.mxu0 0.0
    %2458 = vmatprep.subr.mxu0 0.0
    %2459 = vmatpush2.msra.mxu0 0.0
    %2460 = vmatprep.subr.mxu0 0.0
    %2461 = vmatpush2.msra.mxu0 0.0
    %2462 = vmatprep.subr.mxu0 0.0
    %2463 = vmatpush2.msra.mxu0 0.0
    %2464 = vmatprep.subr.mxu0 0.0
    %2465 = vmatpush2.msra.mxu0 0.0
    %2466 = vmatprep.subr.mxu0 0.0
    %2467 = vmatpush2.msra.mxu0 0.0
    %2468 = vmatprep.subr.mxu0 0.0
    %2469 = vmatpush2.msra.mxu0 0.0
    %2470 = vmatprep.mubr.f32.mxu0 0.0
    %2471 = vmatmul.mubr.f32.gmra.mxu0 %v834
    %v2472 = vpop.f32.mrf.mxu0
    %v2473 = vadd.f32 0.0, %v2472
    %v2474 = vpop.f32.mrf.mxu0
    %2475 = vdwg.mxu0
    %s2476 = scalar_lea.vmem [#allocation16], 1024
    %v2477 = vld [vmem:[%s2476] sm:$0xff]
    %v2478 = vld [vmem:[%s2476 + $0x8] sm:$0xff]
    %v2479 = vld [vmem:[%s2476 + $0x10] sm:$0xff]
    %v2480 = vld [vmem:[%s2476 + $0x18] sm:$0xff]
    %v2481 = vld [vmem:[%s2476 + $0x20] sm:$0xff]
    %v2482 = vld [vmem:[%s2476 + $0x28] sm:$0xff]
    %v2483 = vld [vmem:[%s2476 + $0x30] sm:$0xff]
    %v2484 = vld [vmem:[%s2476 + $0x38] sm:$0xff]
    %v2485 = vld [vmem:[%s2476 + $0x40] sm:$0xff]
    %v2486 = vld [vmem:[%s2476 + $0x48] sm:$0xff]
    %v2487 = vld [vmem:[%s2476 + $0x50] sm:$0xff]
    %v2488 = vld [vmem:[%s2476 + $0x58] sm:$0xff]
    %v2489 = vld [vmem:[%s2476 + $0x60] sm:$0xff]
    %v2490 = vld [vmem:[%s2476 + $0x68] sm:$0xff]
    %v2491 = vld [vmem:[%s2476 + $0x70] sm:$0xff]
    %v2492 = vld [vmem:[%s2476 + $0x78] sm:$0xff]
    %s2493 = scalar_lea.vmem [#allocation17], 8
    %v2494 = vld [vmem:[%s2493] sm:$0x1]
    %v2496 = vlaneseq
    %v2497 = vshrl.u32 %v2496, 7
    %v2498 = vsub.s32 0, %v2497
    %v2499 = vrot.slane %v2494, %v2498
    %2501 = vmatprep.subr.mxu0 0.0
    %2502 = vmatpush1.msra.mxu0 %v2492
    %2503 = vmatprep.subr.mxu0 0.0
    %2504 = vmatpush1.msra.mxu0 %v2491
    %2505 = vmatprep.subr.mxu0 0.0
    %2506 = vmatpush1.msra.mxu0 %v2490
    %2507 = vmatprep.subr.mxu0 0.0
    %2508 = vmatpush1.msra.mxu0 %v2489
    %2509 = vmatprep.subr.mxu0 0.0
    %2510 = vmatpush1.msra.mxu0 %v2488
    %2511 = vmatprep.subr.mxu0 0.0
    %2512 = vmatpush1.msra.mxu0 %v2487
    %2513 = vmatprep.subr.mxu0 0.0
    %2514 = vmatpush1.msra.mxu0 %v2486
    %2515 = vmatprep.subr.mxu0 0.0
    %2516 = vmatpush1.msra.mxu0 %v2485
    %2517 = vmatprep.subr.mxu0 0.0
    %2518 = vmatpush1.msra.mxu0 %v2484
    %2519 = vmatprep.subr.mxu0 0.0
    %2520 = vmatpush1.msra.mxu0 %v2483
    %2521 = vmatprep.subr.mxu0 0.0
    %2522 = vmatpush1.msra.mxu0 %v2482
    %2523 = vmatprep.subr.mxu0 0.0
    %2524 = vmatpush1.msra.mxu0 %v2481
    %2525 = vmatprep.subr.mxu0 0.0
    %2526 = vmatpush1.msra.mxu0 %v2480
    %2527 = vmatprep.subr.mxu0 0.0
    %2528 = vmatpush1.msra.mxu0 %v2479
    %2529 = vmatprep.subr.mxu0 0.0
    %2530 = vmatpush1.msra.mxu0 %v2478
    %2531 = vmatprep.subr.mxu0 0.0
    %2532 = vmatpush1.msra.mxu0 %v2477
    %2533 = vmatprep.subr.mxu0 0.0
    %2534 = vmatpush2.msra.mxu0 0.0
    %2535 = vmatprep.subr.mxu0 0.0
    %2536 = vmatpush2.msra.mxu0 0.0
    %2537 = vmatprep.subr.mxu0 0.0
    %2538 = vmatpush2.msra.mxu0 0.0
    %2539 = vmatprep.subr.mxu0 0.0
    %2540 = vmatpush2.msra.mxu0 0.0
    %2541 = vmatprep.subr.mxu0 0.0
    %2542 = vmatpush2.msra.mxu0 0.0
    %2543 = vmatprep.subr.mxu0 0.0
    %2544 = vmatpush2.msra.mxu0 0.0
    %2545 = vmatprep.subr.mxu0 0.0
    %2546 = vmatpush2.msra.mxu0 0.0
    %2547 = vmatprep.subr.mxu0 0.0
    %2548 = vmatpush2.msra.mxu0 0.0
    %2549 = vmatprep.subr.mxu0 0.0
    %2550 = vmatpush2.msra.mxu0 0.0
    %2551 = vmatprep.subr.mxu0 0.0
    %2552 = vmatpush2.msra.mxu0 0.0
    %2553 = vmatprep.subr.mxu0 0.0
    %2554 = vmatpush2.msra.mxu0 0.0
    %2555 = vmatprep.subr.mxu0 0.0
    %2556 = vmatpush2.msra.mxu0 0.0
    %2557 = vmatprep.subr.mxu0 0.0
    %2558 = vmatpush2.msra.mxu0 0.0
    %2559 = vmatprep.subr.mxu0 0.0
    %2560 = vmatpush2.msra.mxu0 0.0
    %2561 = vmatprep.subr.mxu0 0.0
    %2562 = vmatpush2.msra.mxu0 0.0
    %2563 = vmatprep.subr.mxu0 0.0
    %2564 = vmatpush2.msra.mxu0 0.0
    %2565 = vmatprep.mubr.f32.mxu0 0.0
    %2566 = vmatmul.mubr.f32.gmra.mxu0 %v2473
    %v2567 = vpop.f32.mrf.mxu0
    %v2568 = vadd.f32 %v2499, %v2567
    %v2569 = vpop.f32.mrf.mxu0
    %2570 = vdwg.mxu0
    %s2571 = scalar_lea.vmem [#allocation19], 1024
    %v2572 = vld [vmem:[%s2571] sm:$0xff]
    %v2573 = vld [vmem:[%s2571 + $0x8] sm:$0xff]
    %v2574 = vld [vmem:[%s2571 + $0x10] sm:$0xff]
    %v2575 = vld [vmem:[%s2571 + $0x18] sm:$0xff]
    %v2576 = vld [vmem:[%s2571 + $0x20] sm:$0xff]
    %v2577 = vld [vmem:[%s2571 + $0x28] sm:$0xff]
    %v2578 = vld [vmem:[%s2571 + $0x30] sm:$0xff]
    %v2579 = vld [vmem:[%s2571 + $0x38] sm:$0xff]
    %v2580 = vld [vmem:[%s2571 + $0x40] sm:$0xff]
    %v2581 = vld [vmem:[%s2571 + $0x48] sm:$0xff]
    %v2582 = vld [vmem:[%s2571 + $0x50] sm:$0xff]
    %v2583 = vld [vmem:[%s2571 + $0x58] sm:$0xff]
    %v2584 = vld [vmem:[%s2571 + $0x60] sm:$0xff]
    %v2585 = vld [vmem:[%s2571 + $0x68] sm:$0xff]
    %v2586 = vld [vmem:[%s2571 + $0x70] sm:$0xff]
    %v2587 = vld [vmem:[%s2571 + $0x78] sm:$0xff]
    %2588 = vmatprep.subr.mxu0 0.0
    %2589 = vmatpush1.msra.mxu0 %v2587
    %2590 = vmatprep.subr.mxu0 0.0
    %2591 = vmatpush1.msra.mxu0 %v2586
    %2592 = vmatprep.subr.mxu0 0.0
    %2593 = vmatpush1.msra.mxu0 %v2585
    %2594 = vmatprep.subr.mxu0 0.0
    %2595 = vmatpush1.msra.mxu0 %v2584
    %2596 = vmatprep.subr.mxu0 0.0
    %2597 = vmatpush1.msra.mxu0 %v2583
    %2598 = vmatprep.subr.mxu0 0.0
    %2599 = vmatpush1.msra.mxu0 %v2582
    %2600 = vmatprep.subr.mxu0 0.0
    %2601 = vmatpush1.msra.mxu0 %v2581
    %2602 = vmatprep.subr.mxu0 0.0
    %2603 = vmatpush1.msra.mxu0 %v2580
    %2604 = vmatprep.subr.mxu0 0.0
    %2605 = vmatpush1.msra.mxu0 %v2579
    %2606 = vmatprep.subr.mxu0 0.0
    %2607 = vmatpush1.msra.mxu0 %v2578
    %2608 = vmatprep.subr.mxu0 0.0
    %2609 = vmatpush1.msra.mxu0 %v2577
    %2610 = vmatprep.subr.mxu0 0.0
    %2611 = vmatpush1.msra.mxu0 %v2576
    %2612 = vmatprep.subr.mxu0 0.0
    %2613 = vmatpush1.msra.mxu0 %v2575
    %2614 = vmatprep.subr.mxu0 0.0
    %2615 = vmatpush1.msra.mxu0 %v2574
    %2616 = vmatprep.subr.mxu0 0.0
    %2617 = vmatpush1.msra.mxu0 %v2573
    %2618 = vmatprep.subr.mxu0 0.0
    %2619 = vmatpush1.msra.mxu0 %v2572
    %2620 = vmatprep.subr.mxu0 0.0
    %2621 = vmatpush2.msra.mxu0 0.0
    %2622 = vmatprep.subr.mxu0 0.0
    %2623 = vmatpush2.msra.mxu0 0.0
    %2624 = vmatprep.subr.mxu0 0.0
    %2625 = vmatpush2.msra.mxu0 0.0
    %2626 = vmatprep.subr.mxu0 0.0
    %2627 = vmatpush2.msra.mxu0 0.0
    %2628 = vmatprep.subr.mxu0 0.0
    %2629 = vmatpush2.msra.mxu0 0.0
    %2630 = vmatprep.subr.mxu0 0.0
    %2631 = vmatpush2.msra.mxu0 0.0
    %2632 = vmatprep.subr.mxu0 0.0
    %2633 = vmatpush2.msra.mxu0 0.0
    %2634 = vmatprep.subr.mxu0 0.0
    %2635 = vmatpush2.msra.mxu0 0.0
    %2636 = vmatprep.subr.mxu0 0.0
    %2637 = vmatpush2.msra.mxu0 0.0
    %2638 = vmatprep.subr.mxu0 0.0
    %2639 = vmatpush2.msra.mxu0 0.0
    %2640 = vmatprep.subr.mxu0 0.0
    %2641 = vmatpush2.msra.mxu0 0.0
    %2642 = vmatprep.subr.mxu0 0.0
    %2643 = vmatpush2.msra.mxu0 0.0
    %2644 = vmatprep.subr.mxu0 0.0
    %2645 = vmatpush2.msra.mxu0 0.0
    %2646 = vmatprep.subr.mxu0 0.0
    %2647 = vmatpush2.msra.mxu0 0.0
    %2648 = vmatprep.subr.mxu0 0.0
    %2649 = vmatpush2.msra.mxu0 0.0
    %2650 = vmatprep.subr.mxu0 0.0
    %2651 = vmatpush2.msra.mxu0 0.0
    %2652 = vmatprep.mubr.f32.mxu0 0.0
    %2653 = vmatmul.mubr.f32.gmra.mxu0 %v1882
    %v2654 = vpop.f32.mrf.mxu0
    %v2655 = vadd.f32 0.0, %v2654
    %v2656 = vpop.f32.mrf.mxu0
    %2657 = vdwg.mxu0
    %v2658 = vadd.f32 %v2568, %v2655
    %2659 = vmatprep.subr.mxu0 0.0
    %2660 = vmatpush1.msra.mxu0 0.0
    %2661 = vmatprep.subr.mxu0 0.0
    %2662 = vmatpush1.msra.mxu0 0.0
    %2663 = vmatprep.subr.mxu0 0.0
    %2664 = vmatpush1.msra.mxu0 0.0
    %2665 = vmatprep.subr.mxu0 0.0
    %2666 = vmatpush1.msra.mxu0 0.0
    %2667 = vmatprep.subr.mxu0 0.0
    %2668 = vmatpush1.msra.mxu0 0.0
    %2669 = vmatprep.subr.mxu0 0.0
    %2670 = vmatpush1.msra.mxu0 0.0
    %2671 = vmatprep.subr.mxu0 0.0
    %2672 = vmatpush1.msra.mxu0 0.0
    %2673 = vmatprep.subr.mxu0 0.0
    %2674 = vmatpush1.msra.mxu0 0.0
    %2675 = vmatprep.subr.mxu0 0.0
    %2676 = vmatpush1.msra.mxu0 0.0
    %2677 = vmatprep.subr.mxu0 0.0
    %2678 = vmatpush1.msra.mxu0 0.0
    %2679 = vmatprep.subr.mxu0 0.0
    %2680 = vmatpush1.msra.mxu0 0.0
    %2681 = vmatprep.subr.mxu0 0.0
    %2682 = vmatpush1.msra.mxu0 0.0
    %2683 = vmatprep.subr.mxu0 0.0
    %2684 = vmatpush1.msra.mxu0 0.0
    %2685 = vmatprep.subr.mxu0 0.0
    %2686 = vmatpush1.msra.mxu0 0.0
    %2687 = vmatprep.subr.mxu0 0.0
    %2688 = vmatpush1.msra.mxu0 0.0
    %2689 = vmatprep.subr.mxu0 0.0
    %2690 = vmatpush1.msra.mxu0 %v1882
    %2691 = vmatprep.subr.mxu0 0.0
    %2692 = vmatpush2.msra.mxu0 0.0
    %2693 = vmatprep.subr.mxu0 0.0
    %2694 = vmatpush2.msra.mxu0 0.0
    %2695 = vmatprep.subr.mxu0 0.0
    %2696 = vmatpush2.msra.mxu0 0.0
    %2697 = vmatprep.subr.mxu0 0.0
    %2698 = vmatpush2.msra.mxu0 0.0
    %2699 = vmatprep.subr.mxu0 0.0
    %2700 = vmatpush2.msra.mxu0 0.0
    %2701 = vmatprep.subr.mxu0 0.0
    %2702 = vmatpush2.msra.mxu0 0.0
    %2703 = vmatprep.subr.mxu0 0.0
    %2704 = vmatpush2.msra.mxu0 0.0
    %2705 = vmatprep.subr.mxu0 0.0
    %2706 = vmatpush2.msra.mxu0 0.0
    %2707 = vmatprep.subr.mxu0 0.0
    %2708 = vmatpush2.msra.mxu0 0.0
    %2709 = vmatprep.subr.mxu0 0.0
    %2710 = vmatpush2.msra.mxu0 0.0
    %2711 = vmatprep.subr.mxu0 0.0
    %2712 = vmatpush2.msra.mxu0 0.0
    %2713 = vmatprep.subr.mxu0 0.0
    %2714 = vmatpush2.msra.mxu0 0.0
    %2715 = vmatprep.subr.mxu0 0.0
    %2716 = vmatpush2.msra.mxu0 0.0
    %2717 = vmatprep.subr.mxu0 0.0
    %2718 = vmatpush2.msra.mxu0 0.0
    %2719 = vmatprep.subr.mxu0 0.0
    %2720 = vmatpush2.msra.mxu0 0.0
    %2721 = vmatprep.subr.mxu0 0.0
    %2722 = vmatpush2.msra.mxu0 0.0
    %2723 = vmatprep.mubr.f32.mxu0 0.0
    %2724 = vmatmul.mubr.f32.gmra.mxu0 %v1090
    %v2725 = vpop.f32.mrf.mxu0
    %v2726 = vadd.f32 0.0, %v2725
    %v2727 = vpop.f32.mrf.mxu0
    %2728 = vdwg.mxu0
    %s2729 = scalar_lea.vmem [#allocation16], 1152
    %v2730 = vld [vmem:[%s2729] sm:$0xff]
    %v2731 = vld [vmem:[%s2729 + $0x8] sm:$0xff]
    %v2732 = vld [vmem:[%s2729 + $0x10] sm:$0xff]
    %v2733 = vld [vmem:[%s2729 + $0x18] sm:$0xff]
    %v2734 = vld [vmem:[%s2729 + $0x20] sm:$0xff]
    %v2735 = vld [vmem:[%s2729 + $0x28] sm:$0xff]
    %v2736 = vld [vmem:[%s2729 + $0x30] sm:$0xff]
    %v2737 = vld [vmem:[%s2729 + $0x38] sm:$0xff]
    %v2738 = vld [vmem:[%s2729 + $0x40] sm:$0xff]
    %v2739 = vld [vmem:[%s2729 + $0x48] sm:$0xff]
    %v2740 = vld [vmem:[%s2729 + $0x50] sm:$0xff]
    %v2741 = vld [vmem:[%s2729 + $0x58] sm:$0xff]
    %v2742 = vld [vmem:[%s2729 + $0x60] sm:$0xff]
    %v2743 = vld [vmem:[%s2729 + $0x68] sm:$0xff]
    %v2744 = vld [vmem:[%s2729 + $0x70] sm:$0xff]
    %v2745 = vld [vmem:[%s2729 + $0x78] sm:$0xff]
    %s2746 = scalar_lea.vmem [#allocation17], 9
    %v2747 = vld [vmem:[%s2746] sm:$0x1]
    %v2749 = vlaneseq
    %v2750 = vshrl.u32 %v2749, 7
    %v2751 = vsub.s32 0, %v2750
    %v2752 = vrot.slane %v2747, %v2751
    %2754 = vmatprep.subr.mxu0 0.0
    %2755 = vmatpush1.msra.mxu0 %v2745
    %2756 = vmatprep.subr.mxu0 0.0
    %2757 = vmatpush1.msra.mxu0 %v2744
    %2758 = vmatprep.subr.mxu0 0.0
    %2759 = vmatpush1.msra.mxu0 %v2743
    %2760 = vmatprep.subr.mxu0 0.0
    %2761 = vmatpush1.msra.mxu0 %v2742
    %2762 = vmatprep.subr.mxu0 0.0
    %2763 = vmatpush1.msra.mxu0 %v2741
    %2764 = vmatprep.subr.mxu0 0.0
    %2765 = vmatpush1.msra.mxu0 %v2740
    %2766 = vmatprep.subr.mxu0 0.0
    %2767 = vmatpush1.msra.mxu0 %v2739
    %2768 = vmatprep.subr.mxu0 0.0
    %2769 = vmatpush1.msra.mxu0 %v2738
    %2770 = vmatprep.subr.mxu0 0.0
    %2771 = vmatpush1.msra.mxu0 %v2737
    %2772 = vmatprep.subr.mxu0 0.0
    %2773 = vmatpush1.msra.mxu0 %v2736
    %2774 = vmatprep.subr.mxu0 0.0
    %2775 = vmatpush1.msra.mxu0 %v2735
    %2776 = vmatprep.subr.mxu0 0.0
    %2777 = vmatpush1.msra.mxu0 %v2734
    %2778 = vmatprep.subr.mxu0 0.0
    %2779 = vmatpush1.msra.mxu0 %v2733
    %2780 = vmatprep.subr.mxu0 0.0
    %2781 = vmatpush1.msra.mxu0 %v2732
    %2782 = vmatprep.subr.mxu0 0.0
    %2783 = vmatpush1.msra.mxu0 %v2731
    %2784 = vmatprep.subr.mxu0 0.0
    %2785 = vmatpush1.msra.mxu0 %v2730
    %2786 = vmatprep.subr.mxu0 0.0
    %2787 = vmatpush2.msra.mxu0 0.0
    %2788 = vmatprep.subr.mxu0 0.0
    %2789 = vmatpush2.msra.mxu0 0.0
    %2790 = vmatprep.subr.mxu0 0.0
    %2791 = vmatpush2.msra.mxu0 0.0
    %2792 = vmatprep.subr.mxu0 0.0
    %2793 = vmatpush2.msra.mxu0 0.0
    %2794 = vmatprep.subr.mxu0 0.0
    %2795 = vmatpush2.msra.mxu0 0.0
    %2796 = vmatprep.subr.mxu0 0.0
    %2797 = vmatpush2.msra.mxu0 0.0
    %2798 = vmatprep.subr.mxu0 0.0
    %2799 = vmatpush2.msra.mxu0 0.0
    %2800 = vmatprep.subr.mxu0 0.0
    %2801 = vmatpush2.msra.mxu0 0.0
    %2802 = vmatprep.subr.mxu0 0.0
    %2803 = vmatpush2.msra.mxu0 0.0
    %2804 = vmatprep.subr.mxu0 0.0
    %2805 = vmatpush2.msra.mxu0 0.0
    %2806 = vmatprep.subr.mxu0 0.0
    %2807 = vmatpush2.msra.mxu0 0.0
    %2808 = vmatprep.subr.mxu0 0.0
    %2809 = vmatpush2.msra.mxu0 0.0
    %2810 = vmatprep.subr.mxu0 0.0
    %2811 = vmatpush2.msra.mxu0 0.0
    %2812 = vmatprep.subr.mxu0 0.0
    %2813 = vmatpush2.msra.mxu0 0.0
    %2814 = vmatprep.subr.mxu0 0.0
    %2815 = vmatpush2.msra.mxu0 0.0
    %2816 = vmatprep.subr.mxu0 0.0
    %2817 = vmatpush2.msra.mxu0 0.0
    %2818 = vmatprep.mubr.f32.mxu0 0.0
    %2819 = vmatmul.mubr.f32.gmra.mxu0 %v2726
    %v2820 = vpop.f32.mrf.mxu0
    %v2821 = vadd.f32 %v2752, %v2820
    %v2822 = vpop.f32.mrf.mxu0
    %2823 = vdwg.mxu0
    %s2824 = scalar_lea.vmem [#allocation19], 1152
    %v2825 = vld [vmem:[%s2824] sm:$0xff]
    %v2826 = vld [vmem:[%s2824 + $0x8] sm:$0xff]
    %v2827 = vld [vmem:[%s2824 + $0x10] sm:$0xff]
    %v2828 = vld [vmem:[%s2824 + $0x18] sm:$0xff]
    %v2829 = vld [vmem:[%s2824 + $0x20] sm:$0xff]
    %v2830 = vld [vmem:[%s2824 + $0x28] sm:$0xff]
    %v2831 = vld [vmem:[%s2824 + $0x30] sm:$0xff]
    %v2832 = vld [vmem:[%s2824 + $0x38] sm:$0xff]
    %v2833 = vld [vmem:[%s2824 + $0x40] sm:$0xff]
    %v2834 = vld [vmem:[%s2824 + $0x48] sm:$0xff]
    %v2835 = vld [vmem:[%s2824 + $0x50] sm:$0xff]
    %v2836 = vld [vmem:[%s2824 + $0x58] sm:$0xff]
    %v2837 = vld [vmem:[%s2824 + $0x60] sm:$0xff]
    %v2838 = vld [vmem:[%s2824 + $0x68] sm:$0xff]
    %v2839 = vld [vmem:[%s2824 + $0x70] sm:$0xff]
    %v2840 = vld [vmem:[%s2824 + $0x78] sm:$0xff]
    %2841 = vmatprep.subr.mxu0 0.0
    %2842 = vmatpush1.msra.mxu0 %v2840
    %2843 = vmatprep.subr.mxu0 0.0
    %2844 = vmatpush1.msra.mxu0 %v2839
    %2845 = vmatprep.subr.mxu0 0.0
    %2846 = vmatpush1.msra.mxu0 %v2838
    %2847 = vmatprep.subr.mxu0 0.0
    %2848 = vmatpush1.msra.mxu0 %v2837
    %2849 = vmatprep.subr.mxu0 0.0
    %2850 = vmatpush1.msra.mxu0 %v2836
    %2851 = vmatprep.subr.mxu0 0.0
    %2852 = vmatpush1.msra.mxu0 %v2835
    %2853 = vmatprep.subr.mxu0 0.0
    %2854 = vmatpush1.msra.mxu0 %v2834
    %2855 = vmatprep.subr.mxu0 0.0
    %2856 = vmatpush1.msra.mxu0 %v2833
    %2857 = vmatprep.subr.mxu0 0.0
    %2858 = vmatpush1.msra.mxu0 %v2832
    %2859 = vmatprep.subr.mxu0 0.0
    %2860 = vmatpush1.msra.mxu0 %v2831
    %2861 = vmatprep.subr.mxu0 0.0
    %2862 = vmatpush1.msra.mxu0 %v2830
    %2863 = vmatprep.subr.mxu0 0.0
    %2864 = vmatpush1.msra.mxu0 %v2829
    %2865 = vmatprep.subr.mxu0 0.0
    %2866 = vmatpush1.msra.mxu0 %v2828
    %2867 = vmatprep.subr.mxu0 0.0
    %2868 = vmatpush1.msra.mxu0 %v2827
    %2869 = vmatprep.subr.mxu0 0.0
    %2870 = vmatpush1.msra.mxu0 %v2826
    %2871 = vmatprep.subr.mxu0 0.0
    %2872 = vmatpush1.msra.mxu0 %v2825
    %2873 = vmatprep.subr.mxu0 0.0
    %2874 = vmatpush2.msra.mxu0 0.0
    %2875 = vmatprep.subr.mxu0 0.0
    %2876 = vmatpush2.msra.mxu0 0.0
    %2877 = vmatprep.subr.mxu0 0.0
    %2878 = vmatpush2.msra.mxu0 0.0
    %2879 = vmatprep.subr.mxu0 0.0
    %2880 = vmatpush2.msra.mxu0 0.0
    %2881 = vmatprep.subr.mxu0 0.0
    %2882 = vmatpush2.msra.mxu0 0.0
    %2883 = vmatprep.subr.mxu0 0.0
    %2884 = vmatpush2.msra.mxu0 0.0
    %2885 = vmatprep.subr.mxu0 0.0
    %2886 = vmatpush2.msra.mxu0 0.0
    %2887 = vmatprep.subr.mxu0 0.0
    %2888 = vmatpush2.msra.mxu0 0.0
    %2889 = vmatprep.subr.mxu0 0.0
    %2890 = vmatpush2.msra.mxu0 0.0
    %2891 = vmatprep.subr.mxu0 0.0
    %2892 = vmatpush2.msra.mxu0 0.0
    %2893 = vmatprep.subr.mxu0 0.0
    %2894 = vmatpush2.msra.mxu0 0.0
    %2895 = vmatprep.subr.mxu0 0.0
    %2896 = vmatpush2.msra.mxu0 0.0
    %2897 = vmatprep.subr.mxu0 0.0
    %2898 = vmatpush2.msra.mxu0 0.0
    %2899 = vmatprep.subr.mxu0 0.0
    %2900 = vmatpush2.msra.mxu0 0.0
    %2901 = vmatprep.subr.mxu0 0.0
    %2902 = vmatpush2.msra.mxu0 0.0
    %2903 = vmatprep.subr.mxu0 0.0
    %2904 = vmatpush2.msra.mxu0 0.0
    %2905 = vmatprep.mubr.f32.mxu0 0.0
    %2906 = vmatmul.mubr.f32.gmra.mxu0 %v1883
    %v2907 = vpop.f32.mrf.mxu0
    %v2908 = vadd.f32 0.0, %v2907
    %v2909 = vpop.f32.mrf.mxu0
    %2910 = vdwg.mxu0
    %v2911 = vadd.f32 %v2821, %v2908
    %2912 = vmatprep.subr.mxu0 0.0
    %2913 = vmatpush1.msra.mxu0 0.0
    %2914 = vmatprep.subr.mxu0 0.0
    %2915 = vmatpush1.msra.mxu0 0.0
    %2916 = vmatprep.subr.mxu0 0.0
    %2917 = vmatpush1.msra.mxu0 0.0
    %2918 = vmatprep.subr.mxu0 0.0
    %2919 = vmatpush1.msra.mxu0 0.0
    %2920 = vmatprep.subr.mxu0 0.0
    %2921 = vmatpush1.msra.mxu0 0.0
    %2922 = vmatprep.subr.mxu0 0.0
    %2923 = vmatpush1.msra.mxu0 0.0
    %2924 = vmatprep.subr.mxu0 0.0
    %2925 = vmatpush1.msra.mxu0 0.0
    %2926 = vmatprep.subr.mxu0 0.0
    %2927 = vmatpush1.msra.mxu0 0.0
    %2928 = vmatprep.subr.mxu0 0.0
    %2929 = vmatpush1.msra.mxu0 0.0
    %2930 = vmatprep.subr.mxu0 0.0
    %2931 = vmatpush1.msra.mxu0 0.0
    %2932 = vmatprep.subr.mxu0 0.0
    %2933 = vmatpush1.msra.mxu0 0.0
    %2934 = vmatprep.subr.mxu0 0.0
    %2935 = vmatpush1.msra.mxu0 0.0
    %2936 = vmatprep.subr.mxu0 0.0
    %2937 = vmatpush1.msra.mxu0 0.0
    %2938 = vmatprep.subr.mxu0 0.0
    %2939 = vmatpush1.msra.mxu0 0.0
    %2940 = vmatprep.subr.mxu0 0.0
    %2941 = vmatpush1.msra.mxu0 %v1881
    %2942 = vmatprep.subr.mxu0 0.0
    %2943 = vmatpush1.msra.mxu0 %v1880
    %2944 = vmatprep.subr.mxu0 0.0
    %2945 = vmatpush2.msra.mxu0 0.0
    %2946 = vmatprep.subr.mxu0 0.0
    %2947 = vmatpush2.msra.mxu0 0.0
    %2948 = vmatprep.subr.mxu0 0.0
    %2949 = vmatpush2.msra.mxu0 0.0
    %2950 = vmatprep.subr.mxu0 0.0
    %2951 = vmatpush2.msra.mxu0 0.0
    %2952 = vmatprep.subr.mxu0 0.0
    %2953 = vmatpush2.msra.mxu0 0.0
    %2954 = vmatprep.subr.mxu0 0.0
    %2955 = vmatpush2.msra.mxu0 0.0
    %2956 = vmatprep.subr.mxu0 0.0
    %2957 = vmatpush2.msra.mxu0 0.0
    %2958 = vmatprep.subr.mxu0 0.0
    %2959 = vmatpush2.msra.mxu0 0.0
    %2960 = vmatprep.subr.mxu0 0.0
    %2961 = vmatpush2.msra.mxu0 0.0
    %2962 = vmatprep.subr.mxu0 0.0
    %2963 = vmatpush2.msra.mxu0 0.0
    %2964 = vmatprep.subr.mxu0 0.0
    %2965 = vmatpush2.msra.mxu0 0.0
    %2966 = vmatprep.subr.mxu0 0.0
    %2967 = vmatpush2.msra.mxu0 0.0
    %2968 = vmatprep.subr.mxu0 0.0
    %2969 = vmatpush2.msra.mxu0 0.0
    %2970 = vmatprep.subr.mxu0 0.0
    %2971 = vmatpush2.msra.mxu0 0.0
    %2972 = vmatprep.subr.mxu0 0.0
    %2973 = vmatpush2.msra.mxu0 0.0
    %2974 = vmatprep.subr.mxu0 0.0
    %2975 = vmatpush2.msra.mxu0 0.0
    %2976 = vmatprep.mubr.f32.mxu0 0.0
    %2977 = vmatmul.mubr.f32.gmra.mxu0 %v1346
    %v2978 = vpop.f32.mrf.mxu0
    %v2979 = vadd.f32 0.0, %v2978
    %v2980 = vpop.f32.mrf.mxu0
    %2981 = vdwg.mxu0
    %s2982 = scalar_lea.vmem [#allocation16], 1280
    %v2983 = vld [vmem:[%s2982] sm:$0xff]
    %v2984 = vld [vmem:[%s2982 + $0x8] sm:$0xff]
    %v2985 = vld [vmem:[%s2982 + $0x10] sm:$0xff]
    %v2986 = vld [vmem:[%s2982 + $0x18] sm:$0xff]
    %v2987 = vld [vmem:[%s2982 + $0x20] sm:$0xff]
    %v2988 = vld [vmem:[%s2982 + $0x28] sm:$0xff]
    %v2989 = vld [vmem:[%s2982 + $0x30] sm:$0xff]
    %v2990 = vld [vmem:[%s2982 + $0x38] sm:$0xff]
    %v2991 = vld [vmem:[%s2982 + $0x40] sm:$0xff]
    %v2992 = vld [vmem:[%s2982 + $0x48] sm:$0xff]
    %v2993 = vld [vmem:[%s2982 + $0x50] sm:$0xff]
    %v2994 = vld [vmem:[%s2982 + $0x58] sm:$0xff]
    %v2995 = vld [vmem:[%s2982 + $0x60] sm:$0xff]
    %v2996 = vld [vmem:[%s2982 + $0x68] sm:$0xff]
    %v2997 = vld [vmem:[%s2982 + $0x70] sm:$0xff]
    %v2998 = vld [vmem:[%s2982 + $0x78] sm:$0xff]
    %s2999 = scalar_lea.vmem [#allocation17], 10
    %v3000 = vld [vmem:[%s2999] sm:$0x1]
    %v3002 = vlaneseq
    %v3003 = vshrl.u32 %v3002, 7
    %v3004 = vsub.s32 0, %v3003
    %v3005 = vrot.slane %v3000, %v3004
    %3007 = vmatprep.subr.mxu0 0.0
    %3008 = vmatpush1.msra.mxu0 %v2998
    %3009 = vmatprep.subr.mxu0 0.0
    %3010 = vmatpush1.msra.mxu0 %v2997
    %3011 = vmatprep.subr.mxu0 0.0
    %3012 = vmatpush1.msra.mxu0 %v2996
    %3013 = vmatprep.subr.mxu0 0.0
    %3014 = vmatpush1.msra.mxu0 %v2995
    %3015 = vmatprep.subr.mxu0 0.0
    %3016 = vmatpush1.msra.mxu0 %v2994
    %3017 = vmatprep.subr.mxu0 0.0
    %3018 = vmatpush1.msra.mxu0 %v2993
    %3019 = vmatprep.subr.mxu0 0.0
    %3020 = vmatpush1.msra.mxu0 %v2992
    %3021 = vmatprep.subr.mxu0 0.0
    %3022 = vmatpush1.msra.mxu0 %v2991
    %3023 = vmatprep.subr.mxu0 0.0
    %3024 = vmatpush1.msra.mxu0 %v2990
    %3025 = vmatprep.subr.mxu0 0.0
    %3026 = vmatpush1.msra.mxu0 %v2989
    %3027 = vmatprep.subr.mxu0 0.0
    %3028 = vmatpush1.msra.mxu0 %v2988
    %3029 = vmatprep.subr.mxu0 0.0
    %3030 = vmatpush1.msra.mxu0 %v2987
    %3031 = vmatprep.subr.mxu0 0.0
    %3032 = vmatpush1.msra.mxu0 %v2986
    %3033 = vmatprep.subr.mxu0 0.0
    %3034 = vmatpush1.msra.mxu0 %v2985
    %3035 = vmatprep.subr.mxu0 0.0
    %3036 = vmatpush1.msra.mxu0 %v2984
    %3037 = vmatprep.subr.mxu0 0.0
    %3038 = vmatpush1.msra.mxu0 %v2983
    %3039 = vmatprep.subr.mxu0 0.0
    %3040 = vmatpush2.msra.mxu0 0.0
    %3041 = vmatprep.subr.mxu0 0.0
    %3042 = vmatpush2.msra.mxu0 0.0
    %3043 = vmatprep.subr.mxu0 0.0
    %3044 = vmatpush2.msra.mxu0 0.0
    %3045 = vmatprep.subr.mxu0 0.0
    %3046 = vmatpush2.msra.mxu0 0.0
    %3047 = vmatprep.subr.mxu0 0.0
    %3048 = vmatpush2.msra.mxu0 0.0
    %3049 = vmatprep.subr.mxu0 0.0
    %3050 = vmatpush2.msra.mxu0 0.0
    %3051 = vmatprep.subr.mxu0 0.0
    %3052 = vmatpush2.msra.mxu0 0.0
    %3053 = vmatprep.subr.mxu0 0.0
    %3054 = vmatpush2.msra.mxu0 0.0
    %3055 = vmatprep.subr.mxu0 0.0
    %3056 = vmatpush2.msra.mxu0 0.0
    %3057 = vmatprep.subr.mxu0 0.0
    %3058 = vmatpush2.msra.mxu0 0.0
    %3059 = vmatprep.subr.mxu0 0.0
    %3060 = vmatpush2.msra.mxu0 0.0
    %3061 = vmatprep.subr.mxu0 0.0
    %3062 = vmatpush2.msra.mxu0 0.0
    %3063 = vmatprep.subr.mxu0 0.0
    %3064 = vmatpush2.msra.mxu0 0.0
    %3065 = vmatprep.subr.mxu0 0.0
    %3066 = vmatpush2.msra.mxu0 0.0
    %3067 = vmatprep.subr.mxu0 0.0
    %3068 = vmatpush2.msra.mxu0 0.0
    %3069 = vmatprep.subr.mxu0 0.0
    %3070 = vmatpush2.msra.mxu0 0.0
    %3071 = vmatprep.mubr.f32.mxu0 0.0
    %3072 = vmatmul.mubr.f32.gmra.mxu0 %v2979
    %v3073 = vpop.f32.mrf.mxu0
    %v3074 = vadd.f32 %v3005, %v3073
    %v3075 = vpop.f32.mrf.mxu0
    %3076 = vdwg.mxu0
    %s3077 = scalar_lea.vmem [#allocation19], 1280
    %v3078 = vld [vmem:[%s3077] sm:$0xff]
    %v3079 = vld [vmem:[%s3077 + $0x8] sm:$0xff]
    %v3080 = vld [vmem:[%s3077 + $0x10] sm:$0xff]
    %v3081 = vld [vmem:[%s3077 + $0x18] sm:$0xff]
    %v3082 = vld [vmem:[%s3077 + $0x20] sm:$0xff]
    %v3083 = vld [vmem:[%s3077 + $0x28] sm:$0xff]
    %v3084 = vld [vmem:[%s3077 + $0x30] sm:$0xff]
    %v3085 = vld [vmem:[%s3077 + $0x38] sm:$0xff]
    %v3086 = vld [vmem:[%s3077 + $0x40] sm:$0xff]
    %v3087 = vld [vmem:[%s3077 + $0x48] sm:$0xff]
    %v3088 = vld [vmem:[%s3077 + $0x50] sm:$0xff]
    %v3089 = vld [vmem:[%s3077 + $0x58] sm:$0xff]
    %v3090 = vld [vmem:[%s3077 + $0x60] sm:$0xff]
    %v3091 = vld [vmem:[%s3077 + $0x68] sm:$0xff]
    %v3092 = vld [vmem:[%s3077 + $0x70] sm:$0xff]
    %v3093 = vld [vmem:[%s3077 + $0x78] sm:$0xff]
    %3094 = vmatprep.subr.mxu0 0.0
    %3095 = vmatpush1.msra.mxu0 %v3093
    %3096 = vmatprep.subr.mxu0 0.0
    %3097 = vmatpush1.msra.mxu0 %v3092
    %3098 = vmatprep.subr.mxu0 0.0
    %3099 = vmatpush1.msra.mxu0 %v3091
    %3100 = vmatprep.subr.mxu0 0.0
    %3101 = vmatpush1.msra.mxu0 %v3090
    %3102 = vmatprep.subr.mxu0 0.0
    %3103 = vmatpush1.msra.mxu0 %v3089
    %3104 = vmatprep.subr.mxu0 0.0
    %3105 = vmatpush1.msra.mxu0 %v3088
    %3106 = vmatprep.subr.mxu0 0.0
    %3107 = vmatpush1.msra.mxu0 %v3087
    %3108 = vmatprep.subr.mxu0 0.0
    %3109 = vmatpush1.msra.mxu0 %v3086
    %3110 = vmatprep.subr.mxu0 0.0
    %3111 = vmatpush1.msra.mxu0 %v3085
    %3112 = vmatprep.subr.mxu0 0.0
    %3113 = vmatpush1.msra.mxu0 %v3084
    %3114 = vmatprep.subr.mxu0 0.0
    %3115 = vmatpush1.msra.mxu0 %v3083
    %3116 = vmatprep.subr.mxu0 0.0
    %3117 = vmatpush1.msra.mxu0 %v3082
    %3118 = vmatprep.subr.mxu0 0.0
    %3119 = vmatpush1.msra.mxu0 %v3081
    %3120 = vmatprep.subr.mxu0 0.0
    %3121 = vmatpush1.msra.mxu0 %v3080
    %3122 = vmatprep.subr.mxu0 0.0
    %3123 = vmatpush1.msra.mxu0 %v3079
    %3124 = vmatprep.subr.mxu0 0.0
    %3125 = vmatpush1.msra.mxu0 %v3078
    %3126 = vmatprep.subr.mxu0 0.0
    %3127 = vmatpush2.msra.mxu0 0.0
    %3128 = vmatprep.subr.mxu0 0.0
    %3129 = vmatpush2.msra.mxu0 0.0
    %3130 = vmatprep.subr.mxu0 0.0
    %3131 = vmatpush2.msra.mxu0 0.0
    %3132 = vmatprep.subr.mxu0 0.0
    %3133 = vmatpush2.msra.mxu0 0.0
    %3134 = vmatprep.subr.mxu0 0.0
    %3135 = vmatpush2.msra.mxu0 0.0
    %3136 = vmatprep.subr.mxu0 0.0
    %3137 = vmatpush2.msra.mxu0 0.0
    %3138 = vmatprep.subr.mxu0 0.0
    %3139 = vmatpush2.msra.mxu0 0.0
    %3140 = vmatprep.subr.mxu0 0.0
    %3141 = vmatpush2.msra.mxu0 0.0
    %3142 = vmatprep.subr.mxu0 0.0
    %3143 = vmatpush2.msra.mxu0 0.0
    %3144 = vmatprep.subr.mxu0 0.0
    %3145 = vmatpush2.msra.mxu0 0.0
    %3146 = vmatprep.subr.mxu0 0.0
    %3147 = vmatpush2.msra.mxu0 0.0
    %3148 = vmatprep.subr.mxu0 0.0
    %3149 = vmatpush2.msra.mxu0 0.0
    %3150 = vmatprep.subr.mxu0 0.0
    %3151 = vmatpush2.msra.mxu0 0.0
    %3152 = vmatprep.subr.mxu0 0.0
    %3153 = vmatpush2.msra.mxu0 0.0
    %3154 = vmatprep.subr.mxu0 0.0
    %3155 = vmatpush2.msra.mxu0 0.0
    %3156 = vmatprep.subr.mxu0 0.0
    %3157 = vmatpush2.msra.mxu0 0.0
    %3158 = vmatprep.mubr.f32.mxu0 0.0
    %3159 = vmatmul.mubr.f32.gmra.mxu0 %v1883
    %v3160 = vpop.f32.mrf.mxu0
    %v3161 = vadd.f32 0.0, %v3160
    %v3162 = vpop.f32.mrf.mxu0
    %3163 = vdwg.mxu0
    %v3164 = vadd.f32 %v3074, %v3161
    %v3165 = vadd.f32 %v2911, %v3164
    %3166 = vmatprep.subr.mxu0 0.0
    %3167 = vmatpush1.msra.mxu0 0.0
    %3168 = vmatprep.subr.mxu0 0.0
    %3169 = vmatpush1.msra.mxu0 0.0
    %3170 = vmatprep.subr.mxu0 0.0
    %3171 = vmatpush1.msra.mxu0 0.0
    %3172 = vmatprep.subr.mxu0 0.0
    %3173 = vmatpush1.msra.mxu0 0.0
    %3174 = vmatprep.subr.mxu0 0.0
    %3175 = vmatpush1.msra.mxu0 0.0
    %3176 = vmatprep.subr.mxu0 0.0
    %3177 = vmatpush1.msra.mxu0 0.0
    %3178 = vmatprep.subr.mxu0 0.0
    %3179 = vmatpush1.msra.mxu0 0.0
    %3180 = vmatprep.subr.mxu0 0.0
    %3181 = vmatpush1.msra.mxu0 0.0
    %3182 = vmatprep.subr.mxu0 0.0
    %3183 = vmatpush1.msra.mxu0 0.0
    %3184 = vmatprep.subr.mxu0 0.0
    %3185 = vmatpush1.msra.mxu0 0.0
    %3186 = vmatprep.subr.mxu0 0.0
    %3187 = vmatpush1.msra.mxu0 0.0
    %3188 = vmatprep.subr.mxu0 0.0
    %3189 = vmatpush1.msra.mxu0 0.0
    %3190 = vmatprep.subr.mxu0 0.0
    %3191 = vmatpush1.msra.mxu0 0.0
    %3192 = vmatprep.subr.mxu0 0.0
    %3193 = vmatpush1.msra.mxu0 0.0
    %3194 = vmatprep.subr.mxu0 0.0
    %3195 = vmatpush1.msra.mxu0 0.0
    %3196 = vmatprep.subr.mxu0 0.0
    %3197 = vmatpush1.msra.mxu0 %v1883
    %3198 = vmatprep.subr.mxu0 0.0
    %3199 = vmatpush2.msra.mxu0 0.0
    %3200 = vmatprep.subr.mxu0 0.0
    %3201 = vmatpush2.msra.mxu0 0.0
    %3202 = vmatprep.subr.mxu0 0.0
    %3203 = vmatpush2.msra.mxu0 0.0
    %3204 = vmatprep.subr.mxu0 0.0
    %3205 = vmatpush2.msra.mxu0 0.0
    %3206 = vmatprep.subr.mxu0 0.0
    %3207 = vmatpush2.msra.mxu0 0.0
    %3208 = vmatprep.subr.mxu0 0.0
    %3209 = vmatpush2.msra.mxu0 0.0
    %3210 = vmatprep.subr.mxu0 0.0
    %3211 = vmatpush2.msra.mxu0 0.0
    %3212 = vmatprep.subr.mxu0 0.0
    %3213 = vmatpush2.msra.mxu0 0.0
    %3214 = vmatprep.subr.mxu0 0.0
    %3215 = vmatpush2.msra.mxu0 0.0
    %3216 = vmatprep.subr.mxu0 0.0
    %3217 = vmatpush2.msra.mxu0 0.0
    %3218 = vmatprep.subr.mxu0 0.0
    %3219 = vmatpush2.msra.mxu0 0.0
    %3220 = vmatprep.subr.mxu0 0.0
    %3221 = vmatpush2.msra.mxu0 0.0
    %3222 = vmatprep.subr.mxu0 0.0
    %3223 = vmatpush2.msra.mxu0 0.0
    %3224 = vmatprep.subr.mxu0 0.0
    %3225 = vmatpush2.msra.mxu0 0.0
    %3226 = vmatprep.subr.mxu0 0.0
    %3227 = vmatpush2.msra.mxu0 0.0
    %3228 = vmatprep.subr.mxu0 0.0
    %3229 = vmatpush2.msra.mxu0 0.0
    %3230 = vmatprep.mubr.f32.mxu0 0.0
    %3231 = vmatmul.mubr.f32.gmra.mxu0 %v1603
    %v3232 = vpop.f32.mrf.mxu0
    %v3233 = vadd.f32 0.0, %v3232
    %v3234 = vpop.f32.mrf.mxu0
    %3235 = vmatprep.mubr.f32.mxu0 0.0
    %3236 = vmatmul.mubr.f32.gmra.mxu0 %v1606
    %v3237 = vpop.f32.mrf.mxu0
    %v3238 = vadd.f32 0.0, %v3237
    %v3239 = vpop.f32.mrf.mxu0
    %3240 = vdwg.mxu0
    %s3241 = scalar_lea.vmem [#allocation16], 1408
    %v3242 = vld [vmem:[%s3241] sm:$0xff]
    %v3243 = vld [vmem:[%s3241 + $0x8] sm:$0xff]
    %v3244 = vld [vmem:[%s3241 + $0x10] sm:$0xff]
    %v3245 = vld [vmem:[%s3241 + $0x18] sm:$0xff]
    %v3246 = vld [vmem:[%s3241 + $0x20] sm:$0xff]
    %v3247 = vld [vmem:[%s3241 + $0x28] sm:$0xff]
    %v3248 = vld [vmem:[%s3241 + $0x30] sm:$0xff]
    %v3249 = vld [vmem:[%s3241 + $0x38] sm:$0xff]
    %v3250 = vld [vmem:[%s3241 + $0x40] sm:$0xff]
    %v3251 = vld [vmem:[%s3241 + $0x48] sm:$0xff]
    %v3252 = vld [vmem:[%s3241 + $0x50] sm:$0xff]
    %v3253 = vld [vmem:[%s3241 + $0x58] sm:$0xff]
    %v3254 = vld [vmem:[%s3241 + $0x60] sm:$0xff]
    %v3255 = vld [vmem:[%s3241 + $0x68] sm:$0xff]
    %v3256 = vld [vmem:[%s3241 + $0x70] sm:$0xff]
    %v3257 = vld [vmem:[%s3241 + $0x78] sm:$0xff]
    %s3258 = scalar_lea.vmem [#allocation17], 11
    %v3259 = vld [vmem:[%s3258] sm:$0x1]
    %v3261 = vlaneseq
    %v3262 = vshrl.u32 %v3261, 7
    %v3263 = vsub.s32 0, %v3262
    %v3264 = vrot.slane %v3259, %v3263
    %3266 = vmatprep.subr.mxu0 0.0
    %3267 = vmatpush1.msra.mxu0 %v3257
    %3268 = vmatprep.subr.mxu0 0.0
    %3269 = vmatpush1.msra.mxu0 %v3256
    %3270 = vmatprep.subr.mxu0 0.0
    %3271 = vmatpush1.msra.mxu0 %v3255
    %3272 = vmatprep.subr.mxu0 0.0
    %3273 = vmatpush1.msra.mxu0 %v3254
    %3274 = vmatprep.subr.mxu0 0.0
    %3275 = vmatpush1.msra.mxu0 %v3253
    %3276 = vmatprep.subr.mxu0 0.0
    %3277 = vmatpush1.msra.mxu0 %v3252
    %3278 = vmatprep.subr.mxu0 0.0
    %3279 = vmatpush1.msra.mxu0 %v3251
    %3280 = vmatprep.subr.mxu0 0.0
    %3281 = vmatpush1.msra.mxu0 %v3250
    %3282 = vmatprep.subr.mxu0 0.0
    %3283 = vmatpush1.msra.mxu0 %v3249
    %3284 = vmatprep.subr.mxu0 0.0
    %3285 = vmatpush1.msra.mxu0 %v3248
    %3286 = vmatprep.subr.mxu0 0.0
    %3287 = vmatpush1.msra.mxu0 %v3247
    %3288 = vmatprep.subr.mxu0 0.0
    %3289 = vmatpush1.msra.mxu0 %v3246
    %3290 = vmatprep.subr.mxu0 0.0
    %3291 = vmatpush1.msra.mxu0 %v3245
    %3292 = vmatprep.subr.mxu0 0.0
    %3293 = vmatpush1.msra.mxu0 %v3244
    %3294 = vmatprep.subr.mxu0 0.0
    %3295 = vmatpush1.msra.mxu0 %v3243
    %3296 = vmatprep.subr.mxu0 0.0
    %3297 = vmatpush1.msra.mxu0 %v3242
    %3298 = vmatprep.subr.mxu0 0.0
    %3299 = vmatpush2.msra.mxu0 0.0
    %3300 = vmatprep.subr.mxu0 0.0
    %3301 = vmatpush2.msra.mxu0 0.0
    %3302 = vmatprep.subr.mxu0 0.0
    %3303 = vmatpush2.msra.mxu0 0.0
    %3304 = vmatprep.subr.mxu0 0.0
    %3305 = vmatpush2.msra.mxu0 0.0
    %3306 = vmatprep.subr.mxu0 0.0
    %3307 = vmatpush2.msra.mxu0 0.0
    %3308 = vmatprep.subr.mxu0 0.0
    %3309 = vmatpush2.msra.mxu0 0.0
    %3310 = vmatprep.subr.mxu0 0.0
    %3311 = vmatpush2.msra.mxu0 0.0
    %3312 = vmatprep.subr.mxu0 0.0
    %3313 = vmatpush2.msra.mxu0 0.0
    %3314 = vmatprep.subr.mxu0 0.0
    %3315 = vmatpush2.msra.mxu0 0.0
    %3316 = vmatprep.subr.mxu0 0.0
    %3317 = vmatpush2.msra.mxu0 0.0
    %3318 = vmatprep.subr.mxu0 0.0
    %3319 = vmatpush2.msra.mxu0 0.0
    %3320 = vmatprep.subr.mxu0 0.0
    %3321 = vmatpush2.msra.mxu0 0.0
    %3322 = vmatprep.subr.mxu0 0.0
    %3323 = vmatpush2.msra.mxu0 0.0
    %3324 = vmatprep.subr.mxu0 0.0
    %3325 = vmatpush2.msra.mxu0 0.0
    %3326 = vmatprep.subr.mxu0 0.0
    %3327 = vmatpush2.msra.mxu0 0.0
    %3328 = vmatprep.subr.mxu0 0.0
    %3329 = vmatpush2.msra.mxu0 0.0
    %3330 = vmatprep.mubr.f32.mxu0 0.0
    %3331 = vmatmul.mubr.f32.gmra.mxu0 %v3233
    %v3332 = vpop.f32.mrf.mxu0
    %v3333 = vadd.f32 %v3264, %v3332
    %v3334 = vpop.f32.mrf.mxu0
    %3335 = vmatprep.mubr.f32.mxu0 0.0
    %3336 = vmatmul.mubr.f32.gmra.mxu0 %v3238
    %v3337 = vpop.f32.mrf.mxu0
    %v3338 = vadd.f32 %v3264, %v3337
    %v3339 = vpop.f32.mrf.mxu0
    %3340 = vdwg.mxu0
    %s3341 = scalar_lea.vmem [#allocation19], 1408
    %v3342 = vld [vmem:[%s3341] sm:$0xff]
    %v3343 = vld [vmem:[%s3341 + $0x8] sm:$0xff]
    %v3344 = vld [vmem:[%s3341 + $0x10] sm:$0xff]
    %v3345 = vld [vmem:[%s3341 + $0x18] sm:$0xff]
    %v3346 = vld [vmem:[%s3341 + $0x20] sm:$0xff]
    %v3347 = vld [vmem:[%s3341 + $0x28] sm:$0xff]
    %v3348 = vld [vmem:[%s3341 + $0x30] sm:$0xff]
    %v3349 = vld [vmem:[%s3341 + $0x38] sm:$0xff]
    %v3350 = vld [vmem:[%s3341 + $0x40] sm:$0xff]
    %v3351 = vld [vmem:[%s3341 + $0x48] sm:$0xff]
    %v3352 = vld [vmem:[%s3341 + $0x50] sm:$0xff]
    %v3353 = vld [vmem:[%s3341 + $0x58] sm:$0xff]
    %v3354 = vld [vmem:[%s3341 + $0x60] sm:$0xff]
    %v3355 = vld [vmem:[%s3341 + $0x68] sm:$0xff]
    %v3356 = vld [vmem:[%s3341 + $0x70] sm:$0xff]
    %v3357 = vld [vmem:[%s3341 + $0x78] sm:$0xff]
    %3358 = vmatprep.subr.mxu0 0.0
    %3359 = vmatpush1.msra.mxu0 %v3357
    %3360 = vmatprep.subr.mxu0 0.0
    %3361 = vmatpush1.msra.mxu0 %v3356
    %3362 = vmatprep.subr.mxu0 0.0
    %3363 = vmatpush1.msra.mxu0 %v3355
    %3364 = vmatprep.subr.mxu0 0.0
    %3365 = vmatpush1.msra.mxu0 %v3354
    %3366 = vmatprep.subr.mxu0 0.0
    %3367 = vmatpush1.msra.mxu0 %v3353
    %3368 = vmatprep.subr.mxu0 0.0
    %3369 = vmatpush1.msra.mxu0 %v3352
    %3370 = vmatprep.subr.mxu0 0.0
    %3371 = vmatpush1.msra.mxu0 %v3351
    %3372 = vmatprep.subr.mxu0 0.0
    %3373 = vmatpush1.msra.mxu0 %v3350
    %3374 = vmatprep.subr.mxu0 0.0
    %3375 = vmatpush1.msra.mxu0 %v3349
    %3376 = vmatprep.subr.mxu0 0.0
    %3377 = vmatpush1.msra.mxu0 %v3348
    %3378 = vmatprep.subr.mxu0 0.0
    %3379 = vmatpush1.msra.mxu0 %v3347
    %3380 = vmatprep.subr.mxu0 0.0
    %3381 = vmatpush1.msra.mxu0 %v3346
    %3382 = vmatprep.subr.mxu0 0.0
    %3383 = vmatpush1.msra.mxu0 %v3345
    %3384 = vmatprep.subr.mxu0 0.0
    %3385 = vmatpush1.msra.mxu0 %v3344
    %3386 = vmatprep.subr.mxu0 0.0
    %3387 = vmatpush1.msra.mxu0 %v3343
    %3388 = vmatprep.subr.mxu0 0.0
    %3389 = vmatpush1.msra.mxu0 %v3342
    %3390 = vmatprep.subr.mxu0 0.0
    %3391 = vmatpush2.msra.mxu0 0.0
    %3392 = vmatprep.subr.mxu0 0.0
    %3393 = vmatpush2.msra.mxu0 0.0
    %3394 = vmatprep.subr.mxu0 0.0
    %3395 = vmatpush2.msra.mxu0 0.0
    %3396 = vmatprep.subr.mxu0 0.0
    %3397 = vmatpush2.msra.mxu0 0.0
    %3398 = vmatprep.subr.mxu0 0.0
    %3399 = vmatpush2.msra.mxu0 0.0
    %3400 = vmatprep.subr.mxu0 0.0
    %3401 = vmatpush2.msra.mxu0 0.0
    %3402 = vmatprep.subr.mxu0 0.0
    %3403 = vmatpush2.msra.mxu0 0.0
    %3404 = vmatprep.subr.mxu0 0.0
    %3405 = vmatpush2.msra.mxu0 0.0
    %3406 = vmatprep.subr.mxu0 0.0
    %3407 = vmatpush2.msra.mxu0 0.0
    %3408 = vmatprep.subr.mxu0 0.0
    %3409 = vmatpush2.msra.mxu0 0.0
    %3410 = vmatprep.subr.mxu0 0.0
    %3411 = vmatpush2.msra.mxu0 0.0
    %3412 = vmatprep.subr.mxu0 0.0
    %3413 = vmatpush2.msra.mxu0 0.0
    %3414 = vmatprep.subr.mxu0 0.0
    %3415 = vmatpush2.msra.mxu0 0.0
    %3416 = vmatprep.subr.mxu0 0.0
    %3417 = vmatpush2.msra.mxu0 0.0
    %3418 = vmatprep.subr.mxu0 0.0
    %3419 = vmatpush2.msra.mxu0 0.0
    %3420 = vmatprep.subr.mxu0 0.0
    %3421 = vmatpush2.msra.mxu0 0.0
    %3422 = vmatprep.mubr.f32.mxu0 0.0
    %3423 = vmatmul.mubr.f32.gmra.mxu0 %v1880
    %v3424 = vpop.f32.mrf.mxu0
    %v3425 = vadd.f32 0.0, %v3424
    %v3426 = vpop.f32.mrf.mxu0
    %3427 = vmatprep.mubr.f32.mxu0 0.0
    %3428 = vmatmul.mubr.f32.gmra.mxu0 %v1881
    %v3429 = vpop.f32.mrf.mxu0
    %v3430 = vadd.f32 0.0, %v3429
    %v3431 = vpop.f32.mrf.mxu0
    %3432 = vdwg.mxu0
    %v3433 = vadd.f32 %v3333, %v3425
    %v3434 = vadd.f32 %v3338, %v3430
    %v3435 = vadd.f32 %v2404, %v3433
    %v3436 = vadd.f32 %v2405, %v3434
    %v3437 = vmax.f32 %v2136, 0.0
    %v3438 = vmax.f32 %v3435, 0.0
    %v3439 = vmax.f32 %v3436, 0.0
    %v3440 = vmax.f32 %v2658, 0.0
    %v3441 = vmax.f32 %v3165, 0.0
    %3442 = vmatprep.subr.mxu0 0.0
    %3443 = vmatpush1.msra.mxu0 0.0
    %3444 = vmatprep.subr.mxu0 0.0
    %3445 = vmatpush1.msra.mxu0 0.0
    %3446 = vmatprep.subr.mxu0 0.0
    %3447 = vmatpush1.msra.mxu0 0.0
    %3448 = vmatprep.subr.mxu0 0.0
    %3449 = vmatpush1.msra.mxu0 0.0
    %3450 = vmatprep.subr.mxu0 0.0
    %3451 = vmatpush1.msra.mxu0 0.0
    %3452 = vmatprep.subr.mxu0 0.0
    %3453 = vmatpush1.msra.mxu0 0.0
    %3454 = vmatprep.subr.mxu0 0.0
    %3455 = vmatpush1.msra.mxu0 0.0
    %3456 = vmatprep.subr.mxu0 0.0
    %3457 = vmatpush1.msra.mxu0 0.0
    %3458 = vmatprep.subr.mxu0 0.0
    %3459 = vmatpush1.msra.mxu0 0.0
    %3460 = vmatprep.subr.mxu0 0.0
    %3461 = vmatpush1.msra.mxu0 0.0
    %3462 = vmatprep.subr.mxu0 0.0
    %3463 = vmatpush1.msra.mxu0 0.0
    %3464 = vmatprep.subr.mxu0 0.0
    %3465 = vmatpush1.msra.mxu0 0.0
    %3466 = vmatprep.subr.mxu0 0.0
    %3467 = vmatpush1.msra.mxu0 0.0
    %3468 = vmatprep.subr.mxu0 0.0
    %3469 = vmatpush1.msra.mxu0 0.0
    %3470 = vmatprep.subr.mxu0 0.0
    %3471 = vmatpush1.msra.mxu0 0.0
    %3472 = vmatprep.subr.mxu0 0.0
    %3473 = vmatpush1.msra.mxu0 %v3437
    %3474 = vmatprep.subr.mxu0 0.0
    %3475 = vmatpush2.msra.mxu0 0.0
    %3476 = vmatprep.subr.mxu0 0.0
    %3477 = vmatpush2.msra.mxu0 0.0
    %3478 = vmatprep.subr.mxu0 0.0
    %3479 = vmatpush2.msra.mxu0 0.0
    %3480 = vmatprep.subr.mxu0 0.0
    %3481 = vmatpush2.msra.mxu0 0.0
    %3482 = vmatprep.subr.mxu0 0.0
    %3483 = vmatpush2.msra.mxu0 0.0
    %3484 = vmatprep.subr.mxu0 0.0
    %3485 = vmatpush2.msra.mxu0 0.0
    %3486 = vmatprep.subr.mxu0 0.0
    %3487 = vmatpush2.msra.mxu0 0.0
    %3488 = vmatprep.subr.mxu0 0.0
    %3489 = vmatpush2.msra.mxu0 0.0
    %3490 = vmatprep.subr.mxu0 0.0
    %3491 = vmatpush2.msra.mxu0 0.0
    %3492 = vmatprep.subr.mxu0 0.0
    %3493 = vmatpush2.msra.mxu0 0.0
    %3494 = vmatprep.subr.mxu0 0.0
    %3495 = vmatpush2.msra.mxu0 0.0
    %3496 = vmatprep.subr.mxu0 0.0
    %3497 = vmatpush2.msra.mxu0 0.0
    %3498 = vmatprep.subr.mxu0 0.0
    %3499 = vmatpush2.msra.mxu0 0.0
    %3500 = vmatprep.subr.mxu0 0.0
    %3501 = vmatpush2.msra.mxu0 0.0
    %3502 = vmatprep.subr.mxu0 0.0
    %3503 = vmatpush2.msra.mxu0 0.0
    %3504 = vmatprep.subr.mxu0 0.0
    %3505 = vmatpush2.msra.mxu0 0.0
    %3506 = vmatprep.mubr.f32.mxu0 0.0
    %3507 = vmatmul.mubr.f32.gmra.mxu0 %v559
    %v3508 = vpop.f32.mrf.mxu0
    %v3509 = vadd.f32 0.0, %v3508
    %v3510 = vpop.f32.mrf.mxu0
    %3511 = vmatprep.mubr.f32.mxu0 0.0
    %3512 = vmatmul.mubr.f32.gmra.mxu0 %v562
    %v3513 = vpop.f32.mrf.mxu0
    %v3514 = vadd.f32 0.0, %v3513
    %v3515 = vpop.f32.mrf.mxu0
    %3516 = vdwg.mxu0
    %s3517 = scalar_lea.vmem [#allocation16], 1664
    %v3518 = vld [vmem:[%s3517] sm:$0xff]
    %v3519 = vld [vmem:[%s3517 + $0x8] sm:$0xff]
    %v3520 = vld [vmem:[%s3517 + $0x10] sm:$0xff]
    %v3521 = vld [vmem:[%s3517 + $0x18] sm:$0xff]
    %v3522 = vld [vmem:[%s3517 + $0x20] sm:$0xff]
    %v3523 = vld [vmem:[%s3517 + $0x28] sm:$0xff]
    %v3524 = vld [vmem:[%s3517 + $0x30] sm:$0xff]
    %v3525 = vld [vmem:[%s3517 + $0x38] sm:$0xff]
    %v3526 = vld [vmem:[%s3517 + $0x40] sm:$0xff]
    %v3527 = vld [vmem:[%s3517 + $0x48] sm:$0xff]
    %v3528 = vld [vmem:[%s3517 + $0x50] sm:$0xff]
    %v3529 = vld [vmem:[%s3517 + $0x58] sm:$0xff]
    %v3530 = vld [vmem:[%s3517 + $0x60] sm:$0xff]
    %v3531 = vld [vmem:[%s3517 + $0x68] sm:$0xff]
    %v3532 = vld [vmem:[%s3517 + $0x70] sm:$0xff]
    %v3533 = vld [vmem:[%s3517 + $0x78] sm:$0xff]
    %s3534 = scalar_lea.vmem [#allocation17], 13
    %v3535 = vld [vmem:[%s3534] sm:$0x1]
    %v3537 = vlaneseq
    %v3538 = vshrl.u32 %v3537, 7
    %v3539 = vsub.s32 0, %v3538
    %v3540 = vrot.slane %v3535, %v3539
    %3542 = vmatprep.subr.mxu0 0.0
    %3543 = vmatpush1.msra.mxu0 %v3533
    %3544 = vmatprep.subr.mxu0 0.0
    %3545 = vmatpush1.msra.mxu0 %v3532
    %3546 = vmatprep.subr.mxu0 0.0
    %3547 = vmatpush1.msra.mxu0 %v3531
    %3548 = vmatprep.subr.mxu0 0.0
    %3549 = vmatpush1.msra.mxu0 %v3530
    %3550 = vmatprep.subr.mxu0 0.0
    %3551 = vmatpush1.msra.mxu0 %v3529
    %3552 = vmatprep.subr.mxu0 0.0
    %3553 = vmatpush1.msra.mxu0 %v3528
    %3554 = vmatprep.subr.mxu0 0.0
    %3555 = vmatpush1.msra.mxu0 %v3527
    %3556 = vmatprep.subr.mxu0 0.0
    %3557 = vmatpush1.msra.mxu0 %v3526
    %3558 = vmatprep.subr.mxu0 0.0
    %3559 = vmatpush1.msra.mxu0 %v3525
    %3560 = vmatprep.subr.mxu0 0.0
    %3561 = vmatpush1.msra.mxu0 %v3524
    %3562 = vmatprep.subr.mxu0 0.0
    %3563 = vmatpush1.msra.mxu0 %v3523
    %3564 = vmatprep.subr.mxu0 0.0
    %3565 = vmatpush1.msra.mxu0 %v3522
    %3566 = vmatprep.subr.mxu0 0.0
    %3567 = vmatpush1.msra.mxu0 %v3521
    %3568 = vmatprep.subr.mxu0 0.0
    %3569 = vmatpush1.msra.mxu0 %v3520
    %3570 = vmatprep.subr.mxu0 0.0
    %3571 = vmatpush1.msra.mxu0 %v3519
    %3572 = vmatprep.subr.mxu0 0.0
    %3573 = vmatpush1.msra.mxu0 %v3518
    %3574 = vmatprep.subr.mxu0 0.0
    %3575 = vmatpush2.msra.mxu0 0.0
    %3576 = vmatprep.subr.mxu0 0.0
    %3577 = vmatpush2.msra.mxu0 0.0
    %3578 = vmatprep.subr.mxu0 0.0
    %3579 = vmatpush2.msra.mxu0 0.0
    %3580 = vmatprep.subr.mxu0 0.0
    %3581 = vmatpush2.msra.mxu0 0.0
    %3582 = vmatprep.subr.mxu0 0.0
    %3583 = vmatpush2.msra.mxu0 0.0
    %3584 = vmatprep.subr.mxu0 0.0
    %3585 = vmatpush2.msra.mxu0 0.0
    %3586 = vmatprep.subr.mxu0 0.0
    %3587 = vmatpush2.msra.mxu0 0.0
    %3588 = vmatprep.subr.mxu0 0.0
    %3589 = vmatpush2.msra.mxu0 0.0
    %3590 = vmatprep.subr.mxu0 0.0
    %3591 = vmatpush2.msra.mxu0 0.0
    %3592 = vmatprep.subr.mxu0 0.0
    %3593 = vmatpush2.msra.mxu0 0.0
    %3594 = vmatprep.subr.mxu0 0.0
    %3595 = vmatpush2.msra.mxu0 0.0
    %3596 = vmatprep.subr.mxu0 0.0
    %3597 = vmatpush2.msra.mxu0 0.0
    %3598 = vmatprep.subr.mxu0 0.0
    %3599 = vmatpush2.msra.mxu0 0.0
    %3600 = vmatprep.subr.mxu0 0.0
    %3601 = vmatpush2.msra.mxu0 0.0
    %3602 = vmatprep.subr.mxu0 0.0
    %3603 = vmatpush2.msra.mxu0 0.0
    %3604 = vmatprep.subr.mxu0 0.0
    %3605 = vmatpush2.msra.mxu0 0.0
    %3606 = vmatprep.mubr.f32.mxu0 0.0
    %3607 = vmatmul.mubr.f32.gmra.mxu0 %v3509
    %v3608 = vpop.f32.mrf.mxu0
    %v3609 = vadd.f32 %v3540, %v3608
    %v3610 = vpop.f32.mrf.mxu0
    %3611 = vmatprep.mubr.f32.mxu0 0.0
    %3612 = vmatmul.mubr.f32.gmra.mxu0 %v3514
    %v3613 = vpop.f32.mrf.mxu0
    %v3614 = vadd.f32 %v3540, %v3613
    %v3615 = vpop.f32.mrf.mxu0
    %3616 = vdwg.mxu0
    %s3617 = scalar_lea.vmem [#allocation19], 1664
    %v3618 = vld [vmem:[%s3617] sm:$0xff]
    %v3619 = vld [vmem:[%s3617 + $0x8] sm:$0xff]
    %v3620 = vld [vmem:[%s3617 + $0x10] sm:$0xff]
    %v3621 = vld [vmem:[%s3617 + $0x18] sm:$0xff]
    %v3622 = vld [vmem:[%s3617 + $0x20] sm:$0xff]
    %v3623 = vld [vmem:[%s3617 + $0x28] sm:$0xff]
    %v3624 = vld [vmem:[%s3617 + $0x30] sm:$0xff]
    %v3625 = vld [vmem:[%s3617 + $0x38] sm:$0xff]
    %v3626 = vld [vmem:[%s3617 + $0x40] sm:$0xff]
    %v3627 = vld [vmem:[%s3617 + $0x48] sm:$0xff]
    %v3628 = vld [vmem:[%s3617 + $0x50] sm:$0xff]
    %v3629 = vld [vmem:[%s3617 + $0x58] sm:$0xff]
    %v3630 = vld [vmem:[%s3617 + $0x60] sm:$0xff]
    %v3631 = vld [vmem:[%s3617 + $0x68] sm:$0xff]
    %v3632 = vld [vmem:[%s3617 + $0x70] sm:$0xff]
    %v3633 = vld [vmem:[%s3617 + $0x78] sm:$0xff]
    %3634 = vmatprep.subr.mxu0 0.0
    %3635 = vmatpush1.msra.mxu0 %v3633
    %3636 = vmatprep.subr.mxu0 0.0
    %3637 = vmatpush1.msra.mxu0 %v3632
    %3638 = vmatprep.subr.mxu0 0.0
    %3639 = vmatpush1.msra.mxu0 %v3631
    %3640 = vmatprep.subr.mxu0 0.0
    %3641 = vmatpush1.msra.mxu0 %v3630
    %3642 = vmatprep.subr.mxu0 0.0
    %3643 = vmatpush1.msra.mxu0 %v3629
    %3644 = vmatprep.subr.mxu0 0.0
    %3645 = vmatpush1.msra.mxu0 %v3628
    %3646 = vmatprep.subr.mxu0 0.0
    %3647 = vmatpush1.msra.mxu0 %v3627
    %3648 = vmatprep.subr.mxu0 0.0
    %3649 = vmatpush1.msra.mxu0 %v3626
    %3650 = vmatprep.subr.mxu0 0.0
    %3651 = vmatpush1.msra.mxu0 %v3625
    %3652 = vmatprep.subr.mxu0 0.0
    %3653 = vmatpush1.msra.mxu0 %v3624
    %3654 = vmatprep.subr.mxu0 0.0
    %3655 = vmatpush1.msra.mxu0 %v3623
    %3656 = vmatprep.subr.mxu0 0.0
    %3657 = vmatpush1.msra.mxu0 %v3622
    %3658 = vmatprep.subr.mxu0 0.0
    %3659 = vmatpush1.msra.mxu0 %v3621
    %3660 = vmatprep.subr.mxu0 0.0
    %3661 = vmatpush1.msra.mxu0 %v3620
    %3662 = vmatprep.subr.mxu0 0.0
    %3663 = vmatpush1.msra.mxu0 %v3619
    %3664 = vmatprep.subr.mxu0 0.0
    %3665 = vmatpush1.msra.mxu0 %v3618
    %3666 = vmatprep.subr.mxu0 0.0
    %3667 = vmatpush2.msra.mxu0 0.0
    %3668 = vmatprep.subr.mxu0 0.0
    %3669 = vmatpush2.msra.mxu0 0.0
    %3670 = vmatprep.subr.mxu0 0.0
    %3671 = vmatpush2.msra.mxu0 0.0
    %3672 = vmatprep.subr.mxu0 0.0
    %3673 = vmatpush2.msra.mxu0 0.0
    %3674 = vmatprep.subr.mxu0 0.0
    %3675 = vmatpush2.msra.mxu0 0.0
    %3676 = vmatprep.subr.mxu0 0.0
    %3677 = vmatpush2.msra.mxu0 0.0
    %3678 = vmatprep.subr.mxu0 0.0
    %3679 = vmatpush2.msra.mxu0 0.0
    %3680 = vmatprep.subr.mxu0 0.0
    %3681 = vmatpush2.msra.mxu0 0.0
    %3682 = vmatprep.subr.mxu0 0.0
    %3683 = vmatpush2.msra.mxu0 0.0
    %3684 = vmatprep.subr.mxu0 0.0
    %3685 = vmatpush2.msra.mxu0 0.0
    %3686 = vmatprep.subr.mxu0 0.0
    %3687 = vmatpush2.msra.mxu0 0.0
    %3688 = vmatprep.subr.mxu0 0.0
    %3689 = vmatpush2.msra.mxu0 0.0
    %3690 = vmatprep.subr.mxu0 0.0
    %3691 = vmatpush2.msra.mxu0 0.0
    %3692 = vmatprep.subr.mxu0 0.0
    %3693 = vmatpush2.msra.mxu0 0.0
    %3694 = vmatprep.subr.mxu0 0.0
    %3695 = vmatpush2.msra.mxu0 0.0
    %3696 = vmatprep.subr.mxu0 0.0
    %3697 = vmatpush2.msra.mxu0 0.0
    %3698 = vmatprep.mubr.f32.mxu0 0.0
    %3699 = vmatmul.mubr.f32.gmra.mxu0 %v3438
    %v3700 = vpop.f32.mrf.mxu0
    %v3701 = vadd.f32 0.0, %v3700
    %v3702 = vpop.f32.mrf.mxu0
    %3703 = vmatprep.mubr.f32.mxu0 0.0
    %3704 = vmatmul.mubr.f32.gmra.mxu0 %v3439
    %v3705 = vpop.f32.mrf.mxu0
    %v3706 = vadd.f32 0.0, %v3705
    %v3707 = vpop.f32.mrf.mxu0
    %3708 = vdwg.mxu0
    %v3709 = vadd.f32 %v3609, %v3701
    %v3710 = vadd.f32 %v3614, %v3706
    %3711 = vmatprep.subr.mxu0 0.0
    %3712 = vmatpush1.msra.mxu0 0.0
    %3713 = vmatprep.subr.mxu0 0.0
    %3714 = vmatpush1.msra.mxu0 0.0
    %3715 = vmatprep.subr.mxu0 0.0
    %3716 = vmatpush1.msra.mxu0 0.0
    %3717 = vmatprep.subr.mxu0 0.0
    %3718 = vmatpush1.msra.mxu0 0.0
    %3719 = vmatprep.subr.mxu0 0.0
    %3720 = vmatpush1.msra.mxu0 0.0
    %3721 = vmatprep.subr.mxu0 0.0
    %3722 = vmatpush1.msra.mxu0 0.0
    %3723 = vmatprep.subr.mxu0 0.0
    %3724 = vmatpush1.msra.mxu0 0.0
    %3725 = vmatprep.subr.mxu0 0.0
    %3726 = vmatpush1.msra.mxu0 0.0
    %3727 = vmatprep.subr.mxu0 0.0
    %3728 = vmatpush1.msra.mxu0 0.0
    %3729 = vmatprep.subr.mxu0 0.0
    %3730 = vmatpush1.msra.mxu0 0.0
    %3731 = vmatprep.subr.mxu0 0.0
    %3732 = vmatpush1.msra.mxu0 0.0
    %3733 = vmatprep.subr.mxu0 0.0
    %3734 = vmatpush1.msra.mxu0 0.0
    %3735 = vmatprep.subr.mxu0 0.0
    %3736 = vmatpush1.msra.mxu0 0.0
    %3737 = vmatprep.subr.mxu0 0.0
    %3738 = vmatpush1.msra.mxu0 0.0
    %3739 = vmatprep.subr.mxu0 0.0
    %3740 = vmatpush1.msra.mxu0 0.0
    %3741 = vmatprep.subr.mxu0 0.0
    %3742 = vmatpush1.msra.mxu0 %v3440
    %3743 = vmatprep.subr.mxu0 0.0
    %3744 = vmatpush2.msra.mxu0 0.0
    %3745 = vmatprep.subr.mxu0 0.0
    %3746 = vmatpush2.msra.mxu0 0.0
    %3747 = vmatprep.subr.mxu0 0.0
    %3748 = vmatpush2.msra.mxu0 0.0
    %3749 = vmatprep.subr.mxu0 0.0
    %3750 = vmatpush2.msra.mxu0 0.0
    %3751 = vmatprep.subr.mxu0 0.0
    %3752 = vmatpush2.msra.mxu0 0.0
    %3753 = vmatprep.subr.mxu0 0.0
    %3754 = vmatpush2.msra.mxu0 0.0
    %3755 = vmatprep.subr.mxu0 0.0
    %3756 = vmatpush2.msra.mxu0 0.0
    %3757 = vmatprep.subr.mxu0 0.0
    %3758 = vmatpush2.msra.mxu0 0.0
    %3759 = vmatprep.subr.mxu0 0.0
    %3760 = vmatpush2.msra.mxu0 0.0
    %3761 = vmatprep.subr.mxu0 0.0
    %3762 = vmatpush2.msra.mxu0 0.0
    %3763 = vmatprep.subr.mxu0 0.0
    %3764 = vmatpush2.msra.mxu0 0.0
    %3765 = vmatprep.subr.mxu0 0.0
    %3766 = vmatpush2.msra.mxu0 0.0
    %3767 = vmatprep.subr.mxu0 0.0
    %3768 = vmatpush2.msra.mxu0 0.0
    %3769 = vmatprep.subr.mxu0 0.0
    %3770 = vmatpush2.msra.mxu0 0.0
    %3771 = vmatprep.subr.mxu0 0.0
    %3772 = vmatpush2.msra.mxu0 0.0
    %3773 = vmatprep.subr.mxu0 0.0
    %3774 = vmatpush2.msra.mxu0 0.0
    %3775 = vmatprep.mubr.f32.mxu0 0.0
    %3776 = vmatmul.mubr.f32.gmra.mxu0 %v1090
    %v3777 = vpop.f32.mrf.mxu0
    %v3778 = vadd.f32 0.0, %v3777
    %v3779 = vpop.f32.mrf.mxu0
    %3780 = vdwg.mxu0
    %s3781 = scalar_lea.vmem [#allocation16], 1920
    %v3782 = vld [vmem:[%s3781] sm:$0xff]
    %v3783 = vld [vmem:[%s3781 + $0x8] sm:$0xff]
    %v3784 = vld [vmem:[%s3781 + $0x10] sm:$0xff]
    %v3785 = vld [vmem:[%s3781 + $0x18] sm:$0xff]
    %v3786 = vld [vmem:[%s3781 + $0x20] sm:$0xff]
    %v3787 = vld [vmem:[%s3781 + $0x28] sm:$0xff]
    %v3788 = vld [vmem:[%s3781 + $0x30] sm:$0xff]
    %v3789 = vld [vmem:[%s3781 + $0x38] sm:$0xff]
    %v3790 = vld [vmem:[%s3781 + $0x40] sm:$0xff]
    %v3791 = vld [vmem:[%s3781 + $0x48] sm:$0xff]
    %v3792 = vld [vmem:[%s3781 + $0x50] sm:$0xff]
    %v3793 = vld [vmem:[%s3781 + $0x58] sm:$0xff]
    %v3794 = vld [vmem:[%s3781 + $0x60] sm:$0xff]
    %v3795 = vld [vmem:[%s3781 + $0x68] sm:$0xff]
    %v3796 = vld [vmem:[%s3781 + $0x70] sm:$0xff]
    %v3797 = vld [vmem:[%s3781 + $0x78] sm:$0xff]
    %s3798 = scalar_lea.vmem [#allocation17], 15
    %v3799 = vld [vmem:[%s3798] sm:$0x1]
    %v3801 = vlaneseq
    %v3802 = vshrl.u32 %v3801, 7
    %v3803 = vsub.s32 0, %v3802
    %v3804 = vrot.slane %v3799, %v3803
    %3806 = vmatprep.subr.mxu0 0.0
    %3807 = vmatpush1.msra.mxu0 %v3797
    %3808 = vmatprep.subr.mxu0 0.0
    %3809 = vmatpush1.msra.mxu0 %v3796
    %3810 = vmatprep.subr.mxu0 0.0
    %3811 = vmatpush1.msra.mxu0 %v3795
    %3812 = vmatprep.subr.mxu0 0.0
    %3813 = vmatpush1.msra.mxu0 %v3794
    %3814 = vmatprep.subr.mxu0 0.0
    %3815 = vmatpush1.msra.mxu0 %v3793
    %3816 = vmatprep.subr.mxu0 0.0
    %3817 = vmatpush1.msra.mxu0 %v3792
    %3818 = vmatprep.subr.mxu0 0.0
    %3819 = vmatpush1.msra.mxu0 %v3791
    %3820 = vmatprep.subr.mxu0 0.0
    %3821 = vmatpush1.msra.mxu0 %v3790
    %3822 = vmatprep.subr.mxu0 0.0
    %3823 = vmatpush1.msra.mxu0 %v3789
    %3824 = vmatprep.subr.mxu0 0.0
    %3825 = vmatpush1.msra.mxu0 %v3788
    %3826 = vmatprep.subr.mxu0 0.0
    %3827 = vmatpush1.msra.mxu0 %v3787
    %3828 = vmatprep.subr.mxu0 0.0
    %3829 = vmatpush1.msra.mxu0 %v3786
    %3830 = vmatprep.subr.mxu0 0.0
    %3831 = vmatpush1.msra.mxu0 %v3785
    %3832 = vmatprep.subr.mxu0 0.0
    %3833 = vmatpush1.msra.mxu0 %v3784
    %3834 = vmatprep.subr.mxu0 0.0
    %3835 = vmatpush1.msra.mxu0 %v3783
    %3836 = vmatprep.subr.mxu0 0.0
    %3837 = vmatpush1.msra.mxu0 %v3782
    %3838 = vmatprep.subr.mxu0 0.0
    %3839 = vmatpush2.msra.mxu0 0.0
    %3840 = vmatprep.subr.mxu0 0.0
    %3841 = vmatpush2.msra.mxu0 0.0
    %3842 = vmatprep.subr.mxu0 0.0
    %3843 = vmatpush2.msra.mxu0 0.0
    %3844 = vmatprep.subr.mxu0 0.0
    %3845 = vmatpush2.msra.mxu0 0.0
    %3846 = vmatprep.subr.mxu0 0.0
    %3847 = vmatpush2.msra.mxu0 0.0
    %3848 = vmatprep.subr.mxu0 0.0
    %3849 = vmatpush2.msra.mxu0 0.0
    %3850 = vmatprep.subr.mxu0 0.0
    %3851 = vmatpush2.msra.mxu0 0.0
    %3852 = vmatprep.subr.mxu0 0.0
    %3853 = vmatpush2.msra.mxu0 0.0
    %3854 = vmatprep.subr.mxu0 0.0
    %3855 = vmatpush2.msra.mxu0 0.0
    %3856 = vmatprep.subr.mxu0 0.0
    %3857 = vmatpush2.msra.mxu0 0.0
    %3858 = vmatprep.subr.mxu0 0.0
    %3859 = vmatpush2.msra.mxu0 0.0
    %3860 = vmatprep.subr.mxu0 0.0
    %3861 = vmatpush2.msra.mxu0 0.0
    %3862 = vmatprep.subr.mxu0 0.0
    %3863 = vmatpush2.msra.mxu0 0.0
    %3864 = vmatprep.subr.mxu0 0.0
    %3865 = vmatpush2.msra.mxu0 0.0
    %3866 = vmatprep.subr.mxu0 0.0
    %3867 = vmatpush2.msra.mxu0 0.0
    %3868 = vmatprep.subr.mxu0 0.0
    %3869 = vmatpush2.msra.mxu0 0.0
    %3870 = vmatprep.mubr.f32.mxu0 0.0
    %3871 = vmatmul.mubr.f32.gmra.mxu0 %v3778
    %v3872 = vpop.f32.mrf.mxu0
    %v3873 = vadd.f32 %v3804, %v3872
    %v3874 = vpop.f32.mrf.mxu0
    %3875 = vdwg.mxu0
    %s3876 = scalar_lea.vmem [#allocation19], 1920
    %v3877 = vld [vmem:[%s3876] sm:$0xff]
    %v3878 = vld [vmem:[%s3876 + $0x8] sm:$0xff]
    %v3879 = vld [vmem:[%s3876 + $0x10] sm:$0xff]
    %v3880 = vld [vmem:[%s3876 + $0x18] sm:$0xff]
    %v3881 = vld [vmem:[%s3876 + $0x20] sm:$0xff]
    %v3882 = vld [vmem:[%s3876 + $0x28] sm:$0xff]
    %v3883 = vld [vmem:[%s3876 + $0x30] sm:$0xff]
    %v3884 = vld [vmem:[%s3876 + $0x38] sm:$0xff]
    %v3885 = vld [vmem:[%s3876 + $0x40] sm:$0xff]
    %v3886 = vld [vmem:[%s3876 + $0x48] sm:$0xff]
    %v3887 = vld [vmem:[%s3876 + $0x50] sm:$0xff]
    %v3888 = vld [vmem:[%s3876 + $0x58] sm:$0xff]
    %v3889 = vld [vmem:[%s3876 + $0x60] sm:$0xff]
    %v3890 = vld [vmem:[%s3876 + $0x68] sm:$0xff]
    %v3891 = vld [vmem:[%s3876 + $0x70] sm:$0xff]
    %v3892 = vld [vmem:[%s3876 + $0x78] sm:$0xff]
    %3893 = vmatprep.subr.mxu0 0.0
    %3894 = vmatpush1.msra.mxu0 %v3892
    %3895 = vmatprep.subr.mxu0 0.0
    %3896 = vmatpush1.msra.mxu0 %v3891
    %3897 = vmatprep.subr.mxu0 0.0
    %3898 = vmatpush1.msra.mxu0 %v3890
    %3899 = vmatprep.subr.mxu0 0.0
    %3900 = vmatpush1.msra.mxu0 %v3889
    %3901 = vmatprep.subr.mxu0 0.0
    %3902 = vmatpush1.msra.mxu0 %v3888
    %3903 = vmatprep.subr.mxu0 0.0
    %3904 = vmatpush1.msra.mxu0 %v3887
    %3905 = vmatprep.subr.mxu0 0.0
    %3906 = vmatpush1.msra.mxu0 %v3886
    %3907 = vmatprep.subr.mxu0 0.0
    %3908 = vmatpush1.msra.mxu0 %v3885
    %3909 = vmatprep.subr.mxu0 0.0
    %3910 = vmatpush1.msra.mxu0 %v3884
    %3911 = vmatprep.subr.mxu0 0.0
    %3912 = vmatpush1.msra.mxu0 %v3883
    %3913 = vmatprep.subr.mxu0 0.0
    %3914 = vmatpush1.msra.mxu0 %v3882
    %3915 = vmatprep.subr.mxu0 0.0
    %3916 = vmatpush1.msra.mxu0 %v3881
    %3917 = vmatprep.subr.mxu0 0.0
    %3918 = vmatpush1.msra.mxu0 %v3880
    %3919 = vmatprep.subr.mxu0 0.0
    %3920 = vmatpush1.msra.mxu0 %v3879
    %3921 = vmatprep.subr.mxu0 0.0
    %3922 = vmatpush1.msra.mxu0 %v3878
    %3923 = vmatprep.subr.mxu0 0.0
    %3924 = vmatpush1.msra.mxu0 %v3877
    %3925 = vmatprep.subr.mxu0 0.0
    %3926 = vmatpush2.msra.mxu0 0.0
    %3927 = vmatprep.subr.mxu0 0.0
    %3928 = vmatpush2.msra.mxu0 0.0
    %3929 = vmatprep.subr.mxu0 0.0
    %3930 = vmatpush2.msra.mxu0 0.0
    %3931 = vmatprep.subr.mxu0 0.0
    %3932 = vmatpush2.msra.mxu0 0.0
    %3933 = vmatprep.subr.mxu0 0.0
    %3934 = vmatpush2.msra.mxu0 0.0
    %3935 = vmatprep.subr.mxu0 0.0
    %3936 = vmatpush2.msra.mxu0 0.0
    %3937 = vmatprep.subr.mxu0 0.0
    %3938 = vmatpush2.msra.mxu0 0.0
    %3939 = vmatprep.subr.mxu0 0.0
    %3940 = vmatpush2.msra.mxu0 0.0
    %3941 = vmatprep.subr.mxu0 0.0
    %3942 = vmatpush2.msra.mxu0 0.0
    %3943 = vmatprep.subr.mxu0 0.0
    %3944 = vmatpush2.msra.mxu0 0.0
    %3945 = vmatprep.subr.mxu0 0.0
    %3946 = vmatpush2.msra.mxu0 0.0
    %3947 = vmatprep.subr.mxu0 0.0
    %3948 = vmatpush2.msra.mxu0 0.0
    %3949 = vmatprep.subr.mxu0 0.0
    %3950 = vmatpush2.msra.mxu0 0.0
    %3951 = vmatprep.subr.mxu0 0.0
    %3952 = vmatpush2.msra.mxu0 0.0
    %3953 = vmatprep.subr.mxu0 0.0
    %3954 = vmatpush2.msra.mxu0 0.0
    %3955 = vmatprep.subr.mxu0 0.0
    %3956 = vmatpush2.msra.mxu0 0.0
    %3957 = vmatprep.mubr.f32.mxu0 0.0
    %3958 = vmatmul.mubr.f32.gmra.mxu0 %v3441
    %v3959 = vpop.f32.mrf.mxu0
    %v3960 = vadd.f32 0.0, %v3959
    %v3961 = vpop.f32.mrf.mxu0
    %3962 = vdwg.mxu0
    %v3963 = vadd.f32 %v3873, %v3960
    %3964 = vmatprep.subr.mxu0 0.0
    %3965 = vmatpush1.msra.mxu0 0.0
    %3966 = vmatprep.subr.mxu0 0.0
    %3967 = vmatpush1.msra.mxu0 0.0
    %3968 = vmatprep.subr.mxu0 0.0
    %3969 = vmatpush1.msra.mxu0 0.0
    %3970 = vmatprep.subr.mxu0 0.0
    %3971 = vmatpush1.msra.mxu0 0.0
    %3972 = vmatprep.subr.mxu0 0.0
    %3973 = vmatpush1.msra.mxu0 0.0
    %3974 = vmatprep.subr.mxu0 0.0
    %3975 = vmatpush1.msra.mxu0 0.0
    %3976 = vmatprep.subr.mxu0 0.0
    %3977 = vmatpush1.msra.mxu0 0.0
    %3978 = vmatprep.subr.mxu0 0.0
    %3979 = vmatpush1.msra.mxu0 0.0
    %3980 = vmatprep.subr.mxu0 0.0
    %3981 = vmatpush1.msra.mxu0 0.0
    %3982 = vmatprep.subr.mxu0 0.0
    %3983 = vmatpush1.msra.mxu0 0.0
    %3984 = vmatprep.subr.mxu0 0.0
    %3985 = vmatpush1.msra.mxu0 0.0
    %3986 = vmatprep.subr.mxu0 0.0
    %3987 = vmatpush1.msra.mxu0 0.0
    %3988 = vmatprep.subr.mxu0 0.0
    %3989 = vmatpush1.msra.mxu0 0.0
    %3990 = vmatprep.subr.mxu0 0.0
    %3991 = vmatpush1.msra.mxu0 0.0
    %3992 = vmatprep.subr.mxu0 0.0
    %3993 = vmatpush1.msra.mxu0 %v3439
    %3994 = vmatprep.subr.mxu0 0.0
    %3995 = vmatpush1.msra.mxu0 %v3438
    %3996 = vmatprep.subr.mxu0 0.0
    %3997 = vmatpush2.msra.mxu0 0.0
    %3998 = vmatprep.subr.mxu0 0.0
    %3999 = vmatpush2.msra.mxu0 0.0
    %4000 = vmatprep.subr.mxu0 0.0
    %4001 = vmatpush2.msra.mxu0 0.0
    %4002 = vmatprep.subr.mxu0 0.0
    %4003 = vmatpush2.msra.mxu0 0.0
    %4004 = vmatprep.subr.mxu0 0.0
    %4005 = vmatpush2.msra.mxu0 0.0
    %4006 = vmatprep.subr.mxu0 0.0
    %4007 = vmatpush2.msra.mxu0 0.0
    %4008 = vmatprep.subr.mxu0 0.0
    %4009 = vmatpush2.msra.mxu0 0.0
    %4010 = vmatprep.subr.mxu0 0.0
    %4011 = vmatpush2.msra.mxu0 0.0
    %4012 = vmatprep.subr.mxu0 0.0
    %4013 = vmatpush2.msra.mxu0 0.0
    %4014 = vmatprep.subr.mxu0 0.0
    %4015 = vmatpush2.msra.mxu0 0.0
    %4016 = vmatprep.subr.mxu0 0.0
    %4017 = vmatpush2.msra.mxu0 0.0
    %4018 = vmatprep.subr.mxu0 0.0
    %4019 = vmatpush2.msra.mxu0 0.0
    %4020 = vmatprep.subr.mxu0 0.0
    %4021 = vmatpush2.msra.mxu0 0.0
    %4022 = vmatprep.subr.mxu0 0.0
    %4023 = vmatpush2.msra.mxu0 0.0
    %4024 = vmatprep.subr.mxu0 0.0
    %4025 = vmatpush2.msra.mxu0 0.0
    %4026 = vmatprep.subr.mxu0 0.0
    %4027 = vmatpush2.msra.mxu0 0.0
    %4028 = vmatprep.mubr.f32.mxu0 0.0
    %4029 = vmatmul.mubr.f32.gmra.mxu0 %v1346
    %v4030 = vpop.f32.mrf.mxu0
    %v4031 = vadd.f32 0.0, %v4030
    %v4032 = vpop.f32.mrf.mxu0
    %4033 = vdwg.mxu0
    %s4034 = scalar_lea.vmem [#allocation16], 2048
    %v4035 = vld [vmem:[%s4034] sm:$0xff]
    %v4036 = vld [vmem:[%s4034 + $0x8] sm:$0xff]
    %v4037 = vld [vmem:[%s4034 + $0x10] sm:$0xff]
    %v4038 = vld [vmem:[%s4034 + $0x18] sm:$0xff]
    %v4039 = vld [vmem:[%s4034 + $0x20] sm:$0xff]
    %v4040 = vld [vmem:[%s4034 + $0x28] sm:$0xff]
    %v4041 = vld [vmem:[%s4034 + $0x30] sm:$0xff]
    %v4042 = vld [vmem:[%s4034 + $0x38] sm:$0xff]
    %v4043 = vld [vmem:[%s4034 + $0x40] sm:$0xff]
    %v4044 = vld [vmem:[%s4034 + $0x48] sm:$0xff]
    %v4045 = vld [vmem:[%s4034 + $0x50] sm:$0xff]
    %v4046 = vld [vmem:[%s4034 + $0x58] sm:$0xff]
    %v4047 = vld [vmem:[%s4034 + $0x60] sm:$0xff]
    %v4048 = vld [vmem:[%s4034 + $0x68] sm:$0xff]
    %v4049 = vld [vmem:[%s4034 + $0x70] sm:$0xff]
    %v4050 = vld [vmem:[%s4034 + $0x78] sm:$0xff]
    %s4051 = scalar_lea.vmem [#allocation17], 16
    %v4052 = vld [vmem:[%s4051] sm:$0x1]
    %v4054 = vlaneseq
    %v4055 = vshrl.u32 %v4054, 7
    %v4056 = vsub.s32 0, %v4055
    %v4057 = vrot.slane %v4052, %v4056
    %4059 = vmatprep.subr.mxu0 0.0
    %4060 = vmatpush1.msra.mxu0 %v4050
    %4061 = vmatprep.subr.mxu0 0.0
    %4062 = vmatpush1.msra.mxu0 %v4049
    %4063 = vmatprep.subr.mxu0 0.0
    %4064 = vmatpush1.msra.mxu0 %v4048
    %4065 = vmatprep.subr.mxu0 0.0
    %4066 = vmatpush1.msra.mxu0 %v4047
    %4067 = vmatprep.subr.mxu0 0.0
    %4068 = vmatpush1.msra.mxu0 %v4046
    %4069 = vmatprep.subr.mxu0 0.0
    %4070 = vmatpush1.msra.mxu0 %v4045
    %4071 = vmatprep.subr.mxu0 0.0
    %4072 = vmatpush1.msra.mxu0 %v4044
    %4073 = vmatprep.subr.mxu0 0.0
    %4074 = vmatpush1.msra.mxu0 %v4043
    %4075 = vmatprep.subr.mxu0 0.0
    %4076 = vmatpush1.msra.mxu0 %v4042
    %4077 = vmatprep.subr.mxu0 0.0
    %4078 = vmatpush1.msra.mxu0 %v4041
    %4079 = vmatprep.subr.mxu0 0.0
    %4080 = vmatpush1.msra.mxu0 %v4040
    %4081 = vmatprep.subr.mxu0 0.0
    %4082 = vmatpush1.msra.mxu0 %v4039
    %4083 = vmatprep.subr.mxu0 0.0
    %4084 = vmatpush1.msra.mxu0 %v4038
    %4085 = vmatprep.subr.mxu0 0.0
    %4086 = vmatpush1.msra.mxu0 %v4037
    %4087 = vmatprep.subr.mxu0 0.0
    %4088 = vmatpush1.msra.mxu0 %v4036
    %4089 = vmatprep.subr.mxu0 0.0
    %4090 = vmatpush1.msra.mxu0 %v4035
    %4091 = vmatprep.subr.mxu0 0.0
    %4092 = vmatpush2.msra.mxu0 0.0
    %4093 = vmatprep.subr.mxu0 0.0
    %4094 = vmatpush2.msra.mxu0 0.0
    %4095 = vmatprep.subr.mxu0 0.0
    %4096 = vmatpush2.msra.mxu0 0.0
    %4097 = vmatprep.subr.mxu0 0.0
    %4098 = vmatpush2.msra.mxu0 0.0
    %4099 = vmatprep.subr.mxu0 0.0
    %4100 = vmatpush2.msra.mxu0 0.0
    %4101 = vmatprep.subr.mxu0 0.0
    %4102 = vmatpush2.msra.mxu0 0.0
    %4103 = vmatprep.subr.mxu0 0.0
    %4104 = vmatpush2.msra.mxu0 0.0
    %4105 = vmatprep.subr.mxu0 0.0
    %4106 = vmatpush2.msra.mxu0 0.0
    %4107 = vmatprep.subr.mxu0 0.0
    %4108 = vmatpush2.msra.mxu0 0.0
    %4109 = vmatprep.subr.mxu0 0.0
    %4110 = vmatpush2.msra.mxu0 0.0
    %4111 = vmatprep.subr.mxu0 0.0
    %4112 = vmatpush2.msra.mxu0 0.0
    %4113 = vmatprep.subr.mxu0 0.0
    %4114 = vmatpush2.msra.mxu0 0.0
    %4115 = vmatprep.subr.mxu0 0.0
    %4116 = vmatpush2.msra.mxu0 0.0
    %4117 = vmatprep.subr.mxu0 0.0
    %4118 = vmatpush2.msra.mxu0 0.0
    %4119 = vmatprep.subr.mxu0 0.0
    %4120 = vmatpush2.msra.mxu0 0.0
    %4121 = vmatprep.subr.mxu0 0.0
    %4122 = vmatpush2.msra.mxu0 0.0
    %4123 = vmatprep.mubr.f32.mxu0 0.0
    %4124 = vmatmul.mubr.f32.gmra.mxu0 %v4031
    %v4125 = vpop.f32.mrf.mxu0
    %v4126 = vadd.f32 %v4057, %v4125
    %v4127 = vpop.f32.mrf.mxu0
    %4128 = vdwg.mxu0
    %s4129 = scalar_lea.vmem [#allocation19], 2048
    %v4130 = vld [vmem:[%s4129] sm:$0xff]
    %v4131 = vld [vmem:[%s4129 + $0x8] sm:$0xff]
    %v4132 = vld [vmem:[%s4129 + $0x10] sm:$0xff]
    %v4133 = vld [vmem:[%s4129 + $0x18] sm:$0xff]
    %v4134 = vld [vmem:[%s4129 + $0x20] sm:$0xff]
    %v4135 = vld [vmem:[%s4129 + $0x28] sm:$0xff]
    %v4136 = vld [vmem:[%s4129 + $0x30] sm:$0xff]
    %v4137 = vld [vmem:[%s4129 + $0x38] sm:$0xff]
    %v4138 = vld [vmem:[%s4129 + $0x40] sm:$0xff]
    %v4139 = vld [vmem:[%s4129 + $0x48] sm:$0xff]
    %v4140 = vld [vmem:[%s4129 + $0x50] sm:$0xff]
    %v4141 = vld [vmem:[%s4129 + $0x58] sm:$0xff]
    %v4142 = vld [vmem:[%s4129 + $0x60] sm:$0xff]
    %v4143 = vld [vmem:[%s4129 + $0x68] sm:$0xff]
    %v4144 = vld [vmem:[%s4129 + $0x70] sm:$0xff]
    %v4145 = vld [vmem:[%s4129 + $0x78] sm:$0xff]
    %4146 = vmatprep.subr.mxu0 0.0
    %4147 = vmatpush1.msra.mxu0 %v4145
    %4148 = vmatprep.subr.mxu0 0.0
    %4149 = vmatpush1.msra.mxu0 %v4144
    %4150 = vmatprep.subr.mxu0 0.0
    %4151 = vmatpush1.msra.mxu0 %v4143
    %4152 = vmatprep.subr.mxu0 0.0
    %4153 = vmatpush1.msra.mxu0 %v4142
    %4154 = vmatprep.subr.mxu0 0.0
    %4155 = vmatpush1.msra.mxu0 %v4141
    %4156 = vmatprep.subr.mxu0 0.0
    %4157 = vmatpush1.msra.mxu0 %v4140
    %4158 = vmatprep.subr.mxu0 0.0
    %4159 = vmatpush1.msra.mxu0 %v4139
    %4160 = vmatprep.subr.mxu0 0.0
    %4161 = vmatpush1.msra.mxu0 %v4138
    %4162 = vmatprep.subr.mxu0 0.0
    %4163 = vmatpush1.msra.mxu0 %v4137
    %4164 = vmatprep.subr.mxu0 0.0
    %4165 = vmatpush1.msra.mxu0 %v4136
    %4166 = vmatprep.subr.mxu0 0.0
    %4167 = vmatpush1.msra.mxu0 %v4135
    %4168 = vmatprep.subr.mxu0 0.0
    %4169 = vmatpush1.msra.mxu0 %v4134
    %4170 = vmatprep.subr.mxu0 0.0
    %4171 = vmatpush1.msra.mxu0 %v4133
    %4172 = vmatprep.subr.mxu0 0.0
    %4173 = vmatpush1.msra.mxu0 %v4132
    %4174 = vmatprep.subr.mxu0 0.0
    %4175 = vmatpush1.msra.mxu0 %v4131
    %4176 = vmatprep.subr.mxu0 0.0
    %4177 = vmatpush1.msra.mxu0 %v4130
    %4178 = vmatprep.subr.mxu0 0.0
    %4179 = vmatpush2.msra.mxu0 0.0
    %4180 = vmatprep.subr.mxu0 0.0
    %4181 = vmatpush2.msra.mxu0 0.0
    %4182 = vmatprep.subr.mxu0 0.0
    %4183 = vmatpush2.msra.mxu0 0.0
    %4184 = vmatprep.subr.mxu0 0.0
    %4185 = vmatpush2.msra.mxu0 0.0
    %4186 = vmatprep.subr.mxu0 0.0
    %4187 = vmatpush2.msra.mxu0 0.0
    %4188 = vmatprep.subr.mxu0 0.0
    %4189 = vmatpush2.msra.mxu0 0.0
    %4190 = vmatprep.subr.mxu0 0.0
    %4191 = vmatpush2.msra.mxu0 0.0
    %4192 = vmatprep.subr.mxu0 0.0
    %4193 = vmatpush2.msra.mxu0 0.0
    %4194 = vmatprep.subr.mxu0 0.0
    %4195 = vmatpush2.msra.mxu0 0.0
    %4196 = vmatprep.subr.mxu0 0.0
    %4197 = vmatpush2.msra.mxu0 0.0
    %4198 = vmatprep.subr.mxu0 0.0
    %4199 = vmatpush2.msra.mxu0 0.0
    %4200 = vmatprep.subr.mxu0 0.0
    %4201 = vmatpush2.msra.mxu0 0.0
    %4202 = vmatprep.subr.mxu0 0.0
    %4203 = vmatpush2.msra.mxu0 0.0
    %4204 = vmatprep.subr.mxu0 0.0
    %4205 = vmatpush2.msra.mxu0 0.0
    %4206 = vmatprep.subr.mxu0 0.0
    %4207 = vmatpush2.msra.mxu0 0.0
    %4208 = vmatprep.subr.mxu0 0.0
    %4209 = vmatpush2.msra.mxu0 0.0
    %4210 = vmatprep.mubr.f32.mxu0 0.0
    %4211 = vmatmul.mubr.f32.gmra.mxu0 %v3441
    %v4212 = vpop.f32.mrf.mxu0
    %v4213 = vadd.f32 0.0, %v4212
    %v4214 = vpop.f32.mrf.mxu0
    %4215 = vdwg.mxu0
    %v4216 = vadd.f32 %v4126, %v4213
    %v4217 = vadd.f32 %v3963, %v4216
    %4218 = vmatprep.subr.mxu0 0.0
    %4219 = vmatpush1.msra.mxu0 0.0
    %4220 = vmatprep.subr.mxu0 0.0
    %4221 = vmatpush1.msra.mxu0 0.0
    %4222 = vmatprep.subr.mxu0 0.0
    %4223 = vmatpush1.msra.mxu0 0.0
    %4224 = vmatprep.subr.mxu0 0.0
    %4225 = vmatpush1.msra.mxu0 0.0
    %4226 = vmatprep.subr.mxu0 0.0
    %4227 = vmatpush1.msra.mxu0 0.0
    %4228 = vmatprep.subr.mxu0 0.0
    %4229 = vmatpush1.msra.mxu0 0.0
    %4230 = vmatprep.subr.mxu0 0.0
    %4231 = vmatpush1.msra.mxu0 0.0
    %4232 = vmatprep.subr.mxu0 0.0
    %4233 = vmatpush1.msra.mxu0 0.0
    %4234 = vmatprep.subr.mxu0 0.0
    %4235 = vmatpush1.msra.mxu0 0.0
    %4236 = vmatprep.subr.mxu0 0.0
    %4237 = vmatpush1.msra.mxu0 0.0
    %4238 = vmatprep.subr.mxu0 0.0
    %4239 = vmatpush1.msra.mxu0 0.0
    %4240 = vmatprep.subr.mxu0 0.0
    %4241 = vmatpush1.msra.mxu0 0.0
    %4242 = vmatprep.subr.mxu0 0.0
    %4243 = vmatpush1.msra.mxu0 0.0
    %4244 = vmatprep.subr.mxu0 0.0
    %4245 = vmatpush1.msra.mxu0 0.0
    %4246 = vmatprep.subr.mxu0 0.0
    %4247 = vmatpush1.msra.mxu0 0.0
    %4248 = vmatprep.subr.mxu0 0.0
    %4249 = vmatpush1.msra.mxu0 %v3441
    %4250 = vmatprep.subr.mxu0 0.0
    %4251 = vmatpush2.msra.mxu0 0.0
    %4252 = vmatprep.subr.mxu0 0.0
    %4253 = vmatpush2.msra.mxu0 0.0
    %4254 = vmatprep.subr.mxu0 0.0
    %4255 = vmatpush2.msra.mxu0 0.0
    %4256 = vmatprep.subr.mxu0 0.0
    %4257 = vmatpush2.msra.mxu0 0.0
    %4258 = vmatprep.subr.mxu0 0.0
    %4259 = vmatpush2.msra.mxu0 0.0
    %4260 = vmatprep.subr.mxu0 0.0
    %4261 = vmatpush2.msra.mxu0 0.0
    %4262 = vmatprep.subr.mxu0 0.0
    %4263 = vmatpush2.msra.mxu0 0.0
    %4264 = vmatprep.subr.mxu0 0.0
    %4265 = vmatpush2.msra.mxu0 0.0
    %4266 = vmatprep.subr.mxu0 0.0
    %4267 = vmatpush2.msra.mxu0 0.0
    %4268 = vmatprep.subr.mxu0 0.0
    %4269 = vmatpush2.msra.mxu0 0.0
    %4270 = vmatprep.subr.mxu0 0.0
    %4271 = vmatpush2.msra.mxu0 0.0
    %4272 = vmatprep.subr.mxu0 0.0
    %4273 = vmatpush2.msra.mxu0 0.0
    %4274 = vmatprep.subr.mxu0 0.0
    %4275 = vmatpush2.msra.mxu0 0.0
    %4276 = vmatprep.subr.mxu0 0.0
    %4277 = vmatpush2.msra.mxu0 0.0
    %4278 = vmatprep.subr.mxu0 0.0
    %4279 = vmatpush2.msra.mxu0 0.0
    %4280 = vmatprep.subr.mxu0 0.0
    %4281 = vmatpush2.msra.mxu0 0.0
    %4282 = vmatprep.mubr.f32.mxu0 0.0
    %4283 = vmatmul.mubr.f32.gmra.mxu0 %v1603
    %v4284 = vpop.f32.mrf.mxu0
    %v4285 = vadd.f32 0.0, %v4284
    %v4286 = vpop.f32.mrf.mxu0
    %4287 = vmatprep.mubr.f32.mxu0 0.0
    %4288 = vmatmul.mubr.f32.gmra.mxu0 %v1606
    %v4289 = vpop.f32.mrf.mxu0
    %v4290 = vadd.f32 0.0, %v4289
    %v4291 = vpop.f32.mrf.mxu0
    %4292 = vdwg.mxu0
    %s4293 = scalar_lea.vmem [#allocation16], 2176
    %v4294 = vld [vmem:[%s4293] sm:$0xff]
    %v4295 = vld [vmem:[%s4293 + $0x8] sm:$0xff]
    %v4296 = vld [vmem:[%s4293 + $0x10] sm:$0xff]
    %v4297 = vld [vmem:[%s4293 + $0x18] sm:$0xff]
    %v4298 = vld [vmem:[%s4293 + $0x20] sm:$0xff]
    %v4299 = vld [vmem:[%s4293 + $0x28] sm:$0xff]
    %v4300 = vld [vmem:[%s4293 + $0x30] sm:$0xff]
    %v4301 = vld [vmem:[%s4293 + $0x38] sm:$0xff]
    %v4302 = vld [vmem:[%s4293 + $0x40] sm:$0xff]
    %v4303 = vld [vmem:[%s4293 + $0x48] sm:$0xff]
    %v4304 = vld [vmem:[%s4293 + $0x50] sm:$0xff]
    %v4305 = vld [vmem:[%s4293 + $0x58] sm:$0xff]
    %v4306 = vld [vmem:[%s4293 + $0x60] sm:$0xff]
    %v4307 = vld [vmem:[%s4293 + $0x68] sm:$0xff]
    %v4308 = vld [vmem:[%s4293 + $0x70] sm:$0xff]
    %v4309 = vld [vmem:[%s4293 + $0x78] sm:$0xff]
    %s4310 = scalar_lea.vmem [#allocation17], 17
    %v4311 = vld [vmem:[%s4310] sm:$0x1]
    %v4313 = vlaneseq
    %v4314 = vshrl.u32 %v4313, 7
    %v4315 = vsub.s32 0, %v4314
    %v4316 = vrot.slane %v4311, %v4315
    %4318 = vmatprep.subr.mxu0 0.0
    %4319 = vmatpush1.msra.mxu0 %v4309
    %4320 = vmatprep.subr.mxu0 0.0
    %4321 = vmatpush1.msra.mxu0 %v4308
    %4322 = vmatprep.subr.mxu0 0.0
    %4323 = vmatpush1.msra.mxu0 %v4307
    %4324 = vmatprep.subr.mxu0 0.0
    %4325 = vmatpush1.msra.mxu0 %v4306
    %4326 = vmatprep.subr.mxu0 0.0
    %4327 = vmatpush1.msra.mxu0 %v4305
    %4328 = vmatprep.subr.mxu0 0.0
    %4329 = vmatpush1.msra.mxu0 %v4304
    %4330 = vmatprep.subr.mxu0 0.0
    %4331 = vmatpush1.msra.mxu0 %v4303
    %4332 = vmatprep.subr.mxu0 0.0
    %4333 = vmatpush1.msra.mxu0 %v4302
    %4334 = vmatprep.subr.mxu0 0.0
    %4335 = vmatpush1.msra.mxu0 %v4301
    %4336 = vmatprep.subr.mxu0 0.0
    %4337 = vmatpush1.msra.mxu0 %v4300
    %4338 = vmatprep.subr.mxu0 0.0
    %4339 = vmatpush1.msra.mxu0 %v4299
    %4340 = vmatprep.subr.mxu0 0.0
    %4341 = vmatpush1.msra.mxu0 %v4298
    %4342 = vmatprep.subr.mxu0 0.0
    %4343 = vmatpush1.msra.mxu0 %v4297
    %4344 = vmatprep.subr.mxu0 0.0
    %4345 = vmatpush1.msra.mxu0 %v4296
    %4346 = vmatprep.subr.mxu0 0.0
    %4347 = vmatpush1.msra.mxu0 %v4295
    %4348 = vmatprep.subr.mxu0 0.0
    %4349 = vmatpush1.msra.mxu0 %v4294
    %4350 = vmatprep.subr.mxu0 0.0
    %4351 = vmatpush2.msra.mxu0 0.0
    %4352 = vmatprep.subr.mxu0 0.0
    %4353 = vmatpush2.msra.mxu0 0.0
    %4354 = vmatprep.subr.mxu0 0.0
    %4355 = vmatpush2.msra.mxu0 0.0
    %4356 = vmatprep.subr.mxu0 0.0
    %4357 = vmatpush2.msra.mxu0 0.0
    %4358 = vmatprep.subr.mxu0 0.0
    %4359 = vmatpush2.msra.mxu0 0.0
    %4360 = vmatprep.subr.mxu0 0.0
    %4361 = vmatpush2.msra.mxu0 0.0
    %4362 = vmatprep.subr.mxu0 0.0
    %4363 = vmatpush2.msra.mxu0 0.0
    %4364 = vmatprep.subr.mxu0 0.0
    %4365 = vmatpush2.msra.mxu0 0.0
    %4366 = vmatprep.subr.mxu0 0.0
    %4367 = vmatpush2.msra.mxu0 0.0
    %4368 = vmatprep.subr.mxu0 0.0
    %4369 = vmatpush2.msra.mxu0 0.0
    %4370 = vmatprep.subr.mxu0 0.0
    %4371 = vmatpush2.msra.mxu0 0.0
    %4372 = vmatprep.subr.mxu0 0.0
    %4373 = vmatpush2.msra.mxu0 0.0
    %4374 = vmatprep.subr.mxu0 0.0
    %4375 = vmatpush2.msra.mxu0 0.0
    %4376 = vmatprep.subr.mxu0 0.0
    %4377 = vmatpush2.msra.mxu0 0.0
    %4378 = vmatprep.subr.mxu0 0.0
    %4379 = vmatpush2.msra.mxu0 0.0
    %4380 = vmatprep.subr.mxu0 0.0
    %4381 = vmatpush2.msra.mxu0 0.0
    %4382 = vmatprep.mubr.f32.mxu0 0.0
    %4383 = vmatmul.mubr.f32.gmra.mxu0 %v4285
    %v4384 = vpop.f32.mrf.mxu0
    %v4385 = vadd.f32 %v4316, %v4384
    %v4386 = vpop.f32.mrf.mxu0
    %4387 = vmatprep.mubr.f32.mxu0 0.0
    %4388 = vmatmul.mubr.f32.gmra.mxu0 %v4290
    %v4389 = vpop.f32.mrf.mxu0
    %v4390 = vadd.f32 %v4316, %v4389
    %v4391 = vpop.f32.mrf.mxu0
    %4392 = vdwg.mxu0
    %s4393 = scalar_lea.vmem [#allocation19], 2176
    %v4394 = vld [vmem:[%s4393] sm:$0xff]
    %v4395 = vld [vmem:[%s4393 + $0x8] sm:$0xff]
    %v4396 = vld [vmem:[%s4393 + $0x10] sm:$0xff]
    %v4397 = vld [vmem:[%s4393 + $0x18] sm:$0xff]
    %v4398 = vld [vmem:[%s4393 + $0x20] sm:$0xff]
    %v4399 = vld [vmem:[%s4393 + $0x28] sm:$0xff]
    %v4400 = vld [vmem:[%s4393 + $0x30] sm:$0xff]
    %v4401 = vld [vmem:[%s4393 + $0x38] sm:$0xff]
    %v4402 = vld [vmem:[%s4393 + $0x40] sm:$0xff]
    %v4403 = vld [vmem:[%s4393 + $0x48] sm:$0xff]
    %v4404 = vld [vmem:[%s4393 + $0x50] sm:$0xff]
    %v4405 = vld [vmem:[%s4393 + $0x58] sm:$0xff]
    %v4406 = vld [vmem:[%s4393 + $0x60] sm:$0xff]
    %v4407 = vld [vmem:[%s4393 + $0x68] sm:$0xff]
    %v4408 = vld [vmem:[%s4393 + $0x70] sm:$0xff]
    %v4409 = vld [vmem:[%s4393 + $0x78] sm:$0xff]
    %4410 = vmatprep.subr.mxu0 0.0
    %4411 = vmatpush1.msra.mxu0 %v4409
    %4412 = vmatprep.subr.mxu0 0.0
    %4413 = vmatpush1.msra.mxu0 %v4408
    %4414 = vmatprep.subr.mxu0 0.0
    %4415 = vmatpush1.msra.mxu0 %v4407
    %4416 = vmatprep.subr.mxu0 0.0
    %4417 = vmatpush1.msra.mxu0 %v4406
    %4418 = vmatprep.subr.mxu0 0.0
    %4419 = vmatpush1.msra.mxu0 %v4405
    %4420 = vmatprep.subr.mxu0 0.0
    %4421 = vmatpush1.msra.mxu0 %v4404
    %4422 = vmatprep.subr.mxu0 0.0
    %4423 = vmatpush1.msra.mxu0 %v4403
    %4424 = vmatprep.subr.mxu0 0.0
    %4425 = vmatpush1.msra.mxu0 %v4402
    %4426 = vmatprep.subr.mxu0 0.0
    %4427 = vmatpush1.msra.mxu0 %v4401
    %4428 = vmatprep.subr.mxu0 0.0
    %4429 = vmatpush1.msra.mxu0 %v4400
    %4430 = vmatprep.subr.mxu0 0.0
    %4431 = vmatpush1.msra.mxu0 %v4399
    %4432 = vmatprep.subr.mxu0 0.0
    %4433 = vmatpush1.msra.mxu0 %v4398
    %4434 = vmatprep.subr.mxu0 0.0
    %4435 = vmatpush1.msra.mxu0 %v4397
    %4436 = vmatprep.subr.mxu0 0.0
    %4437 = vmatpush1.msra.mxu0 %v4396
    %4438 = vmatprep.subr.mxu0 0.0
    %4439 = vmatpush1.msra.mxu0 %v4395
    %4440 = vmatprep.subr.mxu0 0.0
    %4441 = vmatpush1.msra.mxu0 %v4394
    %4442 = vmatprep.subr.mxu0 0.0
    %4443 = vmatpush2.msra.mxu0 0.0
    %4444 = vmatprep.subr.mxu0 0.0
    %4445 = vmatpush2.msra.mxu0 0.0
    %4446 = vmatprep.subr.mxu0 0.0
    %4447 = vmatpush2.msra.mxu0 0.0
    %4448 = vmatprep.subr.mxu0 0.0
    %4449 = vmatpush2.msra.mxu0 0.0
    %4450 = vmatprep.subr.mxu0 0.0
    %4451 = vmatpush2.msra.mxu0 0.0
    %4452 = vmatprep.subr.mxu0 0.0
    %4453 = vmatpush2.msra.mxu0 0.0
    %4454 = vmatprep.subr.mxu0 0.0
    %4455 = vmatpush2.msra.mxu0 0.0
    %4456 = vmatprep.subr.mxu0 0.0
    %4457 = vmatpush2.msra.mxu0 0.0
    %4458 = vmatprep.subr.mxu0 0.0
    %4459 = vmatpush2.msra.mxu0 0.0
    %4460 = vmatprep.subr.mxu0 0.0
    %4461 = vmatpush2.msra.mxu0 0.0
    %4462 = vmatprep.subr.mxu0 0.0
    %4463 = vmatpush2.msra.mxu0 0.0
    %4464 = vmatprep.subr.mxu0 0.0
    %4465 = vmatpush2.msra.mxu0 0.0
    %4466 = vmatprep.subr.mxu0 0.0
    %4467 = vmatpush2.msra.mxu0 0.0
    %4468 = vmatprep.subr.mxu0 0.0
    %4469 = vmatpush2.msra.mxu0 0.0
    %4470 = vmatprep.subr.mxu0 0.0
    %4471 = vmatpush2.msra.mxu0 0.0
    %4472 = vmatprep.subr.mxu0 0.0
    %4473 = vmatpush2.msra.mxu0 0.0
    %4474 = vmatprep.mubr.f32.mxu0 0.0
    %4475 = vmatmul.mubr.f32.gmra.mxu0 %v3438
    %v4476 = vpop.f32.mrf.mxu0
    %v4477 = vadd.f32 0.0, %v4476
    %v4478 = vpop.f32.mrf.mxu0
    %4479 = vmatprep.mubr.f32.mxu0 0.0
    %4480 = vmatmul.mubr.f32.gmra.mxu0 %v3439
    %v4481 = vpop.f32.mrf.mxu0
    %v4482 = vadd.f32 0.0, %v4481
    %v4483 = vpop.f32.mrf.mxu0
    %4484 = vdwg.mxu0
    %v4485 = vadd.f32 %v4385, %v4477
    %v4486 = vadd.f32 %v4390, %v4482
    %v4487 = vadd.f32 %v3709, %v4485
    %v4488 = vadd.f32 %v3710, %v4486
    %v4489 = vld [vmem:[#allocation20] sm:$0xff]
    %v4491 = vsel %vm303, %v4489, 0
    %4493 = vmatprep.subr.mxu0 0.0
    %4494 = vmatpush1.msra.mxu0 0.0
    %4495 = vmatprep.subr.mxu0 0.0
    %4496 = vmatpush1.msra.mxu0 0.0
    %4497 = vmatprep.subr.mxu0 0.0
    %4498 = vmatpush1.msra.mxu0 0.0
    %4499 = vmatprep.subr.mxu0 0.0
    %4500 = vmatpush1.msra.mxu0 0.0
    %4501 = vmatprep.subr.mxu0 0.0
    %4502 = vmatpush1.msra.mxu0 0.0
    %4503 = vmatprep.subr.mxu0 0.0
    %4504 = vmatpush1.msra.mxu0 0.0
    %4505 = vmatprep.subr.mxu0 0.0
    %4506 = vmatpush1.msra.mxu0 0.0
    %4507 = vmatprep.subr.mxu0 0.0
    %4508 = vmatpush1.msra.mxu0 0.0
    %4509 = vmatprep.subr.mxu0 0.0
    %4510 = vmatpush1.msra.mxu0 0.0
    %4511 = vmatprep.subr.mxu0 0.0
    %4512 = vmatpush1.msra.mxu0 0.0
    %4513 = vmatprep.subr.mxu0 0.0
    %4514 = vmatpush1.msra.mxu0 0.0
    %4515 = vmatprep.subr.mxu0 0.0
    %4516 = vmatpush1.msra.mxu0 0.0
    %4517 = vmatprep.subr.mxu0 0.0
    %4518 = vmatpush1.msra.mxu0 0.0
    %4519 = vmatprep.subr.mxu0 0.0
    %4520 = vmatpush1.msra.mxu0 0.0
    %4521 = vmatprep.subr.mxu0 0.0
    %4522 = vmatpush1.msra.mxu0 %v4488
    %4523 = vmatprep.subr.mxu0 0.0
    %4524 = vmatpush1.msra.mxu0 %v4487
    %4525 = vmatprep.subr.mxu0 0.0
    %4526 = vmatpush2.msra.mxu0 0.0
    %4527 = vmatprep.subr.mxu0 0.0
    %4528 = vmatpush2.msra.mxu0 0.0
    %4529 = vmatprep.subr.mxu0 0.0
    %4530 = vmatpush2.msra.mxu0 0.0
    %4531 = vmatprep.subr.mxu0 0.0
    %4532 = vmatpush2.msra.mxu0 0.0
    %4533 = vmatprep.subr.mxu0 0.0
    %4534 = vmatpush2.msra.mxu0 0.0
    %4535 = vmatprep.subr.mxu0 0.0
    %4536 = vmatpush2.msra.mxu0 0.0
    %4537 = vmatprep.subr.mxu0 0.0
    %4538 = vmatpush2.msra.mxu0 0.0
    %4539 = vmatprep.subr.mxu0 0.0
    %4540 = vmatpush2.msra.mxu0 0.0
    %4541 = vmatprep.subr.mxu0 0.0
    %4542 = vmatpush2.msra.mxu0 0.0
    %4543 = vmatprep.subr.mxu0 0.0
    %4544 = vmatpush2.msra.mxu0 0.0
    %4545 = vmatprep.subr.mxu0 0.0
    %4546 = vmatpush2.msra.mxu0 0.0
    %4547 = vmatprep.subr.mxu0 0.0
    %4548 = vmatpush2.msra.mxu0 0.0
    %4549 = vmatprep.subr.mxu0 0.0
    %4550 = vmatpush2.msra.mxu0 0.0
    %4551 = vmatprep.subr.mxu0 0.0
    %4552 = vmatpush2.msra.mxu0 0.0
    %4553 = vmatprep.subr.mxu0 0.0
    %4554 = vmatpush2.msra.mxu0 0.0
    %4555 = vmatprep.subr.mxu0 0.0
    %4556 = vmatpush2.msra.mxu0 0.0
    %4557 = vmatprep.mubr.f32.mxu0 0.0
    %4558 = vmatmul.mubr.f32.gmra.mxu0 %v4491
    %v4559 = vpop.f32.mrf.mxu0
    %v4560 = vadd.f32 0.0, %v4559
    %v4561 = vpop.f32.mrf.mxu0
    %4562 = vdwg.mxu0
    %v4563 = vld [vmem:[#allocation22] sm:$0xff]
    %v4564 = vld [vmem:[#allocation22 + $0x8] sm:$0xff]
    %v4565 = vld [vmem:[#allocation22 + $0x10] sm:$0xff]
    %v4566 = vld [vmem:[#allocation22 + $0x18] sm:$0xff]
    %v4567 = vld [vmem:[#allocation22 + $0x20] sm:$0xff]
    %v4568 = vld [vmem:[#allocation22 + $0x28] sm:$0xff]
    %v4569 = vld [vmem:[#allocation22 + $0x30] sm:$0xff]
    %v4570 = vld [vmem:[#allocation22 + $0x38] sm:$0xff]
    %v4571 = vld [vmem:[#allocation22 + $0x40] sm:$0xff]
    %v4572 = vld [vmem:[#allocation22 + $0x48] sm:$0xff]
    %v4573 = vld [vmem:[#allocation22 + $0x50] sm:$0xff]
    %v4574 = vld [vmem:[#allocation22 + $0x58] sm:$0xff]
    %v4575 = vld [vmem:[#allocation22 + $0x60] sm:$0xff]
    %v4576 = vld [vmem:[#allocation22 + $0x68] sm:$0xff]
    %v4577 = vld [vmem:[#allocation22 + $0x70] sm:$0xff]
    %v4578 = vld [vmem:[#allocation22 + $0x78] sm:$0xff]
    %v4579 = vld [vmem:[#allocation23] sm:$0xff]
    %v4580 = vld [vmem:[#allocation23 + $0x8] sm:$0xff]
    %v4581 = vld [vmem:[#allocation23 + $0x10] sm:$0xff]
    %v4582 = vld [vmem:[#allocation23 + $0x18] sm:$0xff]
    %v4583 = vld [vmem:[#allocation23 + $0x20] sm:$0xff]
    %v4584 = vld [vmem:[#allocation23 + $0x28] sm:$0xff]
    %v4585 = vld [vmem:[#allocation23 + $0x30] sm:$0xff]
    %v4586 = vld [vmem:[#allocation23 + $0x38] sm:$0xff]
    %v4587 = vld [vmem:[#allocation23 + $0x40] sm:$0xff]
    %v4588 = vld [vmem:[#allocation23 + $0x48] sm:$0xff]
    %v4589 = vld [vmem:[#allocation23 + $0x50] sm:$0xff]
    %v4590 = vld [vmem:[#allocation23 + $0x58] sm:$0xff]
    %v4591 = vld [vmem:[#allocation23 + $0x60] sm:$0xff]
    %v4592 = vld [vmem:[#allocation23 + $0x68] sm:$0xff]
    %v4593 = vld [vmem:[#allocation23 + $0x70] sm:$0xff]
    %v4594 = vld [vmem:[#allocation23 + $0x78] sm:$0xff]
    %4595 = vmatprep.subr.mxu0 0.0
    %4596 = vmatpush1.msra.mxu0 %v4594
    %4597 = vmatprep.subr.mxu0 0.0
    %4598 = vmatpush1.msra.mxu0 %v4593
    %4599 = vmatprep.subr.mxu0 0.0
    %4600 = vmatpush1.msra.mxu0 %v4592
    %4601 = vmatprep.subr.mxu0 0.0
    %4602 = vmatpush1.msra.mxu0 %v4591
    %4603 = vmatprep.subr.mxu0 0.0
    %4604 = vmatpush1.msra.mxu0 %v4590
    %4605 = vmatprep.subr.mxu0 0.0
    %4606 = vmatpush1.msra.mxu0 %v4589
    %4607 = vmatprep.subr.mxu0 0.0
    %4608 = vmatpush1.msra.mxu0 %v4588
    %4609 = vmatprep.subr.mxu0 0.0
    %4610 = vmatpush1.msra.mxu0 %v4587
    %4611 = vmatprep.subr.mxu0 0.0
    %4612 = vmatpush1.msra.mxu0 %v4586
    %4613 = vmatprep.subr.mxu0 0.0
    %4614 = vmatpush1.msra.mxu0 %v4585
    %4615 = vmatprep.subr.mxu0 0.0
    %4616 = vmatpush1.msra.mxu0 %v4584
    %4617 = vmatprep.subr.mxu0 0.0
    %4618 = vmatpush1.msra.mxu0 %v4583
    %4619 = vmatprep.subr.mxu0 0.0
    %4620 = vmatpush1.msra.mxu0 %v4582
    %4621 = vmatprep.subr.mxu0 0.0
    %4622 = vmatpush1.msra.mxu0 %v4581
    %4623 = vmatprep.subr.mxu0 0.0
    %4624 = vmatpush1.msra.mxu0 %v4580
    %4625 = vmatprep.subr.mxu0 0.0
    %4626 = vmatpush1.msra.mxu0 %v4579
    %4627 = vmatprep.subr.mxu0 0.0
    %4628 = vmatpush2.msra.mxu0 0.0
    %4629 = vmatprep.subr.mxu0 0.0
    %4630 = vmatpush2.msra.mxu0 0.0
    %4631 = vmatprep.subr.mxu0 0.0
    %4632 = vmatpush2.msra.mxu0 0.0
    %4633 = vmatprep.subr.mxu0 0.0
    %4634 = vmatpush2.msra.mxu0 0.0
    %4635 = vmatprep.subr.mxu0 0.0
    %4636 = vmatpush2.msra.mxu0 0.0
    %4637 = vmatprep.subr.mxu0 0.0
    %4638 = vmatpush2.msra.mxu0 0.0
    %4639 = vmatprep.subr.mxu0 0.0
    %4640 = vmatpush2.msra.mxu0 0.0
    %4641 = vmatprep.subr.mxu0 0.0
    %4642 = vmatpush2.msra.mxu0 0.0
    %4643 = vmatprep.subr.mxu0 0.0
    %4644 = vmatpush2.msra.mxu0 0.0
    %4645 = vmatprep.subr.mxu0 0.0
    %4646 = vmatpush2.msra.mxu0 0.0
    %4647 = vmatprep.subr.mxu0 0.0
    %4648 = vmatpush2.msra.mxu0 0.0
    %4649 = vmatprep.subr.mxu0 0.0
    %4650 = vmatpush2.msra.mxu0 0.0
    %4651 = vmatprep.subr.mxu0 0.0
    %4652 = vmatpush2.msra.mxu0 0.0
    %4653 = vmatprep.subr.mxu0 0.0
    %4654 = vmatpush2.msra.mxu0 0.0
    %4655 = vmatprep.subr.mxu0 0.0
    %4656 = vmatpush2.msra.mxu0 0.0
    %4657 = vmatprep.subr.mxu0 0.0
    %4658 = vmatpush2.msra.mxu0 0.0
    %4659 = vmatprep.mubr.f32.mxu0 0.0
    %4660 = vmatmul.mubr.f32.gmra.mxu0 %v4560
    %v4661 = vpop.f32.mrf.mxu0
    %v4662 = vadd.f32 0.0, %v4661
    %v4663 = vpop.f32.mrf.mxu0
    %4664 = vdwg.mxu0
    %4665 = vmatprep.subr.mxu0 0.0
    %4666 = vmatpush1.msra.mxu0 %v4578
    %4667 = vmatprep.subr.mxu0 0.0
    %4668 = vmatpush1.msra.mxu0 %v4577
    %4669 = vmatprep.subr.mxu0 0.0
    %4670 = vmatpush1.msra.mxu0 %v4576
    %4671 = vmatprep.subr.mxu0 0.0
    %4672 = vmatpush1.msra.mxu0 %v4575
    %4673 = vmatprep.subr.mxu0 0.0
    %4674 = vmatpush1.msra.mxu0 %v4574
    %4675 = vmatprep.subr.mxu0 0.0
    %4676 = vmatpush1.msra.mxu0 %v4573
    %4677 = vmatprep.subr.mxu0 0.0
    %4678 = vmatpush1.msra.mxu0 %v4572
    %4679 = vmatprep.subr.mxu0 0.0
    %4680 = vmatpush1.msra.mxu0 %v4571
    %4681 = vmatprep.subr.mxu0 0.0
    %4682 = vmatpush1.msra.mxu0 %v4570
    %4683 = vmatprep.subr.mxu0 0.0
    %4684 = vmatpush1.msra.mxu0 %v4569
    %4685 = vmatprep.subr.mxu0 0.0
    %4686 = vmatpush1.msra.mxu0 %v4568
    %4687 = vmatprep.subr.mxu0 0.0
    %4688 = vmatpush1.msra.mxu0 %v4567
    %4689 = vmatprep.subr.mxu0 0.0
    %4690 = vmatpush1.msra.mxu0 %v4566
    %4691 = vmatprep.subr.mxu0 0.0
    %4692 = vmatpush1.msra.mxu0 %v4565
    %4693 = vmatprep.subr.mxu0 0.0
    %4694 = vmatpush1.msra.mxu0 %v4564
    %4695 = vmatprep.subr.mxu0 0.0
    %4696 = vmatpush1.msra.mxu0 %v4563
    %4697 = vmatprep.subr.mxu0 0.0
    %4698 = vmatpush2.msra.mxu0 0.0
    %4699 = vmatprep.subr.mxu0 0.0
    %4700 = vmatpush2.msra.mxu0 0.0
    %4701 = vmatprep.subr.mxu0 0.0
    %4702 = vmatpush2.msra.mxu0 0.0
    %4703 = vmatprep.subr.mxu0 0.0
    %4704 = vmatpush2.msra.mxu0 0.0
    %4705 = vmatprep.subr.mxu0 0.0
    %4706 = vmatpush2.msra.mxu0 0.0
    %4707 = vmatprep.subr.mxu0 0.0
    %4708 = vmatpush2.msra.mxu0 0.0
    %4709 = vmatprep.subr.mxu0 0.0
    %4710 = vmatpush2.msra.mxu0 0.0
    %4711 = vmatprep.subr.mxu0 0.0
    %4712 = vmatpush2.msra.mxu0 0.0
    %4713 = vmatprep.subr.mxu0 0.0
    %4714 = vmatpush2.msra.mxu0 0.0
    %4715 = vmatprep.subr.mxu0 0.0
    %4716 = vmatpush2.msra.mxu0 0.0
    %4717 = vmatprep.subr.mxu0 0.0
    %4718 = vmatpush2.msra.mxu0 0.0
    %4719 = vmatprep.subr.mxu0 0.0
    %4720 = vmatpush2.msra.mxu0 0.0
    %4721 = vmatprep.subr.mxu0 0.0
    %4722 = vmatpush2.msra.mxu0 0.0
    %4723 = vmatprep.subr.mxu0 0.0
    %4724 = vmatpush2.msra.mxu0 0.0
    %4725 = vmatprep.subr.mxu0 0.0
    %4726 = vmatpush2.msra.mxu0 0.0
    %4727 = vmatprep.subr.mxu0 0.0
    %4728 = vmatpush2.msra.mxu0 0.0
    %4729 = vmatprep.mubr.f32.mxu0 0.0
    %4730 = vmatmul.mubr.f32.gmra.mxu0 %v4487
    %v4731 = vpop.f32.mrf.mxu0
    %v4732 = vadd.f32 %v4662, %v4731
    %v4733 = vpop.f32.mrf.mxu0
    %4734 = vdwg.mxu0
    %v4735 = vld [vmem:[#allocation25] sm:$0xff]
    %v4736 = vld [vmem:[#allocation25 + $0x8] sm:$0xff]
    %v4737 = vld [vmem:[#allocation25 + $0x10] sm:$0xff]
    %v4738 = vld [vmem:[#allocation25 + $0x18] sm:$0xff]
    %v4739 = vld [vmem:[#allocation25 + $0x20] sm:$0xff]
    %v4740 = vld [vmem:[#allocation25 + $0x28] sm:$0xff]
    %v4741 = vld [vmem:[#allocation25 + $0x30] sm:$0xff]
    %v4742 = vld [vmem:[#allocation25 + $0x38] sm:$0xff]
    %v4743 = vld [vmem:[#allocation25 + $0x40] sm:$0xff]
    %v4744 = vld [vmem:[#allocation25 + $0x48] sm:$0xff]
    %v4745 = vld [vmem:[#allocation25 + $0x50] sm:$0xff]
    %v4746 = vld [vmem:[#allocation25 + $0x58] sm:$0xff]
    %v4747 = vld [vmem:[#allocation25 + $0x60] sm:$0xff]
    %v4748 = vld [vmem:[#allocation25 + $0x68] sm:$0xff]
    %v4749 = vld [vmem:[#allocation25 + $0x70] sm:$0xff]
    %v4750 = vld [vmem:[#allocation25 + $0x78] sm:$0xff]
    %4751 = vmatprep.subr.mxu0 0.0
    %4752 = vmatpush1.msra.mxu0 %v4750
    %4753 = vmatprep.subr.mxu0 0.0
    %4754 = vmatpush1.msra.mxu0 %v4749
    %4755 = vmatprep.subr.mxu0 0.0
    %4756 = vmatpush1.msra.mxu0 %v4748
    %4757 = vmatprep.subr.mxu0 0.0
    %4758 = vmatpush1.msra.mxu0 %v4747
    %4759 = vmatprep.subr.mxu0 0.0
    %4760 = vmatpush1.msra.mxu0 %v4746
    %4761 = vmatprep.subr.mxu0 0.0
    %4762 = vmatpush1.msra.mxu0 %v4745
    %4763 = vmatprep.subr.mxu0 0.0
    %4764 = vmatpush1.msra.mxu0 %v4744
    %4765 = vmatprep.subr.mxu0 0.0
    %4766 = vmatpush1.msra.mxu0 %v4743
    %4767 = vmatprep.subr.mxu0 0.0
    %4768 = vmatpush1.msra.mxu0 %v4742
    %4769 = vmatprep.subr.mxu0 0.0
    %4770 = vmatpush1.msra.mxu0 %v4741
    %4771 = vmatprep.subr.mxu0 0.0
    %4772 = vmatpush1.msra.mxu0 %v4740
    %4773 = vmatprep.subr.mxu0 0.0
    %4774 = vmatpush1.msra.mxu0 %v4739
    %4775 = vmatprep.subr.mxu0 0.0
    %4776 = vmatpush1.msra.mxu0 %v4738
    %4777 = vmatprep.subr.mxu0 0.0
    %4778 = vmatpush1.msra.mxu0 %v4737
    %4779 = vmatprep.subr.mxu0 0.0
    %4780 = vmatpush1.msra.mxu0 %v4736
    %4781 = vmatprep.subr.mxu0 0.0
    %4782 = vmatpush1.msra.mxu0 %v4735
    %4783 = vmatprep.subr.mxu0 0.0
    %4784 = vmatpush2.msra.mxu0 0.0
    %4785 = vmatprep.subr.mxu0 0.0
    %4786 = vmatpush2.msra.mxu0 0.0
    %4787 = vmatprep.subr.mxu0 0.0
    %4788 = vmatpush2.msra.mxu0 0.0
    %4789 = vmatprep.subr.mxu0 0.0
    %4790 = vmatpush2.msra.mxu0 0.0
    %4791 = vmatprep.subr.mxu0 0.0
    %4792 = vmatpush2.msra.mxu0 0.0
    %4793 = vmatprep.subr.mxu0 0.0
    %4794 = vmatpush2.msra.mxu0 0.0
    %4795 = vmatprep.subr.mxu0 0.0
    %4796 = vmatpush2.msra.mxu0 0.0
    %4797 = vmatprep.subr.mxu0 0.0
    %4798 = vmatpush2.msra.mxu0 0.0
    %4799 = vmatprep.subr.mxu0 0.0
    %4800 = vmatpush2.msra.mxu0 0.0
    %4801 = vmatprep.subr.mxu0 0.0
    %4802 = vmatpush2.msra.mxu0 0.0
    %4803 = vmatprep.subr.mxu0 0.0
    %4804 = vmatpush2.msra.mxu0 0.0
    %4805 = vmatprep.subr.mxu0 0.0
    %4806 = vmatpush2.msra.mxu0 0.0
    %4807 = vmatprep.subr.mxu0 0.0
    %4808 = vmatpush2.msra.mxu0 0.0
    %4809 = vmatprep.subr.mxu0 0.0
    %4810 = vmatpush2.msra.mxu0 0.0
    %4811 = vmatprep.subr.mxu0 0.0
    %4812 = vmatpush2.msra.mxu0 0.0
    %4813 = vmatprep.subr.mxu0 0.0
    %4814 = vmatpush2.msra.mxu0 0.0
    %4815 = vmatprep.mubr.f32.mxu0 0.0
    %4816 = vmatmul.mubr.f32.gmra.mxu0 %v4217
    %v4817 = vpop.f32.mrf.mxu0
    %v4818 = vadd.f32 0.0, %v4817
    %v4819 = vpop.f32.mrf.mxu0
    %4820 = vdwg.mxu0
    %v4821 = vadd.f32 %v4732, %v4818
    %v4822 = vld [vmem:[#allocation26] sm:$0x1]
    %v4824 = vlaneseq
    %v4825 = vshrl.u32 %v4824, 7
    %v4826 = vsub.s32 0, %v4825
    %v4827 = vrot.slane %v4822, %v4826
    %v4829 = vadd.f32 %v4821, %v4827
    %v4830 = vmax.f32 %v4829, 0.0
    %v4831 = vld [vmem:[#allocation28] sm:$0xff]
    %v4832 = vld [vmem:[#allocation28 + $0x8] sm:$0xff]
    %v4833 = vld [vmem:[#allocation28 + $0x10] sm:$0xff]
    %v4834 = vld [vmem:[#allocation28 + $0x18] sm:$0xff]
    %v4835 = vld [vmem:[#allocation28 + $0x20] sm:$0xff]
    %v4836 = vld [vmem:[#allocation28 + $0x28] sm:$0xff]
    %v4837 = vld [vmem:[#allocation28 + $0x30] sm:$0xff]
    %v4838 = vld [vmem:[#allocation28 + $0x38] sm:$0xff]
    %v4839 = vld [vmem:[#allocation28 + $0x40] sm:$0xff]
    %v4840 = vld [vmem:[#allocation28 + $0x48] sm:$0xff]
    %v4841 = vld [vmem:[#allocation28 + $0x50] sm:$0xff]
    %v4842 = vld [vmem:[#allocation28 + $0x58] sm:$0xff]
    %v4843 = vld [vmem:[#allocation28 + $0x60] sm:$0xff]
    %v4844 = vld [vmem:[#allocation28 + $0x68] sm:$0xff]
    %v4845 = vld [vmem:[#allocation28 + $0x70] sm:$0xff]
    %v4846 = vld [vmem:[#allocation28 + $0x78] sm:$0xff]
    %v4847 = vld [vmem:[#allocation29] sm:$0x1]
    %v4849 = vlaneseq
    %v4850 = vshrl.u32 %v4849, 7
    %v4851 = vsub.s32 0, %v4850
    %v4852 = vrot.slane %v4847, %v4851
    %4854 = vmatprep.subr.mxu0 0.0
    %4855 = vmatpush1.msra.mxu0 %v4846
    %4856 = vmatprep.subr.mxu0 0.0
    %4857 = vmatpush1.msra.mxu0 %v4845
    %4858 = vmatprep.subr.mxu0 0.0
    %4859 = vmatpush1.msra.mxu0 %v4844
    %4860 = vmatprep.subr.mxu0 0.0
    %4861 = vmatpush1.msra.mxu0 %v4843
    %4862 = vmatprep.subr.mxu0 0.0
    %4863 = vmatpush1.msra.mxu0 %v4842
    %4864 = vmatprep.subr.mxu0 0.0
    %4865 = vmatpush1.msra.mxu0 %v4841
    %4866 = vmatprep.subr.mxu0 0.0
    %4867 = vmatpush1.msra.mxu0 %v4840
    %4868 = vmatprep.subr.mxu0 0.0
    %4869 = vmatpush1.msra.mxu0 %v4839
    %4870 = vmatprep.subr.mxu0 0.0
    %4871 = vmatpush1.msra.mxu0 %v4838
    %4872 = vmatprep.subr.mxu0 0.0
    %4873 = vmatpush1.msra.mxu0 %v4837
    %4874 = vmatprep.subr.mxu0 0.0
    %4875 = vmatpush1.msra.mxu0 %v4836
    %4876 = vmatprep.subr.mxu0 0.0
    %4877 = vmatpush1.msra.mxu0 %v4835
    %4878 = vmatprep.subr.mxu0 0.0
    %4879 = vmatpush1.msra.mxu0 %v4834
    %4880 = vmatprep.subr.mxu0 0.0
    %4881 = vmatpush1.msra.mxu0 %v4833
    %4882 = vmatprep.subr.mxu0 0.0
    %4883 = vmatpush1.msra.mxu0 %v4832
    %4884 = vmatprep.subr.mxu0 0.0
    %4885 = vmatpush1.msra.mxu0 %v4831
    %4886 = vmatprep.subr.mxu0 0.0
    %4887 = vmatpush2.msra.mxu0 0.0
    %4888 = vmatprep.subr.mxu0 0.0
    %4889 = vmatpush2.msra.mxu0 0.0
    %4890 = vmatprep.subr.mxu0 0.0
    %4891 = vmatpush2.msra.mxu0 0.0
    %4892 = vmatprep.subr.mxu0 0.0
    %4893 = vmatpush2.msra.mxu0 0.0
    %4894 = vmatprep.subr.mxu0 0.0
    %4895 = vmatpush2.msra.mxu0 0.0
    %4896 = vmatprep.subr.mxu0 0.0
    %4897 = vmatpush2.msra.mxu0 0.0
    %4898 = vmatprep.subr.mxu0 0.0
    %4899 = vmatpush2.msra.mxu0 0.0
    %4900 = vmatprep.subr.mxu0 0.0
    %4901 = vmatpush2.msra.mxu0 0.0
    %4902 = vmatprep.subr.mxu0 0.0
    %4903 = vmatpush2.msra.mxu0 0.0
    %4904 = vmatprep.subr.mxu0 0.0
    %4905 = vmatpush2.msra.mxu0 0.0
    %4906 = vmatprep.subr.mxu0 0.0
    %4907 = vmatpush2.msra.mxu0 0.0
    %4908 = vmatprep.subr.mxu0 0.0
    %4909 = vmatpush2.msra.mxu0 0.0
    %4910 = vmatprep.subr.mxu0 0.0
    %4911 = vmatpush2.msra.mxu0 0.0
    %4912 = vmatprep.subr.mxu0 0.0
    %4913 = vmatpush2.msra.mxu0 0.0
    %4914 = vmatprep.subr.mxu0 0.0
    %4915 = vmatpush2.msra.mxu0 0.0
    %4916 = vmatprep.subr.mxu0 0.0
    %4917 = vmatpush2.msra.mxu0 0.0
    %4918 = vmatprep.mubr.f32.mxu0 0.0
    %4919 = vmatmul.mubr.f32.gmra.mxu0 %v4830
    %v4920 = vpop.f32.mrf.mxu0
    %v4921 = vadd.f32 %v4852, %v4920
    %v4922 = vpop.f32.mrf.mxu0
    %4923 = vdwg.mxu0
    %v4924 = vxor.u32 %v4921, 2147483648
    %v4925 = vmul.f32 %v4924, 1.442695
    %v4926 = vpow.pop %v4925
    %v4927 = vadd.f32 %v4926, 1.0
    %v4928 = vrcp.pop %v4927
    %v4929 = vmul.f32 1.0, %v4928
    %4930 = vst [vmem:[#allocation31] sm:$0xff] %v4929
    // Predicated region
    $region154: #{tpu_custom_call.1} parent=1 // pred_check
      _
    $region155: #{tpu_custom_call.1} parent=1 // pred_check_branch
      %4932 = sbr.rel (0) target = $region157
    $region156: #{tpu_custom_call.1} parent=1 // pred_region
      %s4934 = ssub.s32 128, 128
      %4935 = vsyncadd [#allocation4], %s4934
      %s4937 = sshll.u32 [#allocation31], 4
      %s4938 = int_to_ptr.vmem [resolvable:$true] %s4937
      %4940 = dma.vmem_to_hbm [thread:$0]  %s4938, 128, %s20, [#allocation4]
    $region157: #{tpu_custom_call.1} parent=1 // pred_fallthru
      _
    // Predicated region
    $region158: #{tpu_custom_call.1} parent=1 // pred_check
      _
    $region159: #{tpu_custom_call.1} parent=1 // pred_check_branch
      %4942 = sbr.rel (0) target = $region161
    $region160: #{tpu_custom_call.1} parent=1 // pred_region
      %4943 = dma.done [#allocation4], 128
    $region161: #{tpu_custom_call.1} parent=1 // pred_fallthru
      _
    %4944 = vsyncpa [#allocation3], 1
    %4945 = vsyncpa [#allocation6], 1
    %4946 = vsyncpa [#allocation9], 1
    %4947 = vsyncpa [#allocation12], 1
    %4948 = vsyncpa [#allocation15], 1
    %4949 = vsyncpa [#allocation18], 1
    %4950 = vsyncpa [#allocation21], 1
    %4951 = vsyncpa [#allocation24], 1
    %4952 = vsyncpa [#allocation27], 1
    %4953 = vsyncpa [#allocation30], 1
    %4954 = vsyncpa [#allocation4], 1

</llo_original>
